<compile_context>
chip_gen: v5e
topology: v5e:2x2
jax: 0.10.0
libtpu: 0.0.40
codegen_flags: <defaults>
</compile_context>

<pallas_src>
import functools

import numpy as np
import jax
import jax.numpy as jnp
from jax import lax
from jax.experimental import pallas as pl
from jax.experimental.pallas import tpu as pltpu

C_PAD = 128  # lane-dense width for in-kernel intermediates / padded weights


# ----------------------------- Pallas kernel --------------------------------
def bottleneck_kernel(x_ref, w1_ref, w2_ref, w3_ref,
                      b1_ref, b2_ref, b3_ref,
                      o_ref, stage_ref, *, B, H, W, PAD):
    f32 = jnp.float32
    bf16 = jnp.bfloat16
    HW = H * W
    R = B * HW
    Cp = w1_ref.shape[-1]

    x = x_ref[...]                                     # (R, Cin) bf16

    # conv1 (1x1, BN scale folded into weights) + bias + ReLU.
    y1 = jnp.dot(x, w1_ref[...], preferred_element_type=f32)
    y1 = jnp.maximum(y1 + b1_ref[...], 0.0)            # (R, Cp) f32
    y1_bf = y1.astype(bf16)

    # Stage y1 with a zero halo of PAD (>= W+1, 8-aligned) rows above/below so
    # every 3x3 tap is a static row slice; vertical out-of-tile neighbours land
    # in the zero halo.  Scratch kept in f32 so the +-1 row slices stay on the
    # proven unpacked-dtype load path.
    stage_ref[pl.ds(0, PAD), :] = jnp.zeros((PAD, Cp), f32)
    stage_ref[pl.ds(PAD + R, PAD), :] = jnp.zeros((PAD, Cp), f32)
    stage_ref[pl.ds(PAD, R), :] = y1

    # Boundary masks, computed once (not per tap).
    rows = lax.broadcasted_iota(jnp.int32, (R, Cp), 0)
    ww = rows % W
    not_left = ww > 0
    not_right = ww < W - 1
    if B > 1:
        rr = rows % HW                                  # pixel index within image
        not_top = rr >= W                               # row above stays in-image
        not_bot = rr < HW - W
    else:
        not_top = not_bot = None   # zero halo already covers vertical borders

    def row_mask(dy):
        return not_top if dy < 0 else (not_bot if dy > 0 else None)

    def col_mask(dx):
        return not_left if dx < 0 else (not_right if dx > 0 else None)

    # conv2 (3x3, stride 1, pad 1): gather 9 shifted taps, mask image borders,
    # feed the MXU one long K = 9*Cp contraction (better occupancy on the
    # 256-wide v6e/v7x MXUs than 9 small accumulate-dots).
    taps = []
    for dy in (-1, 0, 1):
        for dx in (-1, 0, 1):
            if dy == 0 and dx == 0:
                taps.append(y1_bf)                      # centre tap: reuse registers
                continue
            t = stage_ref[pl.ds(PAD + dy * W + dx, R), :]
            rm, cm = row_mask(dy), col_mask(dx)
            if rm is None and cm is None:
                masked = t
            elif rm is None:
                masked = jnp.where(cm, t, 0.0)
            elif cm is None:
                masked = jnp.where(rm, t, 0.0)
            else:
                masked = jnp.where(rm & cm, t, 0.0)
            taps.append(masked.astype(bf16))
    taps_cat = jnp.concatenate(taps, axis=-1)           # (R, 9*Cp) bf16
    y2 = jnp.dot(taps_cat, w2_ref[...], preferred_element_type=f32)
    y2 = jnp.maximum(y2 + b2_ref[...], 0.0)             # (R, Cp) f32

    # conv3 (1x1) + bias, identity residual add, final ReLU.
    y3 = jnp.dot(y2.astype(bf16), w3_ref[...], preferred_element_type=f32)
    o_ref[...] = jnp.maximum(y3 + b3_ref[...] + x.astype(f32), 0.0)


# ------------------------------ glue / wrapper -------------------------------
def _round_up(x, m):
    return ((x + m - 1) // m) * m


def _pick_b_tile(N, HW, max_rows=2048, min_steps=2):
    """Largest per-step image batch that fits the row budget while keeping at
    least `min_steps` grid steps (so the pipeline can overlap DMA/compute)."""
    divs = [d for d in range(1, N + 1) if N % d == 0]
    fit = [d for d in divs if d * HW <= max_rows] or [1]
    pipelined = [d for d in fit if N // d >= min_steps]
    return max(pipelined) if pipelined else max(fit)


@jax.jit
def bottleneck_forward(x_nchw, w1_oihw, w2_oihw, w3_oihw,
                       s1, b1, s2, b2, s3, b3):
    """NCHW wrapper matching the PyTorch module.  The Pallas kernel itself
    consumes/produces the flattened NHWC (pixels, channels) layout; in a real
    network you'd keep activations in that layout between blocks and skip the
    transposes here."""
    f32, bf16 = jnp.float32, jnp.bfloat16
    N, Cin, H, W = x_nchw.shape
    planes = w1_oihw.shape[0]
    cout = w3_oihw.shape[0]
    assert Cin == cout, "identity residual needs inplanes == planes*expansion"
    HW = H * W
    assert W % 8 == 0, "demo wrapper assumes 8-aligned width"
    Cp = C_PAD
    assert max(Cin, planes, cout) <= Cp
    PAD = _round_up(W + 1, 8)            # zero-halo rows above/below staged tile

    b_tile = _pick_b_tile(N, HW)
    R = b_tile * HW

    # NCHW -> flattened NHWC, bf16 for the HBM stream + MXU operands.  Only the
    # real Cin channels travel through HBM.
    x2d = jnp.transpose(x_nchw, (0, 2, 3, 1)).reshape(N * HW, Cin).astype(bf16)

    # Fold BN scale into conv weights (inference-form BN); pad to lane-dense
    # Cp=128 on the intermediate-channel side only; bf16 weights.
    w1 = w1_oihw[:, :, 0, 0].T * s1[None, :]                               # (Cin, planes)
    w2 = (jnp.transpose(w2_oihw, (2, 3, 1, 0)).reshape(9, planes, planes)
          * s2[None, None, :])                                             # (9, planes, planes)
    w3 = w3_oihw[:, :, 0, 0].T * s3[None, :]                               # (planes, cout)

    w1p = jnp.zeros((Cin, Cp), f32).at[:, :planes].set(w1).astype(bf16)
    w2p = (jnp.zeros((9, Cp, Cp), f32).at[:, :planes, :planes].set(w2)
           .reshape(9 * Cp, Cp).astype(bf16))           # fused K = 9*Cp contraction
    w3p = jnp.zeros((Cp, cout), f32).at[:planes, :].set(w3).astype(bf16)
    b1p = jnp.zeros((1, Cp), f32).at[0, :planes].set(b1)
    b2p = jnp.zeros((1, Cp), f32).at[0, :planes].set(b2)
    b3p = b3.reshape(1, cout).astype(f32)

    kernel = functools.partial(bottleneck_kernel, B=b_tile, H=H, W=W, PAD=PAD)

    out2d = pl.pallas_call(
        kernel,
        out_shape=jax.ShapeDtypeStruct((N * HW, cout), f32),
        grid=(N // b_tile,),
        in_specs=[
            pl.BlockSpec((R, Cin), lambda n: (n, 0)),          # x (streams, bf16)
            pl.BlockSpec((Cin, Cp), lambda n: (0, 0)),         # w1 (resident)
            pl.BlockSpec((9 * Cp, Cp), lambda n: (0, 0)),      # w2 fused taps (resident)
            pl.BlockSpec((Cp, cout), lambda n: (0, 0)),        # w3 (resident)
            pl.BlockSpec((1, Cp), lambda n: (0, 0)),           # b1
            pl.BlockSpec((1, Cp), lambda n: (0, 0)),           # b2
            pl.BlockSpec((1, cout), lambda n: (0, 0)),         # b3
        ],
        out_specs=pl.BlockSpec((R, cout), lambda n: (n, 0)),
        scratch_shapes=[pltpu.VMEM((PAD + R + PAD, Cp), f32)],
        compiler_params=pltpu.CompilerParams(
            dimension_semantics=("parallel",),     # image tiles shard across TCs (v7x)
            vmem_limit_bytes=32 * 1024 * 1024,     # within v7x's scoped default
        ),
    )(x2d, w1p, w2p, w3p, b1p, b2p, b3p)

    out = out2d.reshape(N, H, W, cout)
    return jnp.transpose(out, (0, 3, 1, 2))


# ------------------------------ pure-JAX reference ---------------------------
def reference_forward(x_nchw, w1_oihw, w2_oihw, w3_oihw, s1, b1, s2, b2, s3, b3):
    dn = ('NCHW', 'OIHW', 'NCHW')
    hi = lax.Precision.HIGHEST

    def bn(y, s, b):
        return y * s[None, :, None, None] + b[None, :, None, None]

    y = lax.conv_general_dilated(x_nchw, w1_oihw, (1, 1), 'VALID',
                                 dimension_numbers=dn, precision=hi)
    y = jnp.maximum(bn(y, s1, b1), 0.0)
    y = lax.conv_general_dilated(y, w2_oihw, (1, 1), ((1, 1), (1, 1)),
                                 dimension_numbers=dn, precision=hi)
    y = jnp.maximum(bn(y, s2, b2), 0.0)
    y = lax.conv_general_dilated(y, w3_oihw, (1, 1), 'VALID',
                                 dimension_numbers=dn, precision=hi)
    y = bn(y, s3, b3)
    return jnp.maximum(y + x_nchw, 0.0)


# ----------------------------------- main ------------------------------------
if __name__ == "__main__":
    key = jax.random.PRNGKey(0)
    keys = jax.random.split(key, 8)

    # Bottleneck(inplanes=16, planes=4) -> out channels = 4 * 4 = 16 = inplanes
    N, H, W = 2, 16, 16
    inplanes, planes, expansion = 16, 4, 4
    cout = planes * expansion

    x_nchw = jax.random.normal(keys[0], (N, inplanes, H, W), jnp.float32)

    w1_oihw = 0.2 * jax.random.normal(keys[1], (planes, inplanes, 1, 1), jnp.float32)
    w2_oihw = 0.2 * jax.random.normal(keys[2], (planes, planes, 3, 3), jnp.float32)
    w3_oihw = 0.2 * jax.random.normal(keys[3], (cout, planes, 1, 1), jnp.float32)

    def bn_params(k, c):
        k1, k2, k3, k4 = jax.random.split(k, 4)
        gamma = 1.0 + 0.1 * jax.random.normal(k1, (c,), jnp.float32)
        beta = 0.1 * jax.random.normal(k2, (c,), jnp.float32)
        mean = 0.1 * jax.random.normal(k3, (c,), jnp.float32)
        var = 0.5 + jnp.abs(jax.random.normal(k4, (c,), jnp.float32))
        eps = 1e-5
        scale = gamma / jnp.sqrt(var + eps)
        bias = beta - mean * scale
        return scale, bias

    s1, b1 = bn_params(keys[4], planes)
    s2, b2 = bn_params(keys[5], planes)
    s3, b3 = bn_params(keys[6], cout)

    out = bottleneck_forward(x_nchw, w1_oihw, w2_oihw, w3_oihw,
                             s1, b1, s2, b2, s3, b3)
    out = jax.block_until_ready(out)

    ref = reference_forward(x_nchw, w1_oihw, w2_oihw, w3_oihw,
                            s1, b1, s2, b2, s3, b3)
    ref = jax.block_until_ready(ref)

    assert out.shape == (N, cout, H, W)
    err = np.max(np.abs(np.asarray(out) - np.asarray(ref)))
    # Kernel uses bf16 MXU operands (f32 accumulation) vs the f32 HIGHEST
    # reference, so tolerance is relaxed accordingly.
    assert np.allclose(np.asarray(out), np.asarray(ref), atol=5e-2, rtol=5e-2), \
        f"max abs err = {err}"
    print("KERNEL_OK")
</pallas_src>

<mosaic_0001>
module attributes {stable_mosaic.version = 11 : i64} {
  func.func @bottleneck_kernel(%arg0: i32, %arg1: memref<256x16xbf16, #tpu.memory_space<vmem>>, %arg2: memref<16x128xbf16, #tpu.memory_space<vmem>>, %arg3: memref<1152x128xbf16, #tpu.memory_space<vmem>>, %arg4: memref<128x16xbf16, #tpu.memory_space<vmem>>, %arg5: memref<1x128xf32, #tpu.memory_space<vmem>>, %arg6: memref<1x128xf32, #tpu.memory_space<vmem>>, %arg7: memref<1x16xf32, #tpu.memory_space<vmem>>, %arg8: memref<256x16xf32, #tpu.memory_space<vmem>>, %arg9: memref<304x128xf32, #tpu.memory_space<vmem>>) attributes {dimension_semantics = [#tpu.dimension_semantics<parallel>], iteration_bounds = array<i64: 2>, scalar_prefetch = 0 : i64, scratch_operands = 1 : i64, tpu.core_type = #tpu.core_type<tc>, window_params = [{transform_indices = @transform_0, window_bounds = array<i64: 256, 16>}, {pipeline_mode = #tpu.pipeline_mode<synchronous>, transform_indices = @transform_1, window_bounds = array<i64: 16, 128>}, {pipeline_mode = #tpu.pipeline_mode<synchronous>, transform_indices = @transform_2, window_bounds = array<i64: 1152, 128>}, {pipeline_mode = #tpu.pipeline_mode<synchronous>, transform_indices = @transform_3, window_bounds = array<i64: 128, 16>}, {pipeline_mode = #tpu.pipeline_mode<synchronous>, transform_indices = @transform_4, window_bounds = array<i64: 1, 128>}, {pipeline_mode = #tpu.pipeline_mode<synchronous>, transform_indices = @transform_5, window_bounds = array<i64: 1, 128>}, {pipeline_mode = #tpu.pipeline_mode<synchronous>, transform_indices = @transform_6, window_bounds = array<i64: 1, 16>}, {transform_indices = @transform_7, window_bounds = array<i64: 256, 16>}]} {
    %c0 = arith.constant 0 : index
    %c0_0 = arith.constant 0 : index
    %0 = vector.load %arg1[%c0, %c0_0] : memref<256x16xbf16, #tpu.memory_space<vmem>>, vector<256x16xbf16>
    %c0_1 = arith.constant 0 : index
    %c0_2 = arith.constant 0 : index
    %1 = vector.load %arg2[%c0_1, %c0_2] : memref<16x128xbf16, #tpu.memory_space<vmem>>, vector<16x128xbf16>
    %cst = arith.constant dense<0.000000e+00> : vector<256x128xf32>
    %2 = tpu.matmul %0, %1, %cst {dimension_numbers = #tpu.dot_dimension_numbers<[1], [0], [0], [1], [0, 0, 1, 1], [], []>} : vector<256x16xbf16>, vector<16x128xbf16>, vector<256x128xf32> -> vector<256x128xf32>
    %c0_3 = arith.constant 0 : index
    %c0_4 = arith.constant 0 : index
    %3 = vector.load %arg5[%c0_3, %c0_4] : memref<1x128xf32, #tpu.memory_space<vmem>>, vector<1x128xf32>
    %4 = vector.broadcast %3 : vector<1x128xf32> to vector<256x128xf32>
    %5 = arith.addf %2, %4 : vector<256x128xf32>
    %cst_5 = arith.constant 0.000000e+00 : f32
    %6 = vector.broadcast %cst_5 : f32 to vector<256x128xf32>
    %7 = arith.maximumf %5, %6 : vector<256x128xf32>
    %8 = arith.truncf %7 : vector<256x128xf32> to vector<256x128xbf16>
    %cst_6 = arith.constant 0.000000e+00 : f32
    %9 = vector.broadcast %cst_6 : f32 to vector<24x128xf32>
    %c0_7 = arith.constant 0 : index
    %c0_8 = arith.constant 0 : index
    %10 = vector.load %arg9[%c0_7, %c0_8] : memref<304x128xf32, #tpu.memory_space<vmem>>, vector<24x128xf32>
    tpu.vector_store %arg9[%c0_7, %c0_8], %9 {strides = array<i32>} : memref<304x128xf32, #tpu.memory_space<vmem>>, vector<24x128xf32>,
    %cst_9 = arith.constant 0.000000e+00 : f32
    %11 = vector.broadcast %cst_9 : f32 to vector<24x128xf32>
    %c280 = arith.constant 280 : index
    %c0_10 = arith.constant 0 : index
    %12 = vector.load %arg9[%c280, %c0_10] : memref<304x128xf32, #tpu.memory_space<vmem>>, vector<24x128xf32>
    tpu.vector_store %arg9[%c280, %c0_10], %11 {strides = array<i32>} : memref<304x128xf32, #tpu.memory_space<vmem>>, vector<24x128xf32>,
    %c24 = arith.constant 24 : index
    %c0_11 = arith.constant 0 : index
    %13 = vector.load %arg9[%c24, %c0_11] : memref<304x128xf32, #tpu.memory_space<vmem>>, vector<256x128xf32>
    tpu.vector_store %arg9[%c24, %c0_11], %7 {strides = array<i32>} : memref<304x128xf32, #tpu.memory_space<vmem>>, vector<256x128xf32>,
    %14 = tpu.iota {dimensions = array<i32: 0>} : vector<256x128xi32>
    %c16_i32 = arith.constant 16 : i32
    %c0_i32 = arith.constant 0 : i32
    %15 = arith.cmpi eq, %c16_i32, %c0_i32 : i32
    %c1_i32 = arith.constant 1 : i32
    %16 = arith.select %15, %c1_i32, %c16_i32 : i32
    %17 = vector.broadcast %16 : i32 to vector<256x128xi32>
    %18 = arith.remsi %14, %17 : vector<256x128xi32>
    %c0_i32_12 = arith.constant 0 : i32
    %19 = vector.broadcast %c0_i32_12 : i32 to vector<256x128xi32>
    %20 = arith.cmpi ne, %18, %19 : vector<256x128xi32>
    %c0_i32_13 = arith.constant 0 : i32
    %21 = vector.broadcast %c0_i32_13 : i32 to vector<256x128xi32>
    %22 = arith.cmpi slt, %18, %21 : vector<256x128xi32>
    %c0_i32_14 = arith.constant 0 : i32
    %23 = arith.cmpi slt, %16, %c0_i32_14 : i32
    %24 = vector.broadcast %23 : i1 to vector<256x128xi1>
    %25 = vector.broadcast %24 : vector<256x128xi1> to vector<256x128xi1>
    %26 = arith.xori %22, %25 : vector<256x128xi1>
    %27 = arith.andi %26, %20 : vector<256x128xi1>
    %28 = vector.broadcast %16 : i32 to vector<256x128xi32>
    %29 = arith.addi %18, %28 : vector<256x128xi32>
    %30 = arith.select %27, %29, %18 : vector<256x128xi1>, vector<256x128xi32>
    %c0_i32_15 = arith.constant 0 : i32
    %31 = vector.broadcast %c0_i32_15 : i32 to vector<256x128xi32>
    %32 = arith.cmpi sgt, %30, %31 : vector<256x128xi32>
    %c15_i32 = arith.constant 15 : i32
    %33 = vector.broadcast %c15_i32 : i32 to vector<256x128xi32>
    %34 = arith.cmpi slt, %30, %33 : vector<256x128xi32>
    %c7 = arith.constant 7 : index
    %c0_16 = arith.constant 0 : index
    %35 = vector.load %arg9[%c7, %c0_16] : memref<304x128xf32, #tpu.memory_space<vmem>>, vector<256x128xf32>
    %cst_17 = arith.constant 0.000000e+00 : f32
    %36 = vector.broadcast %cst_17 : f32 to vector<256x128xf32>
    %37 = arith.select %32, %35, %36 : vector<256x128xi1>, vector<256x128xf32>
    %38 = arith.truncf %37 : vector<256x128xf32> to vector<256x128xbf16>
    %c8 = arith.constant 8 : index
    %c0_18 = arith.constant 0 : index
    %39 = vector.load %arg9[%c8, %c0_18] : memref<304x128xf32, #tpu.memory_space<vmem>>, vector<256x128xf32>
    %40 = arith.truncf %39 : vector<256x128xf32> to vector<256x128xbf16>
    %c9 = arith.constant 9 : index
    %c0_19 = arith.constant 0 : index
    %41 = vector.load %arg9[%c9, %c0_19] : memref<304x128xf32, #tpu.memory_space<vmem>>, vector<256x128xf32>
    %cst_20 = arith.constant 0.000000e+00 : f32
    %42 = vector.broadcast %cst_20 : f32 to vector<256x128xf32>
    %43 = arith.select %34, %41, %42 : vector<256x128xi1>, vector<256x128xf32>
    %44 = arith.truncf %43 : vector<256x128xf32> to vector<256x128xbf16>
    %c23 = arith.constant 23 : index
    %c0_21 = arith.constant 0 : index
    %45 = vector.load %arg9[%c23, %c0_21] : memref<304x128xf32, #tpu.memory_space<vmem>>, vector<256x128xf32>
    %cst_22 = arith.constant 0.000000e+00 : f32
    %46 = vector.broadcast %cst_22 : f32 to vector<256x128xf32>
    %47 = arith.select %32, %45, %46 : vector<256x128xi1>, vector<256x128xf32>
    %48 = arith.truncf %47 : vector<256x128xf32> to vector<256x128xbf16>
    %c25 = arith.constant 25 : index
    %c0_23 = arith.constant 0 : index
    %49 = vector.load %arg9[%c25, %c0_23] : memref<304x128xf32, #tpu.memory_space<vmem>>, vector<256x128xf32>
    %cst_24 = arith.constant 0.000000e+00 : f32
    %50 = vector.broadcast %cst_24 : f32 to vector<256x128xf32>
    %51 = arith.select %34, %49, %50 : vector<256x128xi1>, vector<256x128xf32>
    %52 = arith.truncf %51 : vector<256x128xf32> to vector<256x128xbf16>
    %c39 = arith.constant 39 : index
    %c0_25 = arith.constant 0 : index
    %53 = vector.load %arg9[%c39, %c0_25] : memref<304x128xf32, #tpu.memory_space<vmem>>, vector<256x128xf32>
    %cst_26 = arith.constant 0.000000e+00 : f32
    %54 = vector.broadcast %cst_26 : f32 to vector<256x128xf32>
    %55 = arith.select %32, %53, %54 : vector<256x128xi1>, vector<256x128xf32>
    %56 = arith.truncf %55 : vector<256x128xf32> to vector<256x128xbf16>
    %c40 = arith.constant 40 : index
    %c0_27 = arith.constant 0 : index
    %57 = vector.load %arg9[%c40, %c0_27] : memref<304x128xf32, #tpu.memory_space<vmem>>, vector<256x128xf32>
    %58 = arith.truncf %57 : vector<256x128xf32> to vector<256x128xbf16>
    %c41 = arith.constant 41 : index
    %c0_28 = arith.constant 0 : index
    %59 = vector.load %arg9[%c41, %c0_28] : memref<304x128xf32, #tpu.memory_space<vmem>>, vector<256x128xf32>
    %cst_29 = arith.constant 0.000000e+00 : f32
    %60 = vector.broadcast %cst_29 : f32 to vector<256x128xf32>
    %61 = arith.select %34, %59, %60 : vector<256x128xi1>, vector<256x128xf32>
    %62 = arith.truncf %61 : vector<256x128xf32> to vector<256x128xbf16>
    %63 = tpu.concatenate %38, %40, %44, %48, %8, %52, %56, %58, %62 in 1 : vector<256x128xbf16>, vector<256x128xbf16>, vector<256x128xbf16>, vector<256x128xbf16>, vector<256x128xbf16>, vector<256x128xbf16>, vector<256x128xbf16>, vector<256x128xbf16>, vector<256x128xbf16> -> vector<256x1152xbf16>
    %c0_30 = arith.constant 0 : index
    %c0_31 = arith.constant 0 : index
    %64 = vector.load %arg3[%c0_30, %c0_31] : memref<1152x128xbf16, #tpu.memory_space<vmem>>, vector<1152x128xbf16>
    %cst_32 = arith.constant dense<0.000000e+00> : vector<256x128xf32>
    %65 = tpu.matmul %63, %64, %cst_32 {dimension_numbers = #tpu.dot_dimension_numbers<[1], [0], [0], [1], [0, 0, 1, 1], [], []>} : vector<256x1152xbf16>, vector<1152x128xbf16>, vector<256x128xf32> -> vector<256x128xf32>
    %c0_33 = arith.constant 0 : index
    %c0_34 = arith.constant 0 : index
    %66 = vector.load %arg6[%c0_33, %c0_34] : memref<1x128xf32, #tpu.memory_space<vmem>>, vector<1x128xf32>
    %67 = vector.broadcast %66 : vector<1x128xf32> to vector<256x128xf32>
    %68 = arith.addf %65, %67 : vector<256x128xf32>
    %cst_35 = arith.constant 0.000000e+00 : f32
    %69 = vector.broadcast %cst_35 : f32 to vector<256x128xf32>
    %70 = arith.maximumf %68, %69 : vector<256x128xf32>
    %71 = arith.truncf %70 : vector<256x128xf32> to vector<256x128xbf16>
    %c0_36 = arith.constant 0 : index
    %c0_37 = arith.constant 0 : index
    %72 = vector.load %arg4[%c0_36, %c0_37] : memref<128x16xbf16, #tpu.memory_space<vmem>>, vector<128x16xbf16>
    %cst_38 = arith.constant dense<0.000000e+00> : vector<256x16xf32>
    %73 = tpu.matmul %71, %72, %cst_38 {dimension_numbers = #tpu.dot_dimension_numbers<[1], [0], [0], [1], [0, 0, 1, 1], [], []>} : vector<256x128xbf16>, vector<128x16xbf16>, vector<256x16xf32> -> vector<256x16xf32>
    %c0_39 = arith.constant 0 : index
    %c0_40 = arith.constant 0 : index
    %74 = vector.load %arg7[%c0_39, %c0_40] : memref<1x16xf32, #tpu.memory_space<vmem>>, vector<1x16xf32>
    %75 = vector.broadcast %74 : vector<1x16xf32> to vector<256x16xf32>
    %76 = arith.addf %73, %75 : vector<256x16xf32>
    %77 = arith.extf %0 : vector<256x16xbf16> to vector<256x16xf32>
    %78 = arith.addf %76, %77 : vector<256x16xf32>
    %cst_41 = arith.constant 0.000000e+00 : f32
    %79 = vector.broadcast %cst_41 : f32 to vector<256x16xf32>
    %80 = arith.maximumf %78, %79 : vector<256x16xf32>
    %c0_42 = arith.constant 0 : index
    %c0_43 = arith.constant 0 : index
    %81 = vector.load %arg8[%c0_42, %c0_43] : memref<256x16xf32, #tpu.memory_space<vmem>>, vector<256x16xf32>
    tpu.vector_store %arg8[%c0_42, %c0_43], %80 {strides = array<i32>} : memref<256x16xf32, #tpu.memory_space<vmem>>, vector<256x16xf32>,
    return
  }
  func.func @transform_0(%arg0: i32) -> (i32, i32) {
    %c0_i32 = arith.constant 0 : i32
    %c0_i32_0 = arith.constant 0 : i32
    return %arg0, %c0_i32 : i32, i32
  }
  func.func @transform_1(%arg0: i32) -> (i32, i32) {
    %c0_i32 = arith.constant 0 : i32
    %c0_i32_0 = arith.constant 0 : i32
    %c0_i32_1 = arith.constant 0 : i32
    return %c0_i32, %c0_i32_0 : i32, i32
  }
  func.func @transform_2(%arg0: i32) -> (i32, i32) {
    %c0_i32 = arith.constant 0 : i32
    %c0_i32_0 = arith.constant 0 : i32
    %c0_i32_1 = arith.constant 0 : i32
    return %c0_i32, %c0_i32_0 : i32, i32
  }
  func.func @transform_3(%arg0: i32) -> (i32, i32) {
    %c0_i32 = arith.constant 0 : i32
    %c0_i32_0 = arith.constant 0 : i32
    %c0_i32_1 = arith.constant 0 : i32
    return %c0_i32, %c0_i32_0 : i32, i32
  }
  func.func @transform_4(%arg0: i32) -> (i32, i32) {
    %c0_i32 = arith.constant 0 : i32
    %c0_i32_0 = arith.constant 0 : i32
    %c0_i32_1 = arith.constant 0 : i32
    return %c0_i32, %c0_i32_0 : i32, i32
  }
  func.func @transform_5(%arg0: i32) -> (i32, i32) {
    %c0_i32 = arith.constant 0 : i32
    %c0_i32_0 = arith.constant 0 : i32
    %c0_i32_1 = arith.constant 0 : i32
    return %c0_i32, %c0_i32_0 : i32, i32
  }
  func.func @transform_6(%arg0: i32) -> (i32, i32) {
    %c0_i32 = arith.constant 0 : i32
    %c0_i32_0 = arith.constant 0 : i32
    %c0_i32_1 = arith.constant 0 : i32
    return %c0_i32, %c0_i32_0 : i32, i32
  }
  func.func @transform_7(%arg0: i32) -> (i32, i32) {
    %c0_i32 = arith.constant 0 : i32
    %c0_i32_0 = arith.constant 0 : i32
    return %arg0, %c0_i32 : i32, i32
  }
}

</mosaic_0001>

<llo_original>
// kernel: bottleneck_forward.1
$region0: #{bottleneck_forward.1}
  #allocation0 [shape = 'u32[]', space=smem, size = 0x4, offset = 0x4, fixed_abs, tag = 'smem constant byte address 0x4 - core index']
  #allocation1 [shape = 'u32[72,128]{1,0:T(1,128)}', space=vmem, size = 0x9000, scoped, tag = 'internal scratch']
  #allocation2 [shape = 'f32[304,128]{1,0:T(8,128)}', space=vmem, size = 0x26000, scoped, tag = 'scratch operand']
  %s0 = inlined_call_operand.vmem [shape: bf16[512,16], index: 0, kind: input, shape index: {}]
  %s1 = inlined_call_operand.vmem [shape: bf16[16,128], index: 1, kind: input, shape index: {}]
  %s2 = inlined_call_operand.vmem [shape: bf16[1152,128], index: 2, kind: input, shape index: {}]
  %s3 = inlined_call_operand.vmem [shape: bf16[128,16], index: 3, kind: input, shape index: {}]
  %s4 = inlined_call_operand.vmem [shape: f32[1,128], index: 4, kind: input, shape index: {}]
  %s5 = inlined_call_operand.vmem [shape: f32[1,128], index: 5, kind: input, shape index: {}]
  %s6 = inlined_call_operand.vmem [shape: f32[1,16], index: 6, kind: input, shape index: {}]
  %s7 = inlined_call_operand.vmem [shape: f32[512,16], index: 7, kind: output, shape index: {}]
  %s8 = sld [smem:[#allocation0]]
  $region61: #{bottleneck_forward.1} parent=0
    _
  %s10 = ssub.s32 1, %s8
  %s11 = scalar_select 0, %s10, %s8
  loop: start=0, step=1, limit=4
  $region2: #{bottleneck_forward.1} parent=0 // loop_pre_header
    _
  $region3: #{bottleneck_forward.1} parent=0 // loop_header
    %s13 = sphi 0, %s17
    %p14 = scmp.ge.s32.totalorder %s13, 4
    %s23 = sphi 0, %s25
    %s26 = sphi 0, %s23
    %s27 = sphi 0, %s26
    %s43 = sphi 0, %s27
    %s47 = sphi 0, %s47
    %s49 = sphi 0, %s47
    %s50 = sphi 0, %s49
    %s64 = sphi 0, %s50
    %s68 = sphi 0, %s68
    %s70 = sphi 0, %s68
    %s71 = sphi 0, %s70
    %s85 = sphi 0, %s71
    %s89 = sphi 0, %s89
    %s91 = sphi 0, %s89
    %s92 = sphi 0, %s91
    %s106 = sphi 0, %s92
    %s110 = sphi 0, %s110
    %s112 = sphi 0, %s110
    %s113 = sphi 0, %s112
    %s127 = sphi 0, %s113
    %s131 = sphi 0, %s131
    %s133 = sphi 0, %s131
    %s134 = sphi 0, %s133
    %s148 = sphi 0, %s134
    %s152 = sphi 0, %s152
    %s154 = sphi 0, %s152
    %s155 = sphi 0, %s154
    %s169 = sphi 0, %s155
    %s175 = sphi 0, %s177
    %s178 = sphi 0, %s175
    %s179 = sphi 0, %s178
    %s195 = sphi 0, %s179
  $region4: #{bottleneck_forward.1} parent=0 // loop_header_branch
    %16 = sbr.rel (%p14) target = $region8
  $region5: #{bottleneck_forward.1} parent=0 // loop_body
    %s18 = ssub.s32 %s13, 1
    %s19 = ssub.s32 %s13, 2
    %s20 = sadd.s32 %s13, 1
    %s21 = ssub.s32 %s13, %s20
    %p22 = scmp.eq.s32.totalorder %s21, 0
    %s24 = sadd.s32 %s23, 1
    %s25 = scalar_select %p22, %s23, %s24
    %p28 = pneg %p22
    %p29 = scmp.eq.s32.totalorder %s13, 1
    %p30 = por %p28, %p29
    %p31 = scmp.ne.s32.totalorder %s23, %s26
    %p32 = scmp.eq.s32.totalorder %s13, 0
    %p33 = por %p31, %p32
    %p34 = scmp.ne.s32.totalorder %s23, %s26
    %p35 = scmp.eq.s32.totalorder %s18, 1
    %p36 = por %p34, %p35
    %p37 = scmp.ne.s32.totalorder %s26, %s27
    %p38 = scmp.eq.s32.totalorder %s18, 0
    %p39 = por %p37, %p38
    %p40 = scmp.ne.s32.totalorder %s26, %s27
    %p41 = scmp.eq.s32.totalorder %s19, 1
    %p42 = por %p40, %p41
    %p44 = scmp.ne.s32.totalorder %s27, %s43
    %p45 = scmp.eq.s32.totalorder %s19, 0
    %p46 = por %p44, %p45
    %s48 = sadd.s32 %s47, 1
    %p51 = scmp.eq.s32.totalorder %s13, 1
    %p52 = scmp.ne.s32.totalorder %s47, %s49
    %p53 = scmp.eq.s32.totalorder %s13, 0
    %p54 = por %p52, %p53
    %p55 = scmp.ne.s32.totalorder %s47, %s49
    %p56 = scmp.eq.s32.totalorder %s18, 1
    %p57 = por %p55, %p56
    %p58 = scmp.ne.s32.totalorder %s49, %s50
    %p59 = scmp.eq.s32.totalorder %s18, 0
    %p60 = por %p58, %p59
    %p61 = scmp.ne.s32.totalorder %s49, %s50
    %p62 = scmp.eq.s32.totalorder %s19, 1
    %p63 = por %p61, %p62
    %p65 = scmp.ne.s32.totalorder %s50, %s64
    %p66 = scmp.eq.s32.totalorder %s19, 0
    %p67 = por %p65, %p66
    %s69 = sadd.s32 %s68, 1
    %p72 = scmp.eq.s32.totalorder %s13, 1
    %p73 = scmp.ne.s32.totalorder %s68, %s70
    %p74 = scmp.eq.s32.totalorder %s13, 0
    %p75 = por %p73, %p74
    %p76 = scmp.ne.s32.totalorder %s68, %s70
    %p77 = scmp.eq.s32.totalorder %s18, 1
    %p78 = por %p76, %p77
    %p79 = scmp.ne.s32.totalorder %s70, %s71
    %p80 = scmp.eq.s32.totalorder %s18, 0
    %p81 = por %p79, %p80
    %p82 = scmp.ne.s32.totalorder %s70, %s71
    %p83 = scmp.eq.s32.totalorder %s19, 1
    %p84 = por %p82, %p83
    %p86 = scmp.ne.s32.totalorder %s71, %s85
    %p87 = scmp.eq.s32.totalorder %s19, 0
    %p88 = por %p86, %p87
    %s90 = sadd.s32 %s89, 1
    %p93 = scmp.eq.s32.totalorder %s13, 1
    %p94 = scmp.ne.s32.totalorder %s89, %s91
    %p95 = scmp.eq.s32.totalorder %s13, 0
    %p96 = por %p94, %p95
    %p97 = scmp.ne.s32.totalorder %s89, %s91
    %p98 = scmp.eq.s32.totalorder %s18, 1
    %p99 = por %p97, %p98
    %p100 = scmp.ne.s32.totalorder %s91, %s92
    %p101 = scmp.eq.s32.totalorder %s18, 0
    %p102 = por %p100, %p101
    %p103 = scmp.ne.s32.totalorder %s91, %s92
    %p104 = scmp.eq.s32.totalorder %s19, 1
    %p105 = por %p103, %p104
    %p107 = scmp.ne.s32.totalorder %s92, %s106
    %p108 = scmp.eq.s32.totalorder %s19, 0
    %p109 = por %p107, %p108
    %s111 = sadd.s32 %s110, 1
    %p114 = scmp.eq.s32.totalorder %s13, 1
    %p115 = scmp.ne.s32.totalorder %s110, %s112
    %p116 = scmp.eq.s32.totalorder %s13, 0
    %p117 = por %p115, %p116
    %p118 = scmp.ne.s32.totalorder %s110, %s112
    %p119 = scmp.eq.s32.totalorder %s18, 1
    %p120 = por %p118, %p119
    %p121 = scmp.ne.s32.totalorder %s112, %s113
    %p122 = scmp.eq.s32.totalorder %s18, 0
    %p123 = por %p121, %p122
    %p124 = scmp.ne.s32.totalorder %s112, %s113
    %p125 = scmp.eq.s32.totalorder %s19, 1
    %p126 = por %p124, %p125
    %p128 = scmp.ne.s32.totalorder %s113, %s127
    %p129 = scmp.eq.s32.totalorder %s19, 0
    %p130 = por %p128, %p129
    %s132 = sadd.s32 %s131, 1
    %p135 = scmp.eq.s32.totalorder %s13, 1
    %p136 = scmp.ne.s32.totalorder %s131, %s133
    %p137 = scmp.eq.s32.totalorder %s13, 0
    %p138 = por %p136, %p137
    %p139 = scmp.ne.s32.totalorder %s131, %s133
    %p140 = scmp.eq.s32.totalorder %s18, 1
    %p141 = por %p139, %p140
    %p142 = scmp.ne.s32.totalorder %s133, %s134
    %p143 = scmp.eq.s32.totalorder %s18, 0
    %p144 = por %p142, %p143
    %p145 = scmp.ne.s32.totalorder %s133, %s134
    %p146 = scmp.eq.s32.totalorder %s19, 1
    %p147 = por %p145, %p146
    %p149 = scmp.ne.s32.totalorder %s134, %s148
    %p150 = scmp.eq.s32.totalorder %s19, 0
    %p151 = por %p149, %p150
    %s153 = sadd.s32 %s152, 1
    %p156 = scmp.eq.s32.totalorder %s13, 1
    %p157 = scmp.ne.s32.totalorder %s152, %s154
    %p158 = scmp.eq.s32.totalorder %s13, 0
    %p159 = por %p157, %p158
    %p160 = scmp.ne.s32.totalorder %s152, %s154
    %p161 = scmp.eq.s32.totalorder %s18, 1
    %p162 = por %p160, %p161
    %p163 = scmp.ne.s32.totalorder %s154, %s155
    %p164 = scmp.eq.s32.totalorder %s18, 0
    %p165 = por %p163, %p164
    %p166 = scmp.ne.s32.totalorder %s154, %s155
    %p167 = scmp.eq.s32.totalorder %s19, 1
    %p168 = por %p166, %p167
    %p170 = scmp.ne.s32.totalorder %s155, %s169
    %p171 = scmp.eq.s32.totalorder %s19, 0
    %p172 = por %p170, %p171
    %s173 = ssub.s32 %s13, %s20
    %p174 = scmp.eq.s32.totalorder %s173, 0
    %s176 = sadd.s32 %s175, 1
    %s177 = scalar_select %p174, %s175, %s176
    %p180 = pneg %p174
    %p181 = scmp.eq.s32.totalorder %s13, 1
    %p182 = por %p180, %p181
    %p183 = scmp.ne.s32.totalorder %s175, %s178
    %p184 = scmp.eq.s32.totalorder %s13, 0
    %p185 = por %p183, %p184
    %p186 = scmp.ne.s32.totalorder %s175, %s178
    %p187 = scmp.eq.s32.totalorder %s18, 1
    %p188 = por %p186, %p187
    %p189 = scmp.ne.s32.totalorder %s178, %s179
    %p190 = scmp.eq.s32.totalorder %s18, 0
    %p191 = por %p189, %p190
    %p192 = scmp.ne.s32.totalorder %s178, %s179
    %p193 = scmp.eq.s32.totalorder %s19, 1
    %p194 = por %p192, %p193
    %p196 = scmp.ne.s32.totalorder %s179, %s195
    %p197 = scmp.eq.s32.totalorder %s19, 0
    %p198 = por %p196, %p197
    %p199 = scmp.le.s32.totalorder 1, %s13
    %p200 = scmp.lt.s32.totalorder %s13, 3
    %p201 = pnand %p199, %p200
    %p202 = pneg %p201
    // Predicated region
    $region9: #{bottleneck_forward.1} parent=5 // pred_check
      _
    $region10: #{bottleneck_forward.1} parent=5 // pred_check_branch
      %204 = sbr.rel (%p201) target = $region12
    $region11: #{bottleneck_forward.1} parent=5 // pred_region
      %s205 = ssub.s32 %s13, 1
      // Predicated region
      $region13: #{bottleneck_forward.1} parent=11 // pred_check
        %p206 = pneg %p60
      $region14: #{bottleneck_forward.1} parent=11 // pred_check_branch
        %208 = sbr.rel (%p206) target = $region16
      $region15: #{bottleneck_forward.1} parent=11 // pred_region
        _
      $region16: #{bottleneck_forward.1} parent=11 // pred_fallthru
        _
      // Predicated region
      $region17: #{bottleneck_forward.1} parent=11 // pred_check
        %p209 = pneg %p81
      $region18: #{bottleneck_forward.1} parent=11 // pred_check_branch
        %211 = sbr.rel (%p209) target = $region20
      $region19: #{bottleneck_forward.1} parent=11 // pred_region
        _
      $region20: #{bottleneck_forward.1} parent=11 // pred_fallthru
        _
      // Predicated region
      $region21: #{bottleneck_forward.1} parent=11 // pred_check
        %p212 = pneg %p102
      $region22: #{bottleneck_forward.1} parent=11 // pred_check_branch
        %214 = sbr.rel (%p212) target = $region24
      $region23: #{bottleneck_forward.1} parent=11 // pred_region
        _
      $region24: #{bottleneck_forward.1} parent=11 // pred_fallthru
        _
      // Predicated region
      $region25: #{bottleneck_forward.1} parent=11 // pred_check
        %p215 = pneg %p123
      $region26: #{bottleneck_forward.1} parent=11 // pred_check_branch
        %217 = sbr.rel (%p215) target = $region28
      $region27: #{bottleneck_forward.1} parent=11 // pred_region
        _
      $region28: #{bottleneck_forward.1} parent=11 // pred_fallthru
        _
      // Predicated region
      $region29: #{bottleneck_forward.1} parent=11 // pred_check
        %p218 = pneg %p144
      $region30: #{bottleneck_forward.1} parent=11 // pred_check_branch
        %220 = sbr.rel (%p218) target = $region32
      $region31: #{bottleneck_forward.1} parent=11 // pred_region
        _
      $region32: #{bottleneck_forward.1} parent=11 // pred_fallthru
        _
      // Predicated region
      $region33: #{bottleneck_forward.1} parent=11 // pred_check
        %p221 = pneg %p165
      $region34: #{bottleneck_forward.1} parent=11 // pred_check_branch
        %223 = sbr.rel (%p221) target = $region36
      $region35: #{bottleneck_forward.1} parent=11 // pred_region
        _
      $region36: #{bottleneck_forward.1} parent=11 // pred_fallthru
        _
    $region12: #{bottleneck_forward.1} parent=5 // pred_fallthru
      _
    %p224 = scmp.lt.s32.totalorder %s13, 2
    // Predicated region
    $region37: #{bottleneck_forward.1} parent=5 // pred_check
      %p225 = pneg %p224
    $region38: #{bottleneck_forward.1} parent=5 // pred_check_branch
      %227 = sbr.rel (%p225) target = $region40
    $region39: #{bottleneck_forward.1} parent=5 // pred_region
      // Predicated region
      $region41: #{bottleneck_forward.1} parent=39 // pred_check
        %p228 = pneg %p33
      $region42: #{bottleneck_forward.1} parent=39 // pred_check_branch
        %230 = sbr.rel (%p228) target = $region44
      $region43: #{bottleneck_forward.1} parent=39 // pred_region
        %s231 = smul.u32 32, %s13
        %p232 = scmp.lt.s32.totalorder %s231, 63
        %s233 = scalar_select %p232, %s231, 63
        %s234 = smul.addr %s233, 4
        %s235 = scalar_lea.vmem %s0, %s234
        %s236 = smul.u32 32, %s13
      $region44: #{bottleneck_forward.1} parent=39 // pred_fallthru
        _
    $region40: #{bottleneck_forward.1} parent=5 // pred_fallthru
      _
    %p237 = scmp.le.s32.totalorder 1, %s13
    %p238 = scmp.lt.s32.totalorder %s13, 3
    %p239 = pnand %p237, %p238
    %p240 = pneg %p239
    // Predicated region
    $region45: #{bottleneck_forward.1} parent=5 // pred_check
      _
    $region46: #{bottleneck_forward.1} parent=5 // pred_check_branch
      %242 = sbr.rel (%p239) target = $region48
    $region47: #{bottleneck_forward.1} parent=5 // pred_region
      %s243 = ssub.s32 %s13, 1
      %s244 = smul.u32 32, %s18
      %p245 = scmp.lt.s32.totalorder %s244, 63
      %s246 = scalar_select %p245, %s244, 63
      %s247 = smul.addr %s246, 4
      %s248 = scalar_lea.vmem %s0, %s247
      %p249 = pneg %p39
      %p250 = pneg %p36
      %p251 = pneg %p60
      %p252 = pneg %p57
      %p253 = pneg %p81
      %p254 = pneg %p78
      %p255 = pneg %p102
      %p256 = pneg %p99
      %p257 = pneg %p123
      %p258 = pneg %p120
      %p259 = pneg %p144
      %p260 = pneg %p141
      %p261 = pneg %p165
      %p262 = pneg %p162
      %p263 = pneg %p191
      %p264 = pneg %p188
      %s265 = smul.u32 32, %s18
      %p266 = scmp.lt.s32.totalorder %s265, 63
      %s267 = scalar_select %p266, %s265, 63
      %s268 = smul.addr %s267, 8
      %s269 = scalar_lea.vmem %s7, %s268
      %s270 = smul.u32 32, %s18
      %p271 = scmp.lt.s32.totalorder %s270, 63
      %s272 = scalar_select %p271, %s270, 63
      %s273 = smul.addr %s272, 4
      %s274 = scalar_lea.vmem %s0, %s273
      %s275 = smul.u32 32, %s18
      %s276 = smul.u32 32, %s18
      %p277 = scmp.lt.s32.totalorder %s276, 63
      %s278 = scalar_select %p277, %s276, 63
      %s279 = smul.addr %s278, 8
      %s280 = scalar_lea.vmem %s7, %s279
      %s281 = smul.u32 32, %s18
      %v283 = vld [vmem:[%s274] sm:$0xf]
      %v284 = vld [vmem:[%s274 + $0x4] sm:$0xf]
      %v285 = vld [vmem:[%s274 + $0x8] sm:$0xf]
      %v286 = vld [vmem:[%s274 + $0xc] sm:$0xf]
      %v287 = vld [vmem:[%s274 + $0x10] sm:$0xf]
      %v288 = vld [vmem:[%s274 + $0x14] sm:$0xf]
      %v289 = vld [vmem:[%s274 + $0x18] sm:$0xf]
      %v290 = vld [vmem:[%s274 + $0x1c] sm:$0xf]
      %v291 = vld [vmem:[%s274 + $0x20] sm:$0xf]
      %v292 = vld [vmem:[%s274 + $0x24] sm:$0xf]
      %v293 = vld [vmem:[%s274 + $0x28] sm:$0xf]
      %v294 = vld [vmem:[%s274 + $0x2c] sm:$0xf]
      %v295 = vld [vmem:[%s274 + $0x30] sm:$0xf]
      %v296 = vld [vmem:[%s274 + $0x34] sm:$0xf]
      %v297 = vld [vmem:[%s274 + $0x38] sm:$0xf]
      %v298 = vld [vmem:[%s274 + $0x3c] sm:$0xf]
      %v299 = vld [vmem:[%s274 + $0x40] sm:$0xf]
      %v300 = vld [vmem:[%s274 + $0x44] sm:$0xf]
      %v301 = vld [vmem:[%s274 + $0x48] sm:$0xf]
      %v302 = vld [vmem:[%s274 + $0x4c] sm:$0xf]
      %v303 = vld [vmem:[%s274 + $0x50] sm:$0xf]
      %v304 = vld [vmem:[%s274 + $0x54] sm:$0xf]
      %v305 = vld [vmem:[%s274 + $0x58] sm:$0xf]
      %v306 = vld [vmem:[%s274 + $0x5c] sm:$0xf]
      %v307 = vld [vmem:[%s274 + $0x60] sm:$0xf]
      %v308 = vld [vmem:[%s274 + $0x64] sm:$0xf]
      %v309 = vld [vmem:[%s274 + $0x68] sm:$0xf]
      %v310 = vld [vmem:[%s274 + $0x6c] sm:$0xf]
      %v311 = vld [vmem:[%s274 + $0x70] sm:$0xf]
      %v312 = vld [vmem:[%s274 + $0x74] sm:$0xf]
      %v313 = vld [vmem:[%s274 + $0x78] sm:$0xf]
      %v314 = vld [vmem:[%s274 + $0x7c] sm:$0xf]
      %v315 = vld [vmem:[%s1] sm:$0xf]
      %v316 = vld [vmem:[%s1 + $0x4] sm:$0xf]
      %v317 = vld [vmem:[%s4] sm:$0x1]
      %v319 = vperm.slane %v317, 0
      %v353 = vunpack.c.l.b16 %v283
      %v354 = vunpack.c.l.b16 %v284
      %v355 = vunpack.c.l.b16 %v285
      %v356 = vunpack.c.l.b16 %v286
      %v357 = vunpack.c.l.b16 %v287
      %v358 = vunpack.c.l.b16 %v288
      %v359 = vunpack.c.l.b16 %v289
      %v360 = vunpack.c.l.b16 %v290
      %v361 = vunpack.c.l.b16 %v291
      %v362 = vunpack.c.l.b16 %v292
      %v363 = vunpack.c.l.b16 %v293
      %v364 = vunpack.c.l.b16 %v294
      %v365 = vunpack.c.l.b16 %v295
      %v366 = vunpack.c.l.b16 %v296
      %v367 = vunpack.c.l.b16 %v297
      %v368 = vunpack.c.l.b16 %v298
      %v369 = vunpack.c.l.b16 %v299
      %v370 = vunpack.c.l.b16 %v300
      %v371 = vunpack.c.l.b16 %v301
      %v372 = vunpack.c.l.b16 %v302
      %v373 = vunpack.c.l.b16 %v303
      %v374 = vunpack.c.l.b16 %v304
      %v375 = vunpack.c.l.b16 %v305
      %v376 = vunpack.c.l.b16 %v306
      %v377 = vunpack.c.l.b16 %v307
      %v378 = vunpack.c.l.b16 %v308
      %v379 = vunpack.c.l.b16 %v309
      %v380 = vunpack.c.l.b16 %v310
      %v381 = vunpack.c.l.b16 %v311
      %v382 = vunpack.c.l.b16 %v312
      %v383 = vunpack.c.l.b16 %v313
      %v384 = vunpack.c.l.b16 %v314
      %v385 = vpack.c.b16 %v354, %v353
      %v386 = vpack.c.b16 %v356, %v355
      %v387 = vpack.c.b16 %v358, %v357
      %v388 = vpack.c.b16 %v360, %v359
      %v389 = vpack.c.b16 %v362, %v361
      %v390 = vpack.c.b16 %v364, %v363
      %v391 = vpack.c.b16 %v366, %v365
      %v392 = vpack.c.b16 %v368, %v367
      %v393 = vpack.c.b16 %v370, %v369
      %v394 = vpack.c.b16 %v372, %v371
      %v395 = vpack.c.b16 %v374, %v373
      %v396 = vpack.c.b16 %v376, %v375
      %v397 = vpack.c.b16 %v378, %v377
      %v398 = vpack.c.b16 %v380, %v379
      %v399 = vpack.c.b16 %v382, %v381
      %v400 = vpack.c.b16 %v384, %v383
      %v403 = vunpack.c.l.b16 %v315
      %v404 = vunpack.c.l.b16 %v316
      %v405 = vpack.c.b16 %v404, %v403
      %vm407 = vcmask 130048
      %v409 = vsel %vm407, %v385, 0
      %v412 = vsel %vm407, %v386, 0
      %v415 = vsel %vm407, %v387, 0
      %v418 = vsel %vm407, %v388, 0
      %v421 = vsel %vm407, %v389, 0
      %v424 = vsel %vm407, %v390, 0
      %v427 = vsel %vm407, %v391, 0
      %v430 = vsel %vm407, %v392, 0
      %v433 = vsel %vm407, %v393, 0
      %v436 = vsel %vm407, %v394, 0
      %v439 = vsel %vm407, %v395, 0
      %v442 = vsel %vm407, %v396, 0
      %v445 = vsel %vm407, %v397, 0
      %v448 = vsel %vm407, %v398, 0
      %v451 = vsel %vm407, %v399, 0
      %v454 = vsel %vm407, %v400, 0
      %456 = vmatpush.bf16.msra.mxu0 0
      %457 = vmatpush.bf16.msra.mxu0 0
      %458 = vmatpush.bf16.msra.mxu0 0
      %459 = vmatpush.bf16.msra.mxu0 0
      %460 = vmatpush.bf16.msra.mxu0 0
      %461 = vmatpush.bf16.msra.mxu0 0
      %462 = vmatpush.bf16.msra.mxu0 0
      %463 = vmatpush.bf16.msra.mxu0 %v405
      %464 = vmatmul.bf16.gmra.mxu0 %v409
      %v465 = vpop.f32.mrf.mxu0
      %v466 = vadd.f32 %v319, %v465
      %v467 = vpop.f32.mrf.mxu0
      %v468 = vadd.f32 %v319, %v467
      %469 = vmatmul.bf16.gmra.mxu0 %v412
      %v470 = vpop.f32.mrf.mxu0
      %v471 = vadd.f32 %v319, %v470
      %v472 = vpop.f32.mrf.mxu0
      %v473 = vadd.f32 %v319, %v472
      %474 = vmatmul.bf16.gmra.mxu0 %v415
      %v475 = vpop.f32.mrf.mxu0
      %v476 = vadd.f32 %v319, %v475
      %v477 = vpop.f32.mrf.mxu0
      %v478 = vadd.f32 %v319, %v477
      %479 = vmatmul.bf16.gmra.mxu0 %v418
      %v480 = vpop.f32.mrf.mxu0
      %v481 = vadd.f32 %v319, %v480
      %v482 = vpop.f32.mrf.mxu0
      %v483 = vadd.f32 %v319, %v482
      %484 = vmatmul.bf16.gmra.mxu0 %v421
      %v485 = vpop.f32.mrf.mxu0
      %v486 = vadd.f32 %v319, %v485
      %v487 = vpop.f32.mrf.mxu0
      %v488 = vadd.f32 %v319, %v487
      %489 = vmatmul.bf16.gmra.mxu0 %v424
      %v490 = vpop.f32.mrf.mxu0
      %v491 = vadd.f32 %v319, %v490
      %v492 = vpop.f32.mrf.mxu0
      %v493 = vadd.f32 %v319, %v492
      %494 = vmatmul.bf16.gmra.mxu0 %v427
      %v495 = vpop.f32.mrf.mxu0
      %v496 = vadd.f32 %v319, %v495
      %v497 = vpop.f32.mrf.mxu0
      %v498 = vadd.f32 %v319, %v497
      %499 = vmatmul.bf16.gmra.mxu0 %v430
      %v500 = vpop.f32.mrf.mxu0
      %v501 = vadd.f32 %v319, %v500
      %v502 = vpop.f32.mrf.mxu0
      %v503 = vadd.f32 %v319, %v502
      %504 = vmatmul.bf16.gmra.mxu0 %v433
      %v505 = vpop.f32.mrf.mxu0
      %v506 = vadd.f32 %v319, %v505
      %v507 = vpop.f32.mrf.mxu0
      %v508 = vadd.f32 %v319, %v507
      %509 = vmatmul.bf16.gmra.mxu0 %v436
      %v510 = vpop.f32.mrf.mxu0
      %v511 = vadd.f32 %v319, %v510
      %v512 = vpop.f32.mrf.mxu0
      %v513 = vadd.f32 %v319, %v512
      %514 = vmatmul.bf16.gmra.mxu0 %v439
      %v515 = vpop.f32.mrf.mxu0
      %v516 = vadd.f32 %v319, %v515
      %v517 = vpop.f32.mrf.mxu0
      %v518 = vadd.f32 %v319, %v517
      %519 = vmatmul.bf16.gmra.mxu0 %v442
      %v520 = vpop.f32.mrf.mxu0
      %v521 = vadd.f32 %v319, %v520
      %v522 = vpop.f32.mrf.mxu0
      %v523 = vadd.f32 %v319, %v522
      %524 = vmatmul.bf16.gmra.mxu0 %v445
      %v525 = vpop.f32.mrf.mxu0
      %v526 = vadd.f32 %v319, %v525
      %v527 = vpop.f32.mrf.mxu0
      %v528 = vadd.f32 %v319, %v527
      %529 = vmatmul.bf16.gmra.mxu0 %v448
      %v530 = vpop.f32.mrf.mxu0
      %v531 = vadd.f32 %v319, %v530
      %v532 = vpop.f32.mrf.mxu0
      %v533 = vadd.f32 %v319, %v532
      %534 = vmatmul.bf16.gmra.mxu0 %v451
      %v535 = vpop.f32.mrf.mxu0
      %v536 = vadd.f32 %v319, %v535
      %v537 = vpop.f32.mrf.mxu0
      %v538 = vadd.f32 %v319, %v537
      %539 = vmatmul.bf16.gmra.mxu0 %v454
      %v540 = vpop.f32.mrf.mxu0
      %v541 = vadd.f32 %v319, %v540
      %v542 = vpop.f32.mrf.mxu0
      %v543 = vadd.f32 %v319, %v542
      %544 = vdwg.mxu0
      %v545 = vmax.f32 %v466, 0.0
      %v546 = vmax.f32 %v468, 0.0
      %v547 = vmax.f32 %v471, 0.0
      %v548 = vmax.f32 %v473, 0.0
      %v549 = vmax.f32 %v476, 0.0
      %v550 = vmax.f32 %v478, 0.0
      %v551 = vmax.f32 %v481, 0.0
      %v552 = vmax.f32 %v483, 0.0
      %v553 = vmax.f32 %v486, 0.0
      %v554 = vmax.f32 %v488, 0.0
      %v555 = vmax.f32 %v491, 0.0
      %v556 = vmax.f32 %v493, 0.0
      %v557 = vmax.f32 %v496, 0.0
      %v558 = vmax.f32 %v498, 0.0
      %v559 = vmax.f32 %v501, 0.0
      %v560 = vmax.f32 %v503, 0.0
      %v561 = vmax.f32 %v506, 0.0
      %v562 = vmax.f32 %v508, 0.0
      %v563 = vmax.f32 %v511, 0.0
      %v564 = vmax.f32 %v513, 0.0
      %v565 = vmax.f32 %v516, 0.0
      %v566 = vmax.f32 %v518, 0.0
      %v567 = vmax.f32 %v521, 0.0
      %v568 = vmax.f32 %v523, 0.0
      %v569 = vmax.f32 %v526, 0.0
      %v570 = vmax.f32 %v528, 0.0
      %v571 = vmax.f32 %v531, 0.0
      %v572 = vmax.f32 %v533, 0.0
      %v573 = vmax.f32 %v536, 0.0
      %v574 = vmax.f32 %v538, 0.0
      %v575 = vmax.f32 %v541, 0.0
      %v576 = vmax.f32 %v543, 0.0
      %v577 = vpack.c.bf16 %v545, %v545
      %v578 = vpack.c.bf16 %v546, %v546
      %v579 = vpack.c.bf16 %v547, %v547
      %v580 = vpack.c.bf16 %v548, %v548
      %v581 = vpack.c.bf16 %v549, %v549
      %v582 = vpack.c.bf16 %v550, %v550
      %v583 = vpack.c.bf16 %v551, %v551
      %v584 = vpack.c.bf16 %v552, %v552
      %v585 = vpack.c.bf16 %v553, %v553
      %v586 = vpack.c.bf16 %v554, %v554
      %v587 = vpack.c.bf16 %v555, %v555
      %v588 = vpack.c.bf16 %v556, %v556
      %v589 = vpack.c.bf16 %v557, %v557
      %v590 = vpack.c.bf16 %v558, %v558
      %v591 = vpack.c.bf16 %v559, %v559
      %v592 = vpack.c.bf16 %v560, %v560
      %v593 = vpack.c.bf16 %v561, %v561
      %v594 = vpack.c.bf16 %v562, %v562
      %v595 = vpack.c.bf16 %v563, %v563
      %v596 = vpack.c.bf16 %v564, %v564
      %v597 = vpack.c.bf16 %v565, %v565
      %v598 = vpack.c.bf16 %v566, %v566
      %v599 = vpack.c.bf16 %v567, %v567
      %v600 = vpack.c.bf16 %v568, %v568
      %v601 = vpack.c.bf16 %v569, %v569
      %v602 = vpack.c.bf16 %v570, %v570
      %v603 = vpack.c.bf16 %v571, %v571
      %v604 = vpack.c.bf16 %v572, %v572
      %v605 = vpack.c.bf16 %v573, %v573
      %v606 = vpack.c.bf16 %v574, %v574
      %v607 = vpack.c.bf16 %v575, %v575
      %v608 = vpack.c.bf16 %v576, %v576
      %609 = vst [vmem:[#allocation2] sm:$0xff] 0.0
      %610 = vst [vmem:[#allocation2 + $0x8] sm:$0xff] 0.0
      %611 = vst [vmem:[#allocation2 + $0x10] sm:$0xff] 0.0
      %612 = vst [vmem:[#allocation2 + $0x118] sm:$0xff] 0.0
      %613 = vst [vmem:[#allocation2 + $0x120] sm:$0xff] 0.0
      %614 = vst [vmem:[#allocation2 + $0x128] sm:$0xff] 0.0
      %615 = vst [vmem:[#allocation2 + $0x18] sm:$0xff] %v545
      %616 = vst [vmem:[#allocation2 + $0x20] sm:$0xff] %v546
      %617 = vst [vmem:[#allocation2 + $0x28] sm:$0xff] %v547
      %618 = vst [vmem:[#allocation2 + $0x30] sm:$0xff] %v548
      %619 = vst [vmem:[#allocation2 + $0x38] sm:$0xff] %v549
      %620 = vst [vmem:[#allocation2 + $0x40] sm:$0xff] %v550
      %621 = vst [vmem:[#allocation2 + $0x48] sm:$0xff] %v551
      %622 = vst [vmem:[#allocation2 + $0x50] sm:$0xff] %v552
      %623 = vst [vmem:[#allocation2 + $0x58] sm:$0xff] %v553
      %624 = vst [vmem:[#allocation2 + $0x60] sm:$0xff] %v554
      %625 = vst [vmem:[#allocation2 + $0x68] sm:$0xff] %v555
      %626 = vst [vmem:[#allocation2 + $0x70] sm:$0xff] %v556
      %627 = vst [vmem:[#allocation2 + $0x78] sm:$0xff] %v557
      %628 = vst [vmem:[#allocation2 + $0x80] sm:$0xff] %v558
      %629 = vst [vmem:[#allocation2 + $0x88] sm:$0xff] %v559
      %630 = vst [vmem:[#allocation2 + $0x90] sm:$0xff] %v560
      %631 = vst [vmem:[#allocation2 + $0x98] sm:$0xff] %v561
      %632 = vst [vmem:[#allocation2 + $0xa0] sm:$0xff] %v562
      %633 = vst [vmem:[#allocation2 + $0xa8] sm:$0xff] %v563
      %634 = vst [vmem:[#allocation2 + $0xb0] sm:$0xff] %v564
      %635 = vst [vmem:[#allocation2 + $0xb8] sm:$0xff] %v565
      %636 = vst [vmem:[#allocation2 + $0xc0] sm:$0xff] %v566
      %637 = vst [vmem:[#allocation2 + $0xc8] sm:$0xff] %v567
      %638 = vst [vmem:[#allocation2 + $0xd0] sm:$0xff] %v568
      %639 = vst [vmem:[#allocation2 + $0xd8] sm:$0xff] %v569
      %640 = vst [vmem:[#allocation2 + $0xe0] sm:$0xff] %v570
      %641 = vst [vmem:[#allocation2 + $0xe8] sm:$0xff] %v571
      %642 = vst [vmem:[#allocation2 + $0xf0] sm:$0xff] %v572
      %643 = vst [vmem:[#allocation2 + $0xf8] sm:$0xff] %v573
      %644 = vst [vmem:[#allocation2 + $0x100] sm:$0xff] %v574
      %645 = vst [vmem:[#allocation2 + $0x108] sm:$0xff] %v575
      %646 = vst [vmem:[#allocation2 + $0x110] sm:$0xff] %v576
      %v647 = vlaneseq
      %v648 = vshrl.u32 %v647, 7
      %v649 = vadd.s32 %v648, 8
      %v650 = vadd.s32 %v648, 16
      %v651 = vadd.s32 %v648, 24
      %v652 = vadd.s32 %v648, 32
      %v653 = vadd.s32 %v648, 40
      %v654 = vadd.s32 %v648, 48
      %v655 = vadd.s32 %v648, 56
      %v656 = vadd.s32 %v648, 64
      %v657 = vadd.s32 %v648, 72
      %v658 = vadd.s32 %v648, 80
      %v659 = vadd.s32 %v648, 88
      %v660 = vadd.s32 %v648, 96
      %v661 = vadd.s32 %v648, 104
      %v662 = vadd.s32 %v648, 112
      %v663 = vadd.s32 %v648, 120
      %v664 = vadd.s32 %v648, 128
      %v665 = vadd.s32 %v648, 136
      %v666 = vadd.s32 %v648, 144
      %v667 = vadd.s32 %v648, 152
      %v668 = vadd.s32 %v648, 160
      %v669 = vadd.s32 %v648, 168
      %v670 = vadd.s32 %v648, 176
      %v671 = vadd.s32 %v648, 184
      %v672 = vadd.s32 %v648, 192
      %v673 = vadd.s32 %v648, 200
      %v674 = vadd.s32 %v648, 208
      %v675 = vadd.s32 %v648, 216
      %v676 = vadd.s32 %v648, 224
      %v677 = vadd.s32 %v648, 232
      %v678 = vadd.s32 %v648, 240
      %v679 = vadd.s32 %v648, 248
      %vm680 = vcmp.lt.s32.totalorder %v648, 0
      %v681 = vsub.s32 0, %v648
      %v682 = vsel %vm680, %v681, %v648
      %v683 = vshrl.u32 %v682, 4
      %v684 = vand.u32 %v682, 15
      %v685 = vsub.s32 0, %v684
      %v686 = vsel %vm680, %v685, %v684
      %vm687 = vcmp.lt.s32.totalorder %v649, 0
      %v688 = vsub.s32 0, %v649
      %v689 = vsel %vm687, %v688, %v649
      %v690 = vshrl.u32 %v689, 4
      %v691 = vand.u32 %v689, 15
      %v692 = vsub.s32 0, %v691
      %v693 = vsel %vm687, %v692, %v691
      %vm694 = vcmp.lt.s32.totalorder %v650, 0
      %v695 = vsub.s32 0, %v650
      %v696 = vsel %vm694, %v695, %v650
      %v697 = vshrl.u32 %v696, 4
      %v698 = vand.u32 %v696, 15
      %v699 = vsub.s32 0, %v698
      %v700 = vsel %vm694, %v699, %v698
      %vm701 = vcmp.lt.s32.totalorder %v651, 0
      %v702 = vsub.s32 0, %v651
      %v703 = vsel %vm701, %v702, %v651
      %v704 = vshrl.u32 %v703, 4
      %v705 = vand.u32 %v703, 15
      %v706 = vsub.s32 0, %v705
      %v707 = vsel %vm701, %v706, %v705
      %vm708 = vcmp.lt.s32.totalorder %v652, 0
      %v709 = vsub.s32 0, %v652
      %v710 = vsel %vm708, %v709, %v652
      %v711 = vshrl.u32 %v710, 4
      %v712 = vand.u32 %v710, 15
      %v713 = vsub.s32 0, %v712
      %v714 = vsel %vm708, %v713, %v712
      %vm715 = vcmp.lt.s32.totalorder %v653, 0
      %v716 = vsub.s32 0, %v653
      %v717 = vsel %vm715, %v716, %v653
      %v718 = vshrl.u32 %v717, 4
      %v719 = vand.u32 %v717, 15
      %v720 = vsub.s32 0, %v719
      %v721 = vsel %vm715, %v720, %v719
      %vm722 = vcmp.lt.s32.totalorder %v654, 0
      %v723 = vsub.s32 0, %v654
      %v724 = vsel %vm722, %v723, %v654
      %v725 = vshrl.u32 %v724, 4
      %v726 = vand.u32 %v724, 15
      %v727 = vsub.s32 0, %v726
      %v728 = vsel %vm722, %v727, %v726
      %vm729 = vcmp.lt.s32.totalorder %v655, 0
      %v730 = vsub.s32 0, %v655
      %v731 = vsel %vm729, %v730, %v655
      %v732 = vshrl.u32 %v731, 4
      %v733 = vand.u32 %v731, 15
      %v734 = vsub.s32 0, %v733
      %v735 = vsel %vm729, %v734, %v733
      %vm736 = vcmp.lt.s32.totalorder %v656, 0
      %v737 = vsub.s32 0, %v656
      %v738 = vsel %vm736, %v737, %v656
      %v739 = vshrl.u32 %v738, 4
      %v740 = vand.u32 %v738, 15
      %v741 = vsub.s32 0, %v740
      %v742 = vsel %vm736, %v741, %v740
      %vm743 = vcmp.lt.s32.totalorder %v657, 0
      %v744 = vsub.s32 0, %v657
      %v745 = vsel %vm743, %v744, %v657
      %v746 = vshrl.u32 %v745, 4
      %v747 = vand.u32 %v745, 15
      %v748 = vsub.s32 0, %v747
      %v749 = vsel %vm743, %v748, %v747
      %vm750 = vcmp.lt.s32.totalorder %v658, 0
      %v751 = vsub.s32 0, %v658
      %v752 = vsel %vm750, %v751, %v658
      %v753 = vshrl.u32 %v752, 4
      %v754 = vand.u32 %v752, 15
      %v755 = vsub.s32 0, %v754
      %v756 = vsel %vm750, %v755, %v754
      %vm757 = vcmp.lt.s32.totalorder %v659, 0
      %v758 = vsub.s32 0, %v659
      %v759 = vsel %vm757, %v758, %v659
      %v760 = vshrl.u32 %v759, 4
      %v761 = vand.u32 %v759, 15
      %v762 = vsub.s32 0, %v761
      %v763 = vsel %vm757, %v762, %v761
      %vm764 = vcmp.lt.s32.totalorder %v660, 0
      %v765 = vsub.s32 0, %v660
      %v766 = vsel %vm764, %v765, %v660
      %v767 = vshrl.u32 %v766, 4
      %v768 = vand.u32 %v766, 15
      %v769 = vsub.s32 0, %v768
      %v770 = vsel %vm764, %v769, %v768
      %vm771 = vcmp.lt.s32.totalorder %v661, 0
      %v772 = vsub.s32 0, %v661
      %v773 = vsel %vm771, %v772, %v661
      %v774 = vshrl.u32 %v773, 4
      %v775 = vand.u32 %v773, 15
      %v776 = vsub.s32 0, %v775
      %v777 = vsel %vm771, %v776, %v775
      %vm778 = vcmp.lt.s32.totalorder %v662, 0
      %v779 = vsub.s32 0, %v662
      %v780 = vsel %vm778, %v779, %v662
      %v781 = vshrl.u32 %v780, 4
      %v782 = vand.u32 %v780, 15
      %v783 = vsub.s32 0, %v782
      %v784 = vsel %vm778, %v783, %v782
      %vm785 = vcmp.lt.s32.totalorder %v663, 0
      %v786 = vsub.s32 0, %v663
      %v787 = vsel %vm785, %v786, %v663
      %v788 = vshrl.u32 %v787, 4
      %v789 = vand.u32 %v787, 15
      %v790 = vsub.s32 0, %v789
      %v791 = vsel %vm785, %v790, %v789
      %vm792 = vcmp.lt.s32.totalorder %v664, 0
      %v793 = vsub.s32 0, %v664
      %v794 = vsel %vm792, %v793, %v664
      %v795 = vshrl.u32 %v794, 4
      %v796 = vand.u32 %v794, 15
      %v797 = vsub.s32 0, %v796
      %v798 = vsel %vm792, %v797, %v796
      %vm799 = vcmp.lt.s32.totalorder %v665, 0
      %v800 = vsub.s32 0, %v665
      %v801 = vsel %vm799, %v800, %v665
      %v802 = vshrl.u32 %v801, 4
      %v803 = vand.u32 %v801, 15
      %v804 = vsub.s32 0, %v803
      %v805 = vsel %vm799, %v804, %v803
      %vm806 = vcmp.lt.s32.totalorder %v666, 0
      %v807 = vsub.s32 0, %v666
      %v808 = vsel %vm806, %v807, %v666
      %v809 = vshrl.u32 %v808, 4
      %v810 = vand.u32 %v808, 15
      %v811 = vsub.s32 0, %v810
      %v812 = vsel %vm806, %v811, %v810
      %vm813 = vcmp.lt.s32.totalorder %v667, 0
      %v814 = vsub.s32 0, %v667
      %v815 = vsel %vm813, %v814, %v667
      %v816 = vshrl.u32 %v815, 4
      %v817 = vand.u32 %v815, 15
      %v818 = vsub.s32 0, %v817
      %v819 = vsel %vm813, %v818, %v817
      %vm820 = vcmp.lt.s32.totalorder %v668, 0
      %v821 = vsub.s32 0, %v668
      %v822 = vsel %vm820, %v821, %v668
      %v823 = vshrl.u32 %v822, 4
      %v824 = vand.u32 %v822, 15
      %v825 = vsub.s32 0, %v824
      %v826 = vsel %vm820, %v825, %v824
      %vm827 = vcmp.lt.s32.totalorder %v669, 0
      %v828 = vsub.s32 0, %v669
      %v829 = vsel %vm827, %v828, %v669
      %v830 = vshrl.u32 %v829, 4
      %v831 = vand.u32 %v829, 15
      %v832 = vsub.s32 0, %v831
      %v833 = vsel %vm827, %v832, %v831
      %vm834 = vcmp.lt.s32.totalorder %v670, 0
      %v835 = vsub.s32 0, %v670
      %v836 = vsel %vm834, %v835, %v670
      %v837 = vshrl.u32 %v836, 4
      %v838 = vand.u32 %v836, 15
      %v839 = vsub.s32 0, %v838
      %v840 = vsel %vm834, %v839, %v838
      %vm841 = vcmp.lt.s32.totalorder %v671, 0
      %v842 = vsub.s32 0, %v671
      %v843 = vsel %vm841, %v842, %v671
      %v844 = vshrl.u32 %v843, 4
      %v845 = vand.u32 %v843, 15
      %v846 = vsub.s32 0, %v845
      %v847 = vsel %vm841, %v846, %v845
      %vm848 = vcmp.lt.s32.totalorder %v672, 0
      %v849 = vsub.s32 0, %v672
      %v850 = vsel %vm848, %v849, %v672
      %v851 = vshrl.u32 %v850, 4
      %v852 = vand.u32 %v850, 15
      %v853 = vsub.s32 0, %v852
      %v854 = vsel %vm848, %v853, %v852
      %vm855 = vcmp.lt.s32.totalorder %v673, 0
      %v856 = vsub.s32 0, %v673
      %v857 = vsel %vm855, %v856, %v673
      %v858 = vshrl.u32 %v857, 4
      %v859 = vand.u32 %v857, 15
      %v860 = vsub.s32 0, %v859
      %v861 = vsel %vm855, %v860, %v859
      %vm862 = vcmp.lt.s32.totalorder %v674, 0
      %v863 = vsub.s32 0, %v674
      %v864 = vsel %vm862, %v863, %v674
      %v865 = vshrl.u32 %v864, 4
      %v866 = vand.u32 %v864, 15
      %v867 = vsub.s32 0, %v866
      %v868 = vsel %vm862, %v867, %v866
      %vm869 = vcmp.lt.s32.totalorder %v675, 0
      %v870 = vsub.s32 0, %v675
      %v871 = vsel %vm869, %v870, %v675
      %v872 = vshrl.u32 %v871, 4
      %v873 = vand.u32 %v871, 15
      %v874 = vsub.s32 0, %v873
      %v875 = vsel %vm869, %v874, %v873
      %vm876 = vcmp.lt.s32.totalorder %v676, 0
      %v877 = vsub.s32 0, %v676
      %v878 = vsel %vm876, %v877, %v676
      %v879 = vshrl.u32 %v878, 4
      %v880 = vand.u32 %v878, 15
      %v881 = vsub.s32 0, %v880
      %v882 = vsel %vm876, %v881, %v880
      %vm883 = vcmp.lt.s32.totalorder %v677, 0
      %v884 = vsub.s32 0, %v677
      %v885 = vsel %vm883, %v884, %v677
      %v886 = vshrl.u32 %v885, 4
      %v887 = vand.u32 %v885, 15
      %v888 = vsub.s32 0, %v887
      %v889 = vsel %vm883, %v888, %v887
      %vm890 = vcmp.lt.s32.totalorder %v678, 0
      %v891 = vsub.s32 0, %v678
      %v892 = vsel %vm890, %v891, %v678
      %v893 = vshrl.u32 %v892, 4
      %v894 = vand.u32 %v892, 15
      %v895 = vsub.s32 0, %v894
      %v896 = vsel %vm890, %v895, %v894
      %vm897 = vcmp.lt.s32.totalorder %v679, 0
      %v898 = vsub.s32 0, %v679
      %v899 = vsel %vm897, %v898, %v679
      %v900 = vshrl.u32 %v899, 4
      %v901 = vand.u32 %v899, 15
      %v902 = vsub.s32 0, %v901
      %v903 = vsel %vm897, %v902, %v901
      %vm904 = vcmp.ne.s32.totalorder %v686, 0
      %vm905 = vcmp.ne.s32.totalorder %v693, 0
      %vm906 = vcmp.ne.s32.totalorder %v700, 0
      %vm907 = vcmp.ne.s32.totalorder %v707, 0
      %vm908 = vcmp.ne.s32.totalorder %v714, 0
      %vm909 = vcmp.ne.s32.totalorder %v721, 0
      %vm910 = vcmp.ne.s32.totalorder %v728, 0
      %vm911 = vcmp.ne.s32.totalorder %v735, 0
      %vm912 = vcmp.ne.s32.totalorder %v742, 0
      %vm913 = vcmp.ne.s32.totalorder %v749, 0
      %vm914 = vcmp.ne.s32.totalorder %v756, 0
      %vm915 = vcmp.ne.s32.totalorder %v763, 0
      %vm916 = vcmp.ne.s32.totalorder %v770, 0
      %vm917 = vcmp.ne.s32.totalorder %v777, 0
      %vm918 = vcmp.ne.s32.totalorder %v784, 0
      %vm919 = vcmp.ne.s32.totalorder %v791, 0
      %vm920 = vcmp.ne.s32.totalorder %v798, 0
      %vm921 = vcmp.ne.s32.totalorder %v805, 0
      %vm922 = vcmp.ne.s32.totalorder %v812, 0
      %vm923 = vcmp.ne.s32.totalorder %v819, 0
      %vm924 = vcmp.ne.s32.totalorder %v826, 0
      %vm925 = vcmp.ne.s32.totalorder %v833, 0
      %vm926 = vcmp.ne.s32.totalorder %v840, 0
      %vm927 = vcmp.ne.s32.totalorder %v847, 0
      %vm928 = vcmp.ne.s32.totalorder %v854, 0
      %vm929 = vcmp.ne.s32.totalorder %v861, 0
      %vm930 = vcmp.ne.s32.totalorder %v868, 0
      %vm931 = vcmp.ne.s32.totalorder %v875, 0
      %vm932 = vcmp.ne.s32.totalorder %v882, 0
      %vm933 = vcmp.ne.s32.totalorder %v889, 0
      %vm934 = vcmp.ne.s32.totalorder %v896, 0
      %vm935 = vcmp.ne.s32.totalorder %v903, 0
      %vm936 = vcmp.lt.s32.totalorder %v686, 0
      %vm937 = vcmp.lt.s32.totalorder %v693, 0
      %vm938 = vcmp.lt.s32.totalorder %v700, 0
      %vm939 = vcmp.lt.s32.totalorder %v707, 0
      %vm940 = vcmp.lt.s32.totalorder %v714, 0
      %vm941 = vcmp.lt.s32.totalorder %v721, 0
      %vm942 = vcmp.lt.s32.totalorder %v728, 0
      %vm943 = vcmp.lt.s32.totalorder %v735, 0
      %vm944 = vcmp.lt.s32.totalorder %v742, 0
      %vm945 = vcmp.lt.s32.totalorder %v749, 0
      %vm946 = vcmp.lt.s32.totalorder %v756, 0
      %vm947 = vcmp.lt.s32.totalorder %v763, 0
      %vm948 = vcmp.lt.s32.totalorder %v770, 0
      %vm949 = vcmp.lt.s32.totalorder %v777, 0
      %vm950 = vcmp.lt.s32.totalorder %v784, 0
      %vm951 = vcmp.lt.s32.totalorder %v791, 0
      %vm952 = vcmp.lt.s32.totalorder %v798, 0
      %vm953 = vcmp.lt.s32.totalorder %v805, 0
      %vm954 = vcmp.lt.s32.totalorder %v812, 0
      %vm955 = vcmp.lt.s32.totalorder %v819, 0
      %vm956 = vcmp.lt.s32.totalorder %v826, 0
      %vm957 = vcmp.lt.s32.totalorder %v833, 0
      %vm958 = vcmp.lt.s32.totalorder %v840, 0
      %vm959 = vcmp.lt.s32.totalorder %v847, 0
      %vm960 = vcmp.lt.s32.totalorder %v854, 0
      %vm961 = vcmp.lt.s32.totalorder %v861, 0
      %vm962 = vcmp.lt.s32.totalorder %v868, 0
      %vm963 = vcmp.lt.s32.totalorder %v875, 0
      %vm964 = vcmp.lt.s32.totalorder %v882, 0
      %vm965 = vcmp.lt.s32.totalorder %v889, 0
      %vm966 = vcmp.lt.s32.totalorder %v896, 0
      %vm967 = vcmp.lt.s32.totalorder %v903, 0
      %vm968 = vmand %vm936, %vm904
      %vm969 = vmand %vm937, %vm905
      %vm970 = vmand %vm938, %vm906
      %vm971 = vmand %vm939, %vm907
      %vm972 = vmand %vm940, %vm908
      %vm973 = vmand %vm941, %vm909
      %vm974 = vmand %vm942, %vm910
      %vm975 = vmand %vm943, %vm911
      %vm976 = vmand %vm944, %vm912
      %vm977 = vmand %vm945, %vm913
      %vm978 = vmand %vm946, %vm914
      %vm979 = vmand %vm947, %vm915
      %vm980 = vmand %vm948, %vm916
      %vm981 = vmand %vm949, %vm917
      %vm982 = vmand %vm950, %vm918
      %vm983 = vmand %vm951, %vm919
      %vm984 = vmand %vm952, %vm920
      %vm985 = vmand %vm953, %vm921
      %vm986 = vmand %vm954, %vm922
      %vm987 = vmand %vm955, %vm923
      %vm988 = vmand %vm956, %vm924
      %vm989 = vmand %vm957, %vm925
      %vm990 = vmand %vm958, %vm926
      %vm991 = vmand %vm959, %vm927
      %vm992 = vmand %vm960, %vm928
      %vm993 = vmand %vm961, %vm929
      %vm994 = vmand %vm962, %vm930
      %vm995 = vmand %vm963, %vm931
      %vm996 = vmand %vm964, %vm932
      %vm997 = vmand %vm965, %vm933
      %vm998 = vmand %vm966, %vm934
      %vm999 = vmand %vm967, %vm935
      %v1000 = vadd.s32 %v686, 16
      %v1001 = vadd.s32 %v693, 16
      %v1002 = vadd.s32 %v700, 16
      %v1003 = vadd.s32 %v707, 16
      %v1004 = vadd.s32 %v714, 16
      %v1005 = vadd.s32 %v721, 16
      %v1006 = vadd.s32 %v728, 16
      %v1007 = vadd.s32 %v735, 16
      %v1008 = vadd.s32 %v742, 16
      %v1009 = vadd.s32 %v749, 16
      %v1010 = vadd.s32 %v756, 16
      %v1011 = vadd.s32 %v763, 16
      %v1012 = vadd.s32 %v770, 16
      %v1013 = vadd.s32 %v777, 16
      %v1014 = vadd.s32 %v784, 16
      %v1015 = vadd.s32 %v791, 16
      %v1016 = vadd.s32 %v798, 16
      %v1017 = vadd.s32 %v805, 16
      %v1018 = vadd.s32 %v812, 16
      %v1019 = vadd.s32 %v819, 16
      %v1020 = vadd.s32 %v826, 16
      %v1021 = vadd.s32 %v833, 16
      %v1022 = vadd.s32 %v840, 16
      %v1023 = vadd.s32 %v847, 16
      %v1024 = vadd.s32 %v854, 16
      %v1025 = vadd.s32 %v861, 16
      %v1026 = vadd.s32 %v868, 16
      %v1027 = vadd.s32 %v875, 16
      %v1028 = vadd.s32 %v882, 16
      %v1029 = vadd.s32 %v889, 16
      %v1030 = vadd.s32 %v896, 16
      %v1031 = vadd.s32 %v903, 16
      %v1032 = vsel %vm968, %v1000, %v686
      %v1033 = vsel %vm969, %v1001, %v693
      %v1034 = vsel %vm970, %v1002, %v700
      %v1035 = vsel %vm971, %v1003, %v707
      %v1036 = vsel %vm972, %v1004, %v714
      %v1037 = vsel %vm973, %v1005, %v721
      %v1038 = vsel %vm974, %v1006, %v728
      %v1039 = vsel %vm975, %v1007, %v735
      %v1040 = vsel %vm976, %v1008, %v742
      %v1041 = vsel %vm977, %v1009, %v749
      %v1042 = vsel %vm978, %v1010, %v756
      %v1043 = vsel %vm979, %v1011, %v763
      %v1044 = vsel %vm980, %v1012, %v770
      %v1045 = vsel %vm981, %v1013, %v777
      %v1046 = vsel %vm982, %v1014, %v784
      %v1047 = vsel %vm983, %v1015, %v791
      %v1048 = vsel %vm984, %v1016, %v798
      %v1049 = vsel %vm985, %v1017, %v805
      %v1050 = vsel %vm986, %v1018, %v812
      %v1051 = vsel %vm987, %v1019, %v819
      %v1052 = vsel %vm988, %v1020, %v826
      %v1053 = vsel %vm989, %v1021, %v833
      %v1054 = vsel %vm990, %v1022, %v840
      %v1055 = vsel %vm991, %v1023, %v847
      %v1056 = vsel %vm992, %v1024, %v854
      %v1057 = vsel %vm993, %v1025, %v861
      %v1058 = vsel %vm994, %v1026, %v868
      %v1059 = vsel %vm995, %v1027, %v875
      %v1060 = vsel %vm996, %v1028, %v882
      %v1061 = vsel %vm997, %v1029, %v889
      %v1062 = vsel %vm998, %v1030, %v896
      %v1063 = vsel %vm999, %v1031, %v903
      %vm1064 = vcmp.gt.s32.totalorder %v1032, 0
      %vm1065 = vcmp.gt.s32.totalorder %v1033, 0
      %vm1066 = vcmp.gt.s32.totalorder %v1034, 0
      %vm1067 = vcmp.gt.s32.totalorder %v1035, 0
      %vm1068 = vcmp.gt.s32.totalorder %v1036, 0
      %vm1069 = vcmp.gt.s32.totalorder %v1037, 0
      %vm1070 = vcmp.gt.s32.totalorder %v1038, 0
      %vm1071 = vcmp.gt.s32.totalorder %v1039, 0
      %vm1072 = vcmp.gt.s32.totalorder %v1040, 0
      %vm1073 = vcmp.gt.s32.totalorder %v1041, 0
      %vm1074 = vcmp.gt.s32.totalorder %v1042, 0
      %vm1075 = vcmp.gt.s32.totalorder %v1043, 0
      %vm1076 = vcmp.gt.s32.totalorder %v1044, 0
      %vm1077 = vcmp.gt.s32.totalorder %v1045, 0
      %vm1078 = vcmp.gt.s32.totalorder %v1046, 0
      %vm1079 = vcmp.gt.s32.totalorder %v1047, 0
      %vm1080 = vcmp.gt.s32.totalorder %v1048, 0
      %vm1081 = vcmp.gt.s32.totalorder %v1049, 0
      %vm1082 = vcmp.gt.s32.totalorder %v1050, 0
      %vm1083 = vcmp.gt.s32.totalorder %v1051, 0
      %vm1084 = vcmp.gt.s32.totalorder %v1052, 0
      %vm1085 = vcmp.gt.s32.totalorder %v1053, 0
      %vm1086 = vcmp.gt.s32.totalorder %v1054, 0
      %vm1087 = vcmp.gt.s32.totalorder %v1055, 0
      %vm1088 = vcmp.gt.s32.totalorder %v1056, 0
      %vm1089 = vcmp.gt.s32.totalorder %v1057, 0
      %vm1090 = vcmp.gt.s32.totalorder %v1058, 0
      %vm1091 = vcmp.gt.s32.totalorder %v1059, 0
      %vm1092 = vcmp.gt.s32.totalorder %v1060, 0
      %vm1093 = vcmp.gt.s32.totalorder %v1061, 0
      %vm1094 = vcmp.gt.s32.totalorder %v1062, 0
      %vm1095 = vcmp.gt.s32.totalorder %v1063, 0
      %vm1096 = vcmp.lt.s32.totalorder %v1032, 15
      %vm1097 = vcmp.lt.s32.totalorder %v1033, 15
      %vm1098 = vcmp.lt.s32.totalorder %v1034, 15
      %vm1099 = vcmp.lt.s32.totalorder %v1035, 15
      %vm1100 = vcmp.lt.s32.totalorder %v1036, 15
      %vm1101 = vcmp.lt.s32.totalorder %v1037, 15
      %vm1102 = vcmp.lt.s32.totalorder %v1038, 15
      %vm1103 = vcmp.lt.s32.totalorder %v1039, 15
      %vm1104 = vcmp.lt.s32.totalorder %v1040, 15
      %vm1105 = vcmp.lt.s32.totalorder %v1041, 15
      %vm1106 = vcmp.lt.s32.totalorder %v1042, 15
      %vm1107 = vcmp.lt.s32.totalorder %v1043, 15
      %vm1108 = vcmp.lt.s32.totalorder %v1044, 15
      %vm1109 = vcmp.lt.s32.totalorder %v1045, 15
      %vm1110 = vcmp.lt.s32.totalorder %v1046, 15
      %vm1111 = vcmp.lt.s32.totalorder %v1047, 15
      %vm1112 = vcmp.lt.s32.totalorder %v1048, 15
      %vm1113 = vcmp.lt.s32.totalorder %v1049, 15
      %vm1114 = vcmp.lt.s32.totalorder %v1050, 15
      %vm1115 = vcmp.lt.s32.totalorder %v1051, 15
      %vm1116 = vcmp.lt.s32.totalorder %v1052, 15
      %vm1117 = vcmp.lt.s32.totalorder %v1053, 15
      %vm1118 = vcmp.lt.s32.totalorder %v1054, 15
      %vm1119 = vcmp.lt.s32.totalorder %v1055, 15
      %vm1120 = vcmp.lt.s32.totalorder %v1056, 15
      %vm1121 = vcmp.lt.s32.totalorder %v1057, 15
      %vm1122 = vcmp.lt.s32.totalorder %v1058, 15
      %vm1123 = vcmp.lt.s32.totalorder %v1059, 15
      %vm1124 = vcmp.lt.s32.totalorder %v1060, 15
      %vm1125 = vcmp.lt.s32.totalorder %v1061, 15
      %vm1126 = vcmp.lt.s32.totalorder %v1062, 15
      %vm1127 = vcmp.lt.s32.totalorder %v1063, 15
      %v1128 = vld [vmem:[#allocation2 + $0x7] sm:$0xff]
      %v1129 = vld [vmem:[#allocation2 + $0xf] sm:$0xff]
      %v1130 = vld [vmem:[#allocation2 + $0x17] sm:$0xff]
      %v1131 = vld [vmem:[#allocation2 + $0x1f] sm:$0xff]
      %v1132 = vld [vmem:[#allocation2 + $0x27] sm:$0xff]
      %v1133 = vld [vmem:[#allocation2 + $0x2f] sm:$0xff]
      %v1134 = vld [vmem:[#allocation2 + $0x37] sm:$0xff]
      %v1135 = vld [vmem:[#allocation2 + $0x3f] sm:$0xff]
      %v1136 = vld [vmem:[#allocation2 + $0x47] sm:$0xff]
      %v1137 = vld [vmem:[#allocation2 + $0x4f] sm:$0xff]
      %v1138 = vld [vmem:[#allocation2 + $0x57] sm:$0xff]
      %v1139 = vld [vmem:[#allocation2 + $0x5f] sm:$0xff]
      %v1140 = vld [vmem:[#allocation2 + $0x67] sm:$0xff]
      %v1141 = vld [vmem:[#allocation2 + $0x6f] sm:$0xff]
      %v1142 = vld [vmem:[#allocation2 + $0x77] sm:$0xff]
      %v1143 = vld [vmem:[#allocation2 + $0x7f] sm:$0xff]
      %v1144 = vld [vmem:[#allocation2 + $0x87] sm:$0xff]
      %v1145 = vld [vmem:[#allocation2 + $0x8f] sm:$0xff]
      %v1146 = vld [vmem:[#allocation2 + $0x97] sm:$0xff]
      %v1147 = vld [vmem:[#allocation2 + $0x9f] sm:$0xff]
      %v1148 = vld [vmem:[#allocation2 + $0xa7] sm:$0xff]
      %v1149 = vld [vmem:[#allocation2 + $0xaf] sm:$0xff]
      %v1150 = vld [vmem:[#allocation2 + $0xb7] sm:$0xff]
      %v1151 = vld [vmem:[#allocation2 + $0xbf] sm:$0xff]
      %v1152 = vld [vmem:[#allocation2 + $0xc7] sm:$0xff]
      %v1153 = vld [vmem:[#allocation2 + $0xcf] sm:$0xff]
      %v1154 = vld [vmem:[#allocation2 + $0xd7] sm:$0xff]
      %v1155 = vld [vmem:[#allocation2 + $0xdf] sm:$0xff]
      %v1156 = vld [vmem:[#allocation2 + $0xe7] sm:$0xff]
      %v1157 = vld [vmem:[#allocation2 + $0xef] sm:$0xff]
      %v1158 = vld [vmem:[#allocation2 + $0xf7] sm:$0xff]
      %v1159 = vld [vmem:[#allocation2 + $0xff] sm:$0xff]
      %v1160 = vsel %vm1064, %v1128, 0.0
      %v1161 = vsel %vm1065, %v1129, 0.0
      %v1162 = vsel %vm1066, %v1130, 0.0
      %v1163 = vsel %vm1067, %v1131, 0.0
      %v1164 = vsel %vm1068, %v1132, 0.0
      %v1165 = vsel %vm1069, %v1133, 0.0
      %v1166 = vsel %vm1070, %v1134, 0.0
      %v1167 = vsel %vm1071, %v1135, 0.0
      %v1168 = vsel %vm1072, %v1136, 0.0
      %v1169 = vsel %vm1073, %v1137, 0.0
      %v1170 = vsel %vm1074, %v1138, 0.0
      %v1171 = vsel %vm1075, %v1139, 0.0
      %v1172 = vsel %vm1076, %v1140, 0.0
      %v1173 = vsel %vm1077, %v1141, 0.0
      %v1174 = vsel %vm1078, %v1142, 0.0
      %v1175 = vsel %vm1079, %v1143, 0.0
      %v1176 = vsel %vm1080, %v1144, 0.0
      %v1177 = vsel %vm1081, %v1145, 0.0
      %v1178 = vsel %vm1082, %v1146, 0.0
      %v1179 = vsel %vm1083, %v1147, 0.0
      %v1180 = vsel %vm1084, %v1148, 0.0
      %v1181 = vsel %vm1085, %v1149, 0.0
      %v1182 = vsel %vm1086, %v1150, 0.0
      %v1183 = vsel %vm1087, %v1151, 0.0
      %v1184 = vsel %vm1088, %v1152, 0.0
      %v1185 = vsel %vm1089, %v1153, 0.0
      %v1186 = vsel %vm1090, %v1154, 0.0
      %v1187 = vsel %vm1091, %v1155, 0.0
      %v1188 = vsel %vm1092, %v1156, 0.0
      %v1189 = vsel %vm1093, %v1157, 0.0
      %v1190 = vsel %vm1094, %v1158, 0.0
      %v1191 = vsel %vm1095, %v1159, 0.0
      %v1192 = vpack.c.bf16 %v1160, %v1160
      %v1193 = vpack.c.bf16 %v1161, %v1161
      %v1194 = vpack.c.bf16 %v1162, %v1162
      %v1195 = vpack.c.bf16 %v1163, %v1163
      %v1196 = vpack.c.bf16 %v1164, %v1164
      %v1197 = vpack.c.bf16 %v1165, %v1165
      %v1198 = vpack.c.bf16 %v1166, %v1166
      %v1199 = vpack.c.bf16 %v1167, %v1167
      %v1200 = vpack.c.bf16 %v1168, %v1168
      %v1201 = vpack.c.bf16 %v1169, %v1169
      %v1202 = vpack.c.bf16 %v1170, %v1170
      %v1203 = vpack.c.bf16 %v1171, %v1171
      %v1204 = vpack.c.bf16 %v1172, %v1172
      %v1205 = vpack.c.bf16 %v1173, %v1173
      %v1206 = vpack.c.bf16 %v1174, %v1174
      %v1207 = vpack.c.bf16 %v1175, %v1175
      %v1208 = vpack.c.bf16 %v1176, %v1176
      %v1209 = vpack.c.bf16 %v1177, %v1177
      %v1210 = vpack.c.bf16 %v1178, %v1178
      %v1211 = vpack.c.bf16 %v1179, %v1179
      %v1212 = vpack.c.bf16 %v1180, %v1180
      %v1213 = vpack.c.bf16 %v1181, %v1181
      %v1214 = vpack.c.bf16 %v1182, %v1182
      %v1215 = vpack.c.bf16 %v1183, %v1183
      %v1216 = vpack.c.bf16 %v1184, %v1184
      %v1217 = vpack.c.bf16 %v1185, %v1185
      %v1218 = vpack.c.bf16 %v1186, %v1186
      %v1219 = vpack.c.bf16 %v1187, %v1187
      %v1220 = vpack.c.bf16 %v1188, %v1188
      %v1221 = vpack.c.bf16 %v1189, %v1189
      %v1222 = vpack.c.bf16 %v1190, %v1190
      %v1223 = vpack.c.bf16 %v1191, %v1191
      %v1224 = vld [vmem:[#allocation2 + $0x8] sm:$0xff]
      %v1225 = vld [vmem:[#allocation2 + $0x10] sm:$0xff]
      %v1226 = vld [vmem:[#allocation2 + $0x18] sm:$0xff]
      %v1227 = vld [vmem:[#allocation2 + $0x20] sm:$0xff]
      %v1228 = vld [vmem:[#allocation2 + $0x28] sm:$0xff]
      %v1229 = vld [vmem:[#allocation2 + $0x30] sm:$0xff]
      %v1230 = vld [vmem:[#allocation2 + $0x38] sm:$0xff]
      %v1231 = vld [vmem:[#allocation2 + $0x40] sm:$0xff]
      %v1232 = vld [vmem:[#allocation2 + $0x48] sm:$0xff]
      %v1233 = vld [vmem:[#allocation2 + $0x50] sm:$0xff]
      %v1234 = vld [vmem:[#allocation2 + $0x58] sm:$0xff]
      %v1235 = vld [vmem:[#allocation2 + $0x60] sm:$0xff]
      %v1236 = vld [vmem:[#allocation2 + $0x68] sm:$0xff]
      %v1237 = vld [vmem:[#allocation2 + $0x70] sm:$0xff]
      %v1238 = vld [vmem:[#allocation2 + $0x78] sm:$0xff]
      %v1239 = vld [vmem:[#allocation2 + $0x80] sm:$0xff]
      %v1240 = vld [vmem:[#allocation2 + $0x88] sm:$0xff]
      %v1241 = vld [vmem:[#allocation2 + $0x90] sm:$0xff]
      %v1242 = vld [vmem:[#allocation2 + $0x98] sm:$0xff]
      %v1243 = vld [vmem:[#allocation2 + $0xa0] sm:$0xff]
      %v1244 = vld [vmem:[#allocation2 + $0xa8] sm:$0xff]
      %v1245 = vld [vmem:[#allocation2 + $0xb0] sm:$0xff]
      %v1246 = vld [vmem:[#allocation2 + $0xb8] sm:$0xff]
      %v1247 = vld [vmem:[#allocation2 + $0xc0] sm:$0xff]
      %v1248 = vld [vmem:[#allocation2 + $0xc8] sm:$0xff]
      %v1249 = vld [vmem:[#allocation2 + $0xd0] sm:$0xff]
      %v1250 = vld [vmem:[#allocation2 + $0xd8] sm:$0xff]
      %v1251 = vld [vmem:[#allocation2 + $0xe0] sm:$0xff]
      %v1252 = vld [vmem:[#allocation2 + $0xe8] sm:$0xff]
      %v1253 = vld [vmem:[#allocation2 + $0xf0] sm:$0xff]
      %v1254 = vld [vmem:[#allocation2 + $0xf8] sm:$0xff]
      %v1255 = vld [vmem:[#allocation2 + $0x100] sm:$0xff]
      %v1256 = vpack.c.bf16 %v1224, %v1224
      %v1257 = vpack.c.bf16 %v1225, %v1225
      %v1258 = vpack.c.bf16 %v1226, %v1226
      %v1259 = vpack.c.bf16 %v1227, %v1227
      %v1260 = vpack.c.bf16 %v1228, %v1228
      %v1261 = vpack.c.bf16 %v1229, %v1229
      %v1262 = vpack.c.bf16 %v1230, %v1230
      %v1263 = vpack.c.bf16 %v1231, %v1231
      %v1264 = vpack.c.bf16 %v1232, %v1232
      %v1265 = vpack.c.bf16 %v1233, %v1233
      %v1266 = vpack.c.bf16 %v1234, %v1234
      %v1267 = vpack.c.bf16 %v1235, %v1235
      %v1268 = vpack.c.bf16 %v1236, %v1236
      %v1269 = vpack.c.bf16 %v1237, %v1237
      %v1270 = vpack.c.bf16 %v1238, %v1238
      %v1271 = vpack.c.bf16 %v1239, %v1239
      %v1272 = vpack.c.bf16 %v1240, %v1240
      %v1273 = vpack.c.bf16 %v1241, %v1241
      %v1274 = vpack.c.bf16 %v1242, %v1242
      %v1275 = vpack.c.bf16 %v1243, %v1243
      %v1276 = vpack.c.bf16 %v1244, %v1244
      %v1277 = vpack.c.bf16 %v1245, %v1245
      %v1278 = vpack.c.bf16 %v1246, %v1246
      %v1279 = vpack.c.bf16 %v1247, %v1247
      %v1280 = vpack.c.bf16 %v1248, %v1248
      %v1281 = vpack.c.bf16 %v1249, %v1249
      %v1282 = vpack.c.bf16 %v1250, %v1250
      %v1283 = vpack.c.bf16 %v1251, %v1251
      %v1284 = vpack.c.bf16 %v1252, %v1252
      %v1285 = vpack.c.bf16 %v1253, %v1253
      %v1286 = vpack.c.bf16 %v1254, %v1254
      %v1287 = vpack.c.bf16 %v1255, %v1255
      %v1288 = vld [vmem:[#allocation2 + $0x9] sm:$0xff]
      %v1289 = vld [vmem:[#allocation2 + $0x11] sm:$0xff]
      %v1290 = vld [vmem:[#allocation2 + $0x19] sm:$0xff]
      %v1291 = vld [vmem:[#allocation2 + $0x21] sm:$0xff]
      %v1292 = vld [vmem:[#allocation2 + $0x29] sm:$0xff]
      %v1293 = vld [vmem:[#allocation2 + $0x31] sm:$0xff]
      %v1294 = vld [vmem:[#allocation2 + $0x39] sm:$0xff]
      %v1295 = vld [vmem:[#allocation2 + $0x41] sm:$0xff]
      %v1296 = vld [vmem:[#allocation2 + $0x49] sm:$0xff]
      %v1297 = vld [vmem:[#allocation2 + $0x51] sm:$0xff]
      %v1298 = vld [vmem:[#allocation2 + $0x59] sm:$0xff]
      %v1299 = vld [vmem:[#allocation2 + $0x61] sm:$0xff]
      %v1300 = vld [vmem:[#allocation2 + $0x69] sm:$0xff]
      %v1301 = vld [vmem:[#allocation2 + $0x71] sm:$0xff]
      %v1302 = vld [vmem:[#allocation2 + $0x79] sm:$0xff]
      %v1303 = vld [vmem:[#allocation2 + $0x81] sm:$0xff]
      %v1304 = vld [vmem:[#allocation2 + $0x89] sm:$0xff]
      %v1305 = vld [vmem:[#allocation2 + $0x91] sm:$0xff]
      %v1306 = vld [vmem:[#allocation2 + $0x99] sm:$0xff]
      %v1307 = vld [vmem:[#allocation2 + $0xa1] sm:$0xff]
      %v1308 = vld [vmem:[#allocation2 + $0xa9] sm:$0xff]
      %v1309 = vld [vmem:[#allocation2 + $0xb1] sm:$0xff]
      %v1310 = vld [vmem:[#allocation2 + $0xb9] sm:$0xff]
      %v1311 = vld [vmem:[#allocation2 + $0xc1] sm:$0xff]
      %v1312 = vld [vmem:[#allocation2 + $0xc9] sm:$0xff]
      %v1313 = vld [vmem:[#allocation2 + $0xd1] sm:$0xff]
      %v1314 = vld [vmem:[#allocation2 + $0xd9] sm:$0xff]
      %v1315 = vld [vmem:[#allocation2 + $0xe1] sm:$0xff]
      %v1316 = vld [vmem:[#allocation2 + $0xe9] sm:$0xff]
      %v1317 = vld [vmem:[#allocation2 + $0xf1] sm:$0xff]
      %v1318 = vld [vmem:[#allocation2 + $0xf9] sm:$0xff]
      %v1319 = vld [vmem:[#allocation2 + $0x101] sm:$0xff]
      %v1320 = vsel %vm1096, %v1288, 0.0
      %v1321 = vsel %vm1097, %v1289, 0.0
      %v1322 = vsel %vm1098, %v1290, 0.0
      %v1323 = vsel %vm1099, %v1291, 0.0
      %v1324 = vsel %vm1100, %v1292, 0.0
      %v1325 = vsel %vm1101, %v1293, 0.0
      %v1326 = vsel %vm1102, %v1294, 0.0
      %v1327 = vsel %vm1103, %v1295, 0.0
      %v1328 = vsel %vm1104, %v1296, 0.0
      %v1329 = vsel %vm1105, %v1297, 0.0
      %v1330 = vsel %vm1106, %v1298, 0.0
      %v1331 = vsel %vm1107, %v1299, 0.0
      %v1332 = vsel %vm1108, %v1300, 0.0
      %v1333 = vsel %vm1109, %v1301, 0.0
      %v1334 = vsel %vm1110, %v1302, 0.0
      %v1335 = vsel %vm1111, %v1303, 0.0
      %v1336 = vsel %vm1112, %v1304, 0.0
      %v1337 = vsel %vm1113, %v1305, 0.0
      %v1338 = vsel %vm1114, %v1306, 0.0
      %v1339 = vsel %vm1115, %v1307, 0.0
      %v1340 = vsel %vm1116, %v1308, 0.0
      %v1341 = vsel %vm1117, %v1309, 0.0
      %v1342 = vsel %vm1118, %v1310, 0.0
      %v1343 = vsel %vm1119, %v1311, 0.0
      %v1344 = vsel %vm1120, %v1312, 0.0
      %v1345 = vsel %vm1121, %v1313, 0.0
      %v1346 = vsel %vm1122, %v1314, 0.0
      %v1347 = vsel %vm1123, %v1315, 0.0
      %v1348 = vsel %vm1124, %v1316, 0.0
      %v1349 = vsel %vm1125, %v1317, 0.0
      %v1350 = vsel %vm1126, %v1318, 0.0
      %v1351 = vsel %vm1127, %v1319, 0.0
      %v1352 = vpack.c.bf16 %v1320, %v1320
      %v1353 = vpack.c.bf16 %v1321, %v1321
      %v1354 = vpack.c.bf16 %v1322, %v1322
      %v1355 = vpack.c.bf16 %v1323, %v1323
      %v1356 = vpack.c.bf16 %v1324, %v1324
      %v1357 = vpack.c.bf16 %v1325, %v1325
      %v1358 = vpack.c.bf16 %v1326, %v1326
      %v1359 = vpack.c.bf16 %v1327, %v1327
      %v1360 = vpack.c.bf16 %v1328, %v1328
      %v1361 = vpack.c.bf16 %v1329, %v1329
      %v1362 = vpack.c.bf16 %v1330, %v1330
      %v1363 = vpack.c.bf16 %v1331, %v1331
      %v1364 = vpack.c.bf16 %v1332, %v1332
      %v1365 = vpack.c.bf16 %v1333, %v1333
      %v1366 = vpack.c.bf16 %v1334, %v1334
      %v1367 = vpack.c.bf16 %v1335, %v1335
      %v1368 = vpack.c.bf16 %v1336, %v1336
      %v1369 = vpack.c.bf16 %v1337, %v1337
      %v1370 = vpack.c.bf16 %v1338, %v1338
      %v1371 = vpack.c.bf16 %v1339, %v1339
      %v1372 = vpack.c.bf16 %v1340, %v1340
      %v1373 = vpack.c.bf16 %v1341, %v1341
      %v1374 = vpack.c.bf16 %v1342, %v1342
      %v1375 = vpack.c.bf16 %v1343, %v1343
      %v1376 = vpack.c.bf16 %v1344, %v1344
      %v1377 = vpack.c.bf16 %v1345, %v1345
      %v1378 = vpack.c.bf16 %v1346, %v1346
      %v1379 = vpack.c.bf16 %v1347, %v1347
      %v1380 = vpack.c.bf16 %v1348, %v1348
      %v1381 = vpack.c.bf16 %v1349, %v1349
      %v1382 = vpack.c.bf16 %v1350, %v1350
      %v1383 = vpack.c.bf16 %v1351, %v1351
      %v1384 = vld [vmem:[#allocation2 + $0x107] sm:$0xff]
      %v1385 = vld [vmem:[#allocation2 + $0x10f] sm:$0xff]
      %v1386 = vsel %vm1064, %v1130, 0.0
      %v1387 = vsel %vm1065, %v1131, 0.0
      %v1388 = vsel %vm1066, %v1132, 0.0
      %v1389 = vsel %vm1067, %v1133, 0.0
      %v1390 = vsel %vm1068, %v1134, 0.0
      %v1391 = vsel %vm1069, %v1135, 0.0
      %v1392 = vsel %vm1070, %v1136, 0.0
      %v1393 = vsel %vm1071, %v1137, 0.0
      %v1394 = vsel %vm1072, %v1138, 0.0
      %v1395 = vsel %vm1073, %v1139, 0.0
      %v1396 = vsel %vm1074, %v1140, 0.0
      %v1397 = vsel %vm1075, %v1141, 0.0
      %v1398 = vsel %vm1076, %v1142, 0.0
      %v1399 = vsel %vm1077, %v1143, 0.0
      %v1400 = vsel %vm1078, %v1144, 0.0
      %v1401 = vsel %vm1079, %v1145, 0.0
      %v1402 = vsel %vm1080, %v1146, 0.0
      %v1403 = vsel %vm1081, %v1147, 0.0
      %v1404 = vsel %vm1082, %v1148, 0.0
      %v1405 = vsel %vm1083, %v1149, 0.0
      %v1406 = vsel %vm1084, %v1150, 0.0
      %v1407 = vsel %vm1085, %v1151, 0.0
      %v1408 = vsel %vm1086, %v1152, 0.0
      %v1409 = vsel %vm1087, %v1153, 0.0
      %v1410 = vsel %vm1088, %v1154, 0.0
      %v1411 = vsel %vm1089, %v1155, 0.0
      %v1412 = vsel %vm1090, %v1156, 0.0
      %v1413 = vsel %vm1091, %v1157, 0.0
      %v1414 = vsel %vm1092, %v1158, 0.0
      %v1415 = vsel %vm1093, %v1159, 0.0
      %v1416 = vsel %vm1094, %v1384, 0.0
      %v1417 = vsel %vm1095, %v1385, 0.0
      %v1418 = vpack.c.bf16 %v1386, %v1386
      %v1419 = vpack.c.bf16 %v1387, %v1387
      %v1420 = vpack.c.bf16 %v1388, %v1388
      %v1421 = vpack.c.bf16 %v1389, %v1389
      %v1422 = vpack.c.bf16 %v1390, %v1390
      %v1423 = vpack.c.bf16 %v1391, %v1391
      %v1424 = vpack.c.bf16 %v1392, %v1392
      %v1425 = vpack.c.bf16 %v1393, %v1393
      %v1426 = vpack.c.bf16 %v1394, %v1394
      %v1427 = vpack.c.bf16 %v1395, %v1395
      %v1428 = vpack.c.bf16 %v1396, %v1396
      %v1429 = vpack.c.bf16 %v1397, %v1397
      %v1430 = vpack.c.bf16 %v1398, %v1398
      %v1431 = vpack.c.bf16 %v1399, %v1399
      %v1432 = vpack.c.bf16 %v1400, %v1400
      %v1433 = vpack.c.bf16 %v1401, %v1401
      %v1434 = vpack.c.bf16 %v1402, %v1402
      %v1435 = vpack.c.bf16 %v1403, %v1403
      %v1436 = vpack.c.bf16 %v1404, %v1404
      %v1437 = vpack.c.bf16 %v1405, %v1405
      %v1438 = vpack.c.bf16 %v1406, %v1406
      %v1439 = vpack.c.bf16 %v1407, %v1407
      %v1440 = vpack.c.bf16 %v1408, %v1408
      %v1441 = vpack.c.bf16 %v1409, %v1409
      %v1442 = vpack.c.bf16 %v1410, %v1410
      %v1443 = vpack.c.bf16 %v1411, %v1411
      %v1444 = vpack.c.bf16 %v1412, %v1412
      %v1445 = vpack.c.bf16 %v1413, %v1413
      %v1446 = vpack.c.bf16 %v1414, %v1414
      %v1447 = vpack.c.bf16 %v1415, %v1415
      %v1448 = vpack.c.bf16 %v1416, %v1416
      %v1449 = vpack.c.bf16 %v1417, %v1417
      %v1450 = vld [vmem:[#allocation2 + $0x109] sm:$0xff]
      %v1451 = vld [vmem:[#allocation2 + $0x111] sm:$0xff]
      %v1452 = vsel %vm1096, %v1290, 0.0
      %v1453 = vsel %vm1097, %v1291, 0.0
      %v1454 = vsel %vm1098, %v1292, 0.0
      %v1455 = vsel %vm1099, %v1293, 0.0
      %v1456 = vsel %vm1100, %v1294, 0.0
      %v1457 = vsel %vm1101, %v1295, 0.0
      %v1458 = vsel %vm1102, %v1296, 0.0
      %v1459 = vsel %vm1103, %v1297, 0.0
      %v1460 = vsel %vm1104, %v1298, 0.0
      %v1461 = vsel %vm1105, %v1299, 0.0
      %v1462 = vsel %vm1106, %v1300, 0.0
      %v1463 = vsel %vm1107, %v1301, 0.0
      %v1464 = vsel %vm1108, %v1302, 0.0
      %v1465 = vsel %vm1109, %v1303, 0.0
      %v1466 = vsel %vm1110, %v1304, 0.0
      %v1467 = vsel %vm1111, %v1305, 0.0
      %v1468 = vsel %vm1112, %v1306, 0.0
      %v1469 = vsel %vm1113, %v1307, 0.0
      %v1470 = vsel %vm1114, %v1308, 0.0
      %v1471 = vsel %vm1115, %v1309, 0.0
      %v1472 = vsel %vm1116, %v1310, 0.0
      %v1473 = vsel %vm1117, %v1311, 0.0
      %v1474 = vsel %vm1118, %v1312, 0.0
      %v1475 = vsel %vm1119, %v1313, 0.0
      %v1476 = vsel %vm1120, %v1314, 0.0
      %v1477 = vsel %vm1121, %v1315, 0.0
      %v1478 = vsel %vm1122, %v1316, 0.0
      %v1479 = vsel %vm1123, %v1317, 0.0
      %v1480 = vsel %vm1124, %v1318, 0.0
      %v1481 = vsel %vm1125, %v1319, 0.0
      %v1482 = vsel %vm1126, %v1450, 0.0
      %v1483 = vsel %vm1127, %v1451, 0.0
      %v1484 = vpack.c.bf16 %v1452, %v1452
      %v1485 = vpack.c.bf16 %v1453, %v1453
      %v1486 = vpack.c.bf16 %v1454, %v1454
      %v1487 = vpack.c.bf16 %v1455, %v1455
      %v1488 = vpack.c.bf16 %v1456, %v1456
      %v1489 = vpack.c.bf16 %v1457, %v1457
      %v1490 = vpack.c.bf16 %v1458, %v1458
      %v1491 = vpack.c.bf16 %v1459, %v1459
      %v1492 = vpack.c.bf16 %v1460, %v1460
      %v1493 = vpack.c.bf16 %v1461, %v1461
      %v1494 = vpack.c.bf16 %v1462, %v1462
      %v1495 = vpack.c.bf16 %v1463, %v1463
      %v1496 = vpack.c.bf16 %v1464, %v1464
      %v1497 = vpack.c.bf16 %v1465, %v1465
      %v1498 = vpack.c.bf16 %v1466, %v1466
      %v1499 = vpack.c.bf16 %v1467, %v1467
      %v1500 = vpack.c.bf16 %v1468, %v1468
      %v1501 = vpack.c.bf16 %v1469, %v1469
      %v1502 = vpack.c.bf16 %v1470, %v1470
      %v1503 = vpack.c.bf16 %v1471, %v1471
      %v1504 = vpack.c.bf16 %v1472, %v1472
      %v1505 = vpack.c.bf16 %v1473, %v1473
      %v1506 = vpack.c.bf16 %v1474, %v1474
      %v1507 = vpack.c.bf16 %v1475, %v1475
      %v1508 = vpack.c.bf16 %v1476, %v1476
      %v1509 = vpack.c.bf16 %v1477, %v1477
      %v1510 = vpack.c.bf16 %v1478, %v1478
      %v1511 = vpack.c.bf16 %v1479, %v1479
      %v1512 = vpack.c.bf16 %v1480, %v1480
      %v1513 = vpack.c.bf16 %v1481, %v1481
      %v1514 = vpack.c.bf16 %v1482, %v1482
      %v1515 = vpack.c.bf16 %v1483, %v1483
      %v1516 = vld [vmem:[#allocation2 + $0x117] sm:$0xff]
      %v1517 = vld [vmem:[#allocation2 + $0x11f] sm:$0xff]
      %v1518 = vsel %vm1064, %v1132, 0.0
      %v1519 = vsel %vm1065, %v1133, 0.0
      %v1520 = vsel %vm1066, %v1134, 0.0
      %v1521 = vsel %vm1067, %v1135, 0.0
      %v1522 = vsel %vm1068, %v1136, 0.0
      %v1523 = vsel %vm1069, %v1137, 0.0
      %v1524 = vsel %vm1070, %v1138, 0.0
      %v1525 = vsel %vm1071, %v1139, 0.0
      %v1526 = vsel %vm1072, %v1140, 0.0
      %v1527 = vsel %vm1073, %v1141, 0.0
      %v1528 = vsel %vm1074, %v1142, 0.0
      %v1529 = vsel %vm1075, %v1143, 0.0
      %v1530 = vsel %vm1076, %v1144, 0.0
      %v1531 = vsel %vm1077, %v1145, 0.0
      %v1532 = vsel %vm1078, %v1146, 0.0
      %v1533 = vsel %vm1079, %v1147, 0.0
      %v1534 = vsel %vm1080, %v1148, 0.0
      %v1535 = vsel %vm1081, %v1149, 0.0
      %v1536 = vsel %vm1082, %v1150, 0.0
      %v1537 = vsel %vm1083, %v1151, 0.0
      %v1538 = vsel %vm1084, %v1152, 0.0
      %v1539 = vsel %vm1085, %v1153, 0.0
      %v1540 = vsel %vm1086, %v1154, 0.0
      %v1541 = vsel %vm1087, %v1155, 0.0
      %v1542 = vsel %vm1088, %v1156, 0.0
      %v1543 = vsel %vm1089, %v1157, 0.0
      %v1544 = vsel %vm1090, %v1158, 0.0
      %v1545 = vsel %vm1091, %v1159, 0.0
      %v1546 = vsel %vm1092, %v1384, 0.0
      %v1547 = vsel %vm1093, %v1385, 0.0
      %v1548 = vsel %vm1094, %v1516, 0.0
      %v1549 = vsel %vm1095, %v1517, 0.0
      %v1550 = vpack.c.bf16 %v1518, %v1518
      %v1551 = vpack.c.bf16 %v1519, %v1519
      %v1552 = vpack.c.bf16 %v1520, %v1520
      %v1553 = vpack.c.bf16 %v1521, %v1521
      %v1554 = vpack.c.bf16 %v1522, %v1522
      %v1555 = vpack.c.bf16 %v1523, %v1523
      %v1556 = vpack.c.bf16 %v1524, %v1524
      %v1557 = vpack.c.bf16 %v1525, %v1525
      %v1558 = vpack.c.bf16 %v1526, %v1526
      %v1559 = vpack.c.bf16 %v1527, %v1527
      %v1560 = vpack.c.bf16 %v1528, %v1528
      %v1561 = vpack.c.bf16 %v1529, %v1529
      %v1562 = vpack.c.bf16 %v1530, %v1530
      %v1563 = vpack.c.bf16 %v1531, %v1531
      %v1564 = vpack.c.bf16 %v1532, %v1532
      %v1565 = vpack.c.bf16 %v1533, %v1533
      %v1566 = vpack.c.bf16 %v1534, %v1534
      %v1567 = vpack.c.bf16 %v1535, %v1535
      %v1568 = vpack.c.bf16 %v1536, %v1536
      %v1569 = vpack.c.bf16 %v1537, %v1537
      %v1570 = vpack.c.bf16 %v1538, %v1538
      %v1571 = vpack.c.bf16 %v1539, %v1539
      %v1572 = vpack.c.bf16 %v1540, %v1540
      %v1573 = vpack.c.bf16 %v1541, %v1541
      %v1574 = vpack.c.bf16 %v1542, %v1542
      %v1575 = vpack.c.bf16 %v1543, %v1543
      %v1576 = vpack.c.bf16 %v1544, %v1544
      %v1577 = vpack.c.bf16 %v1545, %v1545
      %v1578 = vpack.c.bf16 %v1546, %v1546
      %v1579 = vpack.c.bf16 %v1547, %v1547
      %v1580 = vpack.c.bf16 %v1548, %v1548
      %v1581 = vpack.c.bf16 %v1549, %v1549
      %v1582 = vld [vmem:[#allocation2 + $0x108] sm:$0xff]
      %v1583 = vld [vmem:[#allocation2 + $0x110] sm:$0xff]
      %v1584 = vld [vmem:[#allocation2 + $0x118] sm:$0xff]
      %v1585 = vld [vmem:[#allocation2 + $0x120] sm:$0xff]
      %v1586 = vpack.c.bf16 %v1582, %v1582
      %v1587 = vpack.c.bf16 %v1583, %v1583
      %v1588 = vpack.c.bf16 %v1584, %v1584
      %v1589 = vpack.c.bf16 %v1585, %v1585
      %v1590 = vld [vmem:[#allocation2 + $0x119] sm:$0xff]
      %v1591 = vld [vmem:[#allocation2 + $0x121] sm:$0xff]
      %v1592 = vsel %vm1096, %v1292, 0.0
      %v1593 = vsel %vm1097, %v1293, 0.0
      %v1594 = vsel %vm1098, %v1294, 0.0
      %v1595 = vsel %vm1099, %v1295, 0.0
      %v1596 = vsel %vm1100, %v1296, 0.0
      %v1597 = vsel %vm1101, %v1297, 0.0
      %v1598 = vsel %vm1102, %v1298, 0.0
      %v1599 = vsel %vm1103, %v1299, 0.0
      %v1600 = vsel %vm1104, %v1300, 0.0
      %v1601 = vsel %vm1105, %v1301, 0.0
      %v1602 = vsel %vm1106, %v1302, 0.0
      %v1603 = vsel %vm1107, %v1303, 0.0
      %v1604 = vsel %vm1108, %v1304, 0.0
      %v1605 = vsel %vm1109, %v1305, 0.0
      %v1606 = vsel %vm1110, %v1306, 0.0
      %v1607 = vsel %vm1111, %v1307, 0.0
      %v1608 = vsel %vm1112, %v1308, 0.0
      %v1609 = vsel %vm1113, %v1309, 0.0
      %v1610 = vsel %vm1114, %v1310, 0.0
      %v1611 = vsel %vm1115, %v1311, 0.0
      %v1612 = vsel %vm1116, %v1312, 0.0
      %v1613 = vsel %vm1117, %v1313, 0.0
      %v1614 = vsel %vm1118, %v1314, 0.0
      %v1615 = vsel %vm1119, %v1315, 0.0
      %v1616 = vsel %vm1120, %v1316, 0.0
      %v1617 = vsel %vm1121, %v1317, 0.0
      %v1618 = vsel %vm1122, %v1318, 0.0
      %v1619 = vsel %vm1123, %v1319, 0.0
      %v1620 = vsel %vm1124, %v1450, 0.0
      %v1621 = vsel %vm1125, %v1451, 0.0
      %v1622 = vsel %vm1126, %v1590, 0.0
      %v1623 = vsel %vm1127, %v1591, 0.0
      %v1624 = vpack.c.bf16 %v1592, %v1592
      %v1625 = vpack.c.bf16 %v1593, %v1593
      %v1626 = vpack.c.bf16 %v1594, %v1594
      %v1627 = vpack.c.bf16 %v1595, %v1595
      %v1628 = vpack.c.bf16 %v1596, %v1596
      %v1629 = vpack.c.bf16 %v1597, %v1597
      %v1630 = vpack.c.bf16 %v1598, %v1598
      %v1631 = vpack.c.bf16 %v1599, %v1599
      %v1632 = vpack.c.bf16 %v1600, %v1600
      %v1633 = vpack.c.bf16 %v1601, %v1601
      %v1634 = vpack.c.bf16 %v1602, %v1602
      %v1635 = vpack.c.bf16 %v1603, %v1603
      %v1636 = vpack.c.bf16 %v1604, %v1604
      %v1637 = vpack.c.bf16 %v1605, %v1605
      %v1638 = vpack.c.bf16 %v1606, %v1606
      %v1639 = vpack.c.bf16 %v1607, %v1607
      %v1640 = vpack.c.bf16 %v1608, %v1608
      %v1641 = vpack.c.bf16 %v1609, %v1609
      %v1642 = vpack.c.bf16 %v1610, %v1610
      %v1643 = vpack.c.bf16 %v1611, %v1611
      %v1644 = vpack.c.bf16 %v1612, %v1612
      %v1645 = vpack.c.bf16 %v1613, %v1613
      %v1646 = vpack.c.bf16 %v1614, %v1614
      %v1647 = vpack.c.bf16 %v1615, %v1615
      %v1648 = vpack.c.bf16 %v1616, %v1616
      %v1649 = vpack.c.bf16 %v1617, %v1617
      %v1650 = vpack.c.bf16 %v1618, %v1618
      %v1651 = vpack.c.bf16 %v1619, %v1619
      %v1652 = vpack.c.bf16 %v1620, %v1620
      %v1653 = vpack.c.bf16 %v1621, %v1621
      %v1654 = vpack.c.bf16 %v1622, %v1622
      %v1655 = vpack.c.bf16 %v1623, %v1623
      %v1688 = vunpack.c.l.b16 %v1192
      %v1689 = vunpack.c.l.b16 %v1193
      %v1690 = vunpack.c.l.b16 %v1194
      %v1691 = vunpack.c.l.b16 %v1195
      %v1692 = vunpack.c.l.b16 %v1196
      %v1693 = vunpack.c.l.b16 %v1197
      %v1694 = vunpack.c.l.b16 %v1198
      %v1695 = vunpack.c.l.b16 %v1199
      %v1696 = vunpack.c.l.b16 %v1200
      %v1697 = vunpack.c.l.b16 %v1201
      %v1698 = vunpack.c.l.b16 %v1202
      %v1699 = vunpack.c.l.b16 %v1203
      %v1700 = vunpack.c.l.b16 %v1204
      %v1701 = vunpack.c.l.b16 %v1205
      %v1702 = vunpack.c.l.b16 %v1206
      %v1703 = vunpack.c.l.b16 %v1207
      %v1704 = vunpack.c.l.b16 %v1208
      %v1705 = vunpack.c.l.b16 %v1209
      %v1706 = vunpack.c.l.b16 %v1210
      %v1707 = vunpack.c.l.b16 %v1211
      %v1708 = vunpack.c.l.b16 %v1212
      %v1709 = vunpack.c.l.b16 %v1213
      %v1710 = vunpack.c.l.b16 %v1214
      %v1711 = vunpack.c.l.b16 %v1215
      %v1712 = vunpack.c.l.b16 %v1216
      %v1713 = vunpack.c.l.b16 %v1217
      %v1714 = vunpack.c.l.b16 %v1218
      %v1715 = vunpack.c.l.b16 %v1219
      %v1716 = vunpack.c.l.b16 %v1220
      %v1717 = vunpack.c.l.b16 %v1221
      %v1718 = vunpack.c.l.b16 %v1222
      %v1719 = vunpack.c.l.b16 %v1223
      %v1720 = vpack.c.b16 %v1689, %v1688
      %v1721 = vpack.c.b16 %v1691, %v1690
      %v1722 = vpack.c.b16 %v1693, %v1692
      %v1723 = vpack.c.b16 %v1695, %v1694
      %v1724 = vpack.c.b16 %v1697, %v1696
      %v1725 = vpack.c.b16 %v1699, %v1698
      %v1726 = vpack.c.b16 %v1701, %v1700
      %v1727 = vpack.c.b16 %v1703, %v1702
      %v1728 = vpack.c.b16 %v1705, %v1704
      %v1729 = vpack.c.b16 %v1707, %v1706
      %v1730 = vpack.c.b16 %v1709, %v1708
      %v1731 = vpack.c.b16 %v1711, %v1710
      %v1732 = vpack.c.b16 %v1713, %v1712
      %v1733 = vpack.c.b16 %v1715, %v1714
      %v1734 = vpack.c.b16 %v1717, %v1716
      %v1735 = vpack.c.b16 %v1719, %v1718
      %v1784 = vunpack.c.l.b16 %v1256
      %v1785 = vunpack.c.l.b16 %v1257
      %v1786 = vunpack.c.l.b16 %v1258
      %v1787 = vunpack.c.l.b16 %v1259
      %v1788 = vunpack.c.l.b16 %v1260
      %v1789 = vunpack.c.l.b16 %v1261
      %v1790 = vunpack.c.l.b16 %v1262
      %v1791 = vunpack.c.l.b16 %v1263
      %v1792 = vunpack.c.l.b16 %v1264
      %v1793 = vunpack.c.l.b16 %v1265
      %v1794 = vunpack.c.l.b16 %v1266
      %v1795 = vunpack.c.l.b16 %v1267
      %v1796 = vunpack.c.l.b16 %v1268
      %v1797 = vunpack.c.l.b16 %v1269
      %v1798 = vunpack.c.l.b16 %v1270
      %v1799 = vunpack.c.l.b16 %v1271
      %v1800 = vunpack.c.l.b16 %v1272
      %v1801 = vunpack.c.l.b16 %v1273
      %v1802 = vunpack.c.l.b16 %v1274
      %v1803 = vunpack.c.l.b16 %v1275
      %v1804 = vunpack.c.l.b16 %v1276
      %v1805 = vunpack.c.l.b16 %v1277
      %v1806 = vunpack.c.l.b16 %v1278
      %v1807 = vunpack.c.l.b16 %v1279
      %v1808 = vunpack.c.l.b16 %v1280
      %v1809 = vunpack.c.l.b16 %v1281
      %v1810 = vunpack.c.l.b16 %v1282
      %v1811 = vunpack.c.l.b16 %v1283
      %v1812 = vunpack.c.l.b16 %v1284
      %v1813 = vunpack.c.l.b16 %v1285
      %v1814 = vunpack.c.l.b16 %v1286
      %v1815 = vunpack.c.l.b16 %v1287
      %v1816 = vpack.c.b16 %v1785, %v1784
      %v1817 = vpack.c.b16 %v1787, %v1786
      %v1818 = vpack.c.b16 %v1789, %v1788
      %v1819 = vpack.c.b16 %v1791, %v1790
      %v1820 = vpack.c.b16 %v1793, %v1792
      %v1821 = vpack.c.b16 %v1795, %v1794
      %v1822 = vpack.c.b16 %v1797, %v1796
      %v1823 = vpack.c.b16 %v1799, %v1798
      %v1824 = vpack.c.b16 %v1801, %v1800
      %v1825 = vpack.c.b16 %v1803, %v1802
      %v1826 = vpack.c.b16 %v1805, %v1804
      %v1827 = vpack.c.b16 %v1807, %v1806
      %v1828 = vpack.c.b16 %v1809, %v1808
      %v1829 = vpack.c.b16 %v1811, %v1810
      %v1830 = vpack.c.b16 %v1813, %v1812
      %v1831 = vpack.c.b16 %v1815, %v1814
      %v1880 = vunpack.c.l.b16 %v1352
      %v1881 = vunpack.c.l.b16 %v1353
      %v1882 = vunpack.c.l.b16 %v1354
      %v1883 = vunpack.c.l.b16 %v1355
      %v1884 = vunpack.c.l.b16 %v1356
      %v1885 = vunpack.c.l.b16 %v1357
      %v1886 = vunpack.c.l.b16 %v1358
      %v1887 = vunpack.c.l.b16 %v1359
      %v1888 = vunpack.c.l.b16 %v1360
      %v1889 = vunpack.c.l.b16 %v1361
      %v1890 = vunpack.c.l.b16 %v1362
      %v1891 = vunpack.c.l.b16 %v1363
      %v1892 = vunpack.c.l.b16 %v1364
      %v1893 = vunpack.c.l.b16 %v1365
      %v1894 = vunpack.c.l.b16 %v1366
      %v1895 = vunpack.c.l.b16 %v1367
      %v1896 = vunpack.c.l.b16 %v1368
      %v1897 = vunpack.c.l.b16 %v1369
      %v1898 = vunpack.c.l.b16 %v1370
      %v1899 = vunpack.c.l.b16 %v1371
      %v1900 = vunpack.c.l.b16 %v1372
      %v1901 = vunpack.c.l.b16 %v1373
      %v1902 = vunpack.c.l.b16 %v1374
      %v1903 = vunpack.c.l.b16 %v1375
      %v1904 = vunpack.c.l.b16 %v1376
      %v1905 = vunpack.c.l.b16 %v1377
      %v1906 = vunpack.c.l.b16 %v1378
      %v1907 = vunpack.c.l.b16 %v1379
      %v1908 = vunpack.c.l.b16 %v1380
      %v1909 = vunpack.c.l.b16 %v1381
      %v1910 = vunpack.c.l.b16 %v1382
      %v1911 = vunpack.c.l.b16 %v1383
      %v1912 = vpack.c.b16 %v1881, %v1880
      %v1913 = vpack.c.b16 %v1883, %v1882
      %v1914 = vpack.c.b16 %v1885, %v1884
      %v1915 = vpack.c.b16 %v1887, %v1886
      %v1916 = vpack.c.b16 %v1889, %v1888
      %v1917 = vpack.c.b16 %v1891, %v1890
      %v1918 = vpack.c.b16 %v1893, %v1892
      %v1919 = vpack.c.b16 %v1895, %v1894
      %v1920 = vpack.c.b16 %v1897, %v1896
      %v1921 = vpack.c.b16 %v1899, %v1898
      %v1922 = vpack.c.b16 %v1901, %v1900
      %v1923 = vpack.c.b16 %v1903, %v1902
      %v1924 = vpack.c.b16 %v1905, %v1904
      %v1925 = vpack.c.b16 %v1907, %v1906
      %v1926 = vpack.c.b16 %v1909, %v1908
      %v1927 = vpack.c.b16 %v1911, %v1910
      %v1976 = vunpack.c.l.b16 %v1418
      %v1977 = vunpack.c.l.b16 %v1419
      %v1978 = vunpack.c.l.b16 %v1420
      %v1979 = vunpack.c.l.b16 %v1421
      %v1980 = vunpack.c.l.b16 %v1422
      %v1981 = vunpack.c.l.b16 %v1423
      %v1982 = vunpack.c.l.b16 %v1424
      %v1983 = vunpack.c.l.b16 %v1425
      %v1984 = vunpack.c.l.b16 %v1426
      %v1985 = vunpack.c.l.b16 %v1427
      %v1986 = vunpack.c.l.b16 %v1428
      %v1987 = vunpack.c.l.b16 %v1429
      %v1988 = vunpack.c.l.b16 %v1430
      %v1989 = vunpack.c.l.b16 %v1431
      %v1990 = vunpack.c.l.b16 %v1432
      %v1991 = vunpack.c.l.b16 %v1433
      %v1992 = vunpack.c.l.b16 %v1434
      %v1993 = vunpack.c.l.b16 %v1435
      %v1994 = vunpack.c.l.b16 %v1436
      %v1995 = vunpack.c.l.b16 %v1437
      %v1996 = vunpack.c.l.b16 %v1438
      %v1997 = vunpack.c.l.b16 %v1439
      %v1998 = vunpack.c.l.b16 %v1440
      %v1999 = vunpack.c.l.b16 %v1441
      %v2000 = vunpack.c.l.b16 %v1442
      %v2001 = vunpack.c.l.b16 %v1443
      %v2002 = vunpack.c.l.b16 %v1444
      %v2003 = vunpack.c.l.b16 %v1445
      %v2004 = vunpack.c.l.b16 %v1446
      %v2005 = vunpack.c.l.b16 %v1447
      %v2006 = vunpack.c.l.b16 %v1448
      %v2007 = vunpack.c.l.b16 %v1449
      %v2008 = vpack.c.b16 %v1977, %v1976
      %v2009 = vpack.c.b16 %v1979, %v1978
      %v2010 = vpack.c.b16 %v1981, %v1980
      %v2011 = vpack.c.b16 %v1983, %v1982
      %v2012 = vpack.c.b16 %v1985, %v1984
      %v2013 = vpack.c.b16 %v1987, %v1986
      %v2014 = vpack.c.b16 %v1989, %v1988
      %v2015 = vpack.c.b16 %v1991, %v1990
      %v2016 = vpack.c.b16 %v1993, %v1992
      %v2017 = vpack.c.b16 %v1995, %v1994
      %v2018 = vpack.c.b16 %v1997, %v1996
      %v2019 = vpack.c.b16 %v1999, %v1998
      %v2020 = vpack.c.b16 %v2001, %v2000
      %v2021 = vpack.c.b16 %v2003, %v2002
      %v2022 = vpack.c.b16 %v2005, %v2004
      %v2023 = vpack.c.b16 %v2007, %v2006
      %v2072 = vunpack.c.l.b16 %v577
      %v2073 = vunpack.c.l.b16 %v578
      %v2074 = vunpack.c.l.b16 %v579
      %v2075 = vunpack.c.l.b16 %v580
      %v2076 = vunpack.c.l.b16 %v581
      %v2077 = vunpack.c.l.b16 %v582
      %v2078 = vunpack.c.l.b16 %v583
      %v2079 = vunpack.c.l.b16 %v584
      %v2080 = vunpack.c.l.b16 %v585
      %v2081 = vunpack.c.l.b16 %v586
      %v2082 = vunpack.c.l.b16 %v587
      %v2083 = vunpack.c.l.b16 %v588
      %v2084 = vunpack.c.l.b16 %v589
      %v2085 = vunpack.c.l.b16 %v590
      %v2086 = vunpack.c.l.b16 %v591
      %v2087 = vunpack.c.l.b16 %v592
      %v2088 = vunpack.c.l.b16 %v593
      %v2089 = vunpack.c.l.b16 %v594
      %v2090 = vunpack.c.l.b16 %v595
      %v2091 = vunpack.c.l.b16 %v596
      %v2092 = vunpack.c.l.b16 %v597
      %v2093 = vunpack.c.l.b16 %v598
      %v2094 = vunpack.c.l.b16 %v599
      %v2095 = vunpack.c.l.b16 %v600
      %v2096 = vunpack.c.l.b16 %v601
      %v2097 = vunpack.c.l.b16 %v602
      %v2098 = vunpack.c.l.b16 %v603
      %v2099 = vunpack.c.l.b16 %v604
      %v2100 = vunpack.c.l.b16 %v605
      %v2101 = vunpack.c.l.b16 %v606
      %v2102 = vunpack.c.l.b16 %v607
      %v2103 = vunpack.c.l.b16 %v608
      %v2104 = vpack.c.b16 %v2073, %v2072
      %v2105 = vpack.c.b16 %v2075, %v2074
      %v2106 = vpack.c.b16 %v2077, %v2076
      %v2107 = vpack.c.b16 %v2079, %v2078
      %v2108 = vpack.c.b16 %v2081, %v2080
      %v2109 = vpack.c.b16 %v2083, %v2082
      %v2110 = vpack.c.b16 %v2085, %v2084
      %v2111 = vpack.c.b16 %v2087, %v2086
      %v2112 = vpack.c.b16 %v2089, %v2088
      %v2113 = vpack.c.b16 %v2091, %v2090
      %v2114 = vpack.c.b16 %v2093, %v2092
      %v2115 = vpack.c.b16 %v2095, %v2094
      %v2116 = vpack.c.b16 %v2097, %v2096
      %v2117 = vpack.c.b16 %v2099, %v2098
      %v2118 = vpack.c.b16 %v2101, %v2100
      %v2119 = vpack.c.b16 %v2103, %v2102
      %v2168 = vunpack.c.l.b16 %v1484
      %v2169 = vunpack.c.l.b16 %v1485
      %v2170 = vunpack.c.l.b16 %v1486
      %v2171 = vunpack.c.l.b16 %v1487
      %v2172 = vunpack.c.l.b16 %v1488
      %v2173 = vunpack.c.l.b16 %v1489
      %v2174 = vunpack.c.l.b16 %v1490
      %v2175 = vunpack.c.l.b16 %v1491
      %v2176 = vunpack.c.l.b16 %v1492
      %v2177 = vunpack.c.l.b16 %v1493
      %v2178 = vunpack.c.l.b16 %v1494
      %v2179 = vunpack.c.l.b16 %v1495
      %v2180 = vunpack.c.l.b16 %v1496
      %v2181 = vunpack.c.l.b16 %v1497
      %v2182 = vunpack.c.l.b16 %v1498
      %v2183 = vunpack.c.l.b16 %v1499
      %v2184 = vunpack.c.l.b16 %v1500
      %v2185 = vunpack.c.l.b16 %v1501
      %v2186 = vunpack.c.l.b16 %v1502
      %v2187 = vunpack.c.l.b16 %v1503
      %v2188 = vunpack.c.l.b16 %v1504
      %v2189 = vunpack.c.l.b16 %v1505
      %v2190 = vunpack.c.l.b16 %v1506
      %v2191 = vunpack.c.l.b16 %v1507
      %v2192 = vunpack.c.l.b16 %v1508
      %v2193 = vunpack.c.l.b16 %v1509
      %v2194 = vunpack.c.l.b16 %v1510
      %v2195 = vunpack.c.l.b16 %v1511
      %v2196 = vunpack.c.l.b16 %v1512
      %v2197 = vunpack.c.l.b16 %v1513
      %v2198 = vunpack.c.l.b16 %v1514
      %v2199 = vunpack.c.l.b16 %v1515
      %v2200 = vpack.c.b16 %v2169, %v2168
      %v2201 = vpack.c.b16 %v2171, %v2170
      %v2202 = vpack.c.b16 %v2173, %v2172
      %v2203 = vpack.c.b16 %v2175, %v2174
      %v2204 = vpack.c.b16 %v2177, %v2176
      %v2205 = vpack.c.b16 %v2179, %v2178
      %v2206 = vpack.c.b16 %v2181, %v2180
      %v2207 = vpack.c.b16 %v2183, %v2182
      %v2208 = vpack.c.b16 %v2185, %v2184
      %v2209 = vpack.c.b16 %v2187, %v2186
      %v2210 = vpack.c.b16 %v2189, %v2188
      %v2211 = vpack.c.b16 %v2191, %v2190
      %v2212 = vpack.c.b16 %v2193, %v2192
      %v2213 = vpack.c.b16 %v2195, %v2194
      %v2214 = vpack.c.b16 %v2197, %v2196
      %v2215 = vpack.c.b16 %v2199, %v2198
      %v2264 = vunpack.c.l.b16 %v1550
      %v2265 = vunpack.c.l.b16 %v1551
      %v2266 = vunpack.c.l.b16 %v1552
      %v2267 = vunpack.c.l.b16 %v1553
      %v2268 = vunpack.c.l.b16 %v1554
      %v2269 = vunpack.c.l.b16 %v1555
      %v2270 = vunpack.c.l.b16 %v1556
      %v2271 = vunpack.c.l.b16 %v1557
      %v2272 = vunpack.c.l.b16 %v1558
      %v2273 = vunpack.c.l.b16 %v1559
      %v2274 = vunpack.c.l.b16 %v1560
      %v2275 = vunpack.c.l.b16 %v1561
      %v2276 = vunpack.c.l.b16 %v1562
      %v2277 = vunpack.c.l.b16 %v1563
      %v2278 = vunpack.c.l.b16 %v1564
      %v2279 = vunpack.c.l.b16 %v1565
      %v2280 = vunpack.c.l.b16 %v1566
      %v2281 = vunpack.c.l.b16 %v1567
      %v2282 = vunpack.c.l.b16 %v1568
      %v2283 = vunpack.c.l.b16 %v1569
      %v2284 = vunpack.c.l.b16 %v1570
      %v2285 = vunpack.c.l.b16 %v1571
      %v2286 = vunpack.c.l.b16 %v1572
      %v2287 = vunpack.c.l.b16 %v1573
      %v2288 = vunpack.c.l.b16 %v1574
      %v2289 = vunpack.c.l.b16 %v1575
      %v2290 = vunpack.c.l.b16 %v1576
      %v2291 = vunpack.c.l.b16 %v1577
      %v2292 = vunpack.c.l.b16 %v1578
      %v2293 = vunpack.c.l.b16 %v1579
      %v2294 = vunpack.c.l.b16 %v1580
      %v2295 = vunpack.c.l.b16 %v1581
      %v2296 = vpack.c.b16 %v2265, %v2264
      %v2297 = vpack.c.b16 %v2267, %v2266
      %v2298 = vpack.c.b16 %v2269, %v2268
      %v2299 = vpack.c.b16 %v2271, %v2270
      %v2300 = vpack.c.b16 %v2273, %v2272
      %v2301 = vpack.c.b16 %v2275, %v2274
      %v2302 = vpack.c.b16 %v2277, %v2276
      %v2303 = vpack.c.b16 %v2279, %v2278
      %v2304 = vpack.c.b16 %v2281, %v2280
      %v2305 = vpack.c.b16 %v2283, %v2282
      %v2306 = vpack.c.b16 %v2285, %v2284
      %v2307 = vpack.c.b16 %v2287, %v2286
      %v2308 = vpack.c.b16 %v2289, %v2288
      %v2309 = vpack.c.b16 %v2291, %v2290
      %v2310 = vpack.c.b16 %v2293, %v2292
      %v2311 = vpack.c.b16 %v2295, %v2294
      %v2332 = vunpack.c.l.b16 %v1586
      %v2333 = vunpack.c.l.b16 %v1587
      %v2334 = vunpack.c.l.b16 %v1588
      %v2335 = vunpack.c.l.b16 %v1589
      %v2336 = vpack.c.b16 %v2333, %v2332
      %v2337 = vpack.c.b16 %v2335, %v2334
      %v2372 = vunpack.c.l.b16 %v1624
      %v2373 = vunpack.c.l.b16 %v1625
      %v2374 = vunpack.c.l.b16 %v1626
      %v2375 = vunpack.c.l.b16 %v1627
      %v2376 = vunpack.c.l.b16 %v1628
      %v2377 = vunpack.c.l.b16 %v1629
      %v2378 = vunpack.c.l.b16 %v1630
      %v2379 = vunpack.c.l.b16 %v1631
      %v2380 = vunpack.c.l.b16 %v1632
      %v2381 = vunpack.c.l.b16 %v1633
      %v2382 = vunpack.c.l.b16 %v1634
      %v2383 = vunpack.c.l.b16 %v1635
      %v2384 = vunpack.c.l.b16 %v1636
      %v2385 = vunpack.c.l.b16 %v1637
      %v2386 = vunpack.c.l.b16 %v1638
      %v2387 = vunpack.c.l.b16 %v1639
      %v2388 = vunpack.c.l.b16 %v1640
      %v2389 = vunpack.c.l.b16 %v1641
      %v2390 = vunpack.c.l.b16 %v1642
      %v2391 = vunpack.c.l.b16 %v1643
      %v2392 = vunpack.c.l.b16 %v1644
      %v2393 = vunpack.c.l.b16 %v1645
      %v2394 = vunpack.c.l.b16 %v1646
      %v2395 = vunpack.c.l.b16 %v1647
      %v2396 = vunpack.c.l.b16 %v1648
      %v2397 = vunpack.c.l.b16 %v1649
      %v2398 = vunpack.c.l.b16 %v1650
      %v2399 = vunpack.c.l.b16 %v1651
      %v2400 = vunpack.c.l.b16 %v1652
      %v2401 = vunpack.c.l.b16 %v1653
      %v2402 = vunpack.c.l.b16 %v1654
      %v2403 = vunpack.c.l.b16 %v1655
      %v2404 = vpack.c.b16 %v2373, %v2372
      %v2405 = vpack.c.b16 %v2375, %v2374
      %v2406 = vpack.c.b16 %v2377, %v2376
      %v2407 = vpack.c.b16 %v2379, %v2378
      %v2408 = vpack.c.b16 %v2381, %v2380
      %v2409 = vpack.c.b16 %v2383, %v2382
      %v2410 = vpack.c.b16 %v2385, %v2384
      %v2411 = vpack.c.b16 %v2387, %v2386
      %v2412 = vpack.c.b16 %v2389, %v2388
      %v2413 = vpack.c.b16 %v2391, %v2390
      %v2414 = vpack.c.b16 %v2393, %v2392
      %v2415 = vpack.c.b16 %v2395, %v2394
      %v2416 = vpack.c.b16 %v2397, %v2396
      %v2417 = vpack.c.b16 %v2399, %v2398
      %v2418 = vpack.c.b16 %v2401, %v2400
      %v2419 = vpack.c.b16 %v2403, %v2402
      %v2436 = vld [vmem:[%s2] sm:$0xf]
      %v2437 = vld [vmem:[%s2 + $0x4] sm:$0xf]
      %v2438 = vld [vmem:[%s2 + $0x8] sm:$0xf]
      %v2439 = vld [vmem:[%s2 + $0xc] sm:$0xf]
      %v2440 = vld [vmem:[%s2 + $0x10] sm:$0xf]
      %v2441 = vld [vmem:[%s2 + $0x14] sm:$0xf]
      %v2442 = vld [vmem:[%s2 + $0x18] sm:$0xf]
      %v2443 = vld [vmem:[%s2 + $0x1c] sm:$0xf]
      %v2444 = vld [vmem:[%s2 + $0x20] sm:$0xf]
      %v2445 = vld [vmem:[%s2 + $0x24] sm:$0xf]
      %v2446 = vld [vmem:[%s2 + $0x28] sm:$0xf]
      %v2447 = vld [vmem:[%s2 + $0x2c] sm:$0xf]
      %v2448 = vld [vmem:[%s2 + $0x30] sm:$0xf]
      %v2449 = vld [vmem:[%s2 + $0x34] sm:$0xf]
      %v2450 = vld [vmem:[%s2 + $0x38] sm:$0xf]
      %v2451 = vld [vmem:[%s2 + $0x3c] sm:$0xf]
      %v2452 = vld [vmem:[%s2 + $0x40] sm:$0xf]
      %v2453 = vld [vmem:[%s2 + $0x44] sm:$0xf]
      %v2454 = vld [vmem:[%s2 + $0x48] sm:$0xf]
      %v2455 = vld [vmem:[%s2 + $0x4c] sm:$0xf]
      %v2456 = vld [vmem:[%s2 + $0x50] sm:$0xf]
      %v2457 = vld [vmem:[%s2 + $0x54] sm:$0xf]
      %v2458 = vld [vmem:[%s2 + $0x58] sm:$0xf]
      %v2459 = vld [vmem:[%s2 + $0x5c] sm:$0xf]
      %v2460 = vld [vmem:[%s2 + $0x60] sm:$0xf]
      %v2461 = vld [vmem:[%s2 + $0x64] sm:$0xf]
      %v2462 = vld [vmem:[%s2 + $0x68] sm:$0xf]
      %v2463 = vld [vmem:[%s2 + $0x6c] sm:$0xf]
      %v2464 = vld [vmem:[%s2 + $0x70] sm:$0xf]
      %v2465 = vld [vmem:[%s2 + $0x74] sm:$0xf]
      %v2466 = vld [vmem:[%s2 + $0x78] sm:$0xf]
      %v2467 = vld [vmem:[%s2 + $0x7c] sm:$0xf]
      %v2468 = vld [vmem:[%s2 + $0x80] sm:$0xf]
      %v2469 = vld [vmem:[%s2 + $0x84] sm:$0xf]
      %v2470 = vld [vmem:[%s2 + $0x88] sm:$0xf]
      %v2471 = vld [vmem:[%s2 + $0x8c] sm:$0xf]
      %v2472 = vld [vmem:[%s2 + $0x90] sm:$0xf]
      %v2473 = vld [vmem:[%s2 + $0x94] sm:$0xf]
      %v2474 = vld [vmem:[%s2 + $0x98] sm:$0xf]
      %v2475 = vld [vmem:[%s2 + $0x9c] sm:$0xf]
      %v2476 = vld [vmem:[%s2 + $0xa0] sm:$0xf]
      %v2477 = vld [vmem:[%s2 + $0xa4] sm:$0xf]
      %v2478 = vld [vmem:[%s2 + $0xa8] sm:$0xf]
      %v2479 = vld [vmem:[%s2 + $0xac] sm:$0xf]
      %v2480 = vld [vmem:[%s2 + $0xb0] sm:$0xf]
      %v2481 = vld [vmem:[%s2 + $0xb4] sm:$0xf]
      %v2482 = vld [vmem:[%s2 + $0xb8] sm:$0xf]
      %v2483 = vld [vmem:[%s2 + $0xbc] sm:$0xf]
      %v2484 = vld [vmem:[%s2 + $0xc0] sm:$0xf]
      %v2485 = vld [vmem:[%s2 + $0xc4] sm:$0xf]
      %v2486 = vld [vmem:[%s2 + $0xc8] sm:$0xf]
      %v2487 = vld [vmem:[%s2 + $0xcc] sm:$0xf]
      %v2488 = vld [vmem:[%s2 + $0xd0] sm:$0xf]
      %v2489 = vld [vmem:[%s2 + $0xd4] sm:$0xf]
      %v2490 = vld [vmem:[%s2 + $0xd8] sm:$0xf]
      %v2491 = vld [vmem:[%s2 + $0xdc] sm:$0xf]
      %v2492 = vld [vmem:[%s2 + $0xe0] sm:$0xf]
      %v2493 = vld [vmem:[%s2 + $0xe4] sm:$0xf]
      %v2494 = vld [vmem:[%s2 + $0xe8] sm:$0xf]
      %v2495 = vld [vmem:[%s2 + $0xec] sm:$0xf]
      %v2496 = vld [vmem:[%s2 + $0xf0] sm:$0xf]
      %v2497 = vld [vmem:[%s2 + $0xf4] sm:$0xf]
      %v2498 = vld [vmem:[%s2 + $0xf8] sm:$0xf]
      %v2499 = vld [vmem:[%s2 + $0xfc] sm:$0xf]
      %v2500 = vld [vmem:[%s2 + $0x100] sm:$0xf]
      %v2501 = vld [vmem:[%s2 + $0x104] sm:$0xf]
      %v2502 = vld [vmem:[%s2 + $0x108] sm:$0xf]
      %v2503 = vld [vmem:[%s2 + $0x10c] sm:$0xf]
      %v2504 = vld [vmem:[%s2 + $0x110] sm:$0xf]
      %v2505 = vld [vmem:[%s2 + $0x114] sm:$0xf]
      %v2506 = vld [vmem:[%s2 + $0x118] sm:$0xf]
      %v2507 = vld [vmem:[%s2 + $0x11c] sm:$0xf]
      %v2508 = vld [vmem:[%s2 + $0x120] sm:$0xf]
      %v2509 = vld [vmem:[%s2 + $0x124] sm:$0xf]
      %v2510 = vld [vmem:[%s2 + $0x128] sm:$0xf]
      %v2511 = vld [vmem:[%s2 + $0x12c] sm:$0xf]
      %v2512 = vld [vmem:[%s2 + $0x130] sm:$0xf]
      %v2513 = vld [vmem:[%s2 + $0x134] sm:$0xf]
      %v2514 = vld [vmem:[%s2 + $0x138] sm:$0xf]
      %v2515 = vld [vmem:[%s2 + $0x13c] sm:$0xf]
      %v2516 = vld [vmem:[%s2 + $0x140] sm:$0xf]
      %v2517 = vld [vmem:[%s2 + $0x144] sm:$0xf]
      %v2518 = vld [vmem:[%s2 + $0x148] sm:$0xf]
      %v2519 = vld [vmem:[%s2 + $0x14c] sm:$0xf]
      %v2520 = vld [vmem:[%s2 + $0x150] sm:$0xf]
      %v2521 = vld [vmem:[%s2 + $0x154] sm:$0xf]
      %v2522 = vld [vmem:[%s2 + $0x158] sm:$0xf]
      %v2523 = vld [vmem:[%s2 + $0x15c] sm:$0xf]
      %v2524 = vld [vmem:[%s2 + $0x160] sm:$0xf]
      %v2525 = vld [vmem:[%s2 + $0x164] sm:$0xf]
      %v2526 = vld [vmem:[%s2 + $0x168] sm:$0xf]
      %v2527 = vld [vmem:[%s2 + $0x16c] sm:$0xf]
      %v2528 = vld [vmem:[%s2 + $0x170] sm:$0xf]
      %v2529 = vld [vmem:[%s2 + $0x174] sm:$0xf]
      %v2530 = vld [vmem:[%s2 + $0x178] sm:$0xf]
      %v2531 = vld [vmem:[%s2 + $0x17c] sm:$0xf]
      %v2532 = vld [vmem:[%s2 + $0x180] sm:$0xf]
      %v2533 = vld [vmem:[%s2 + $0x184] sm:$0xf]
      %v2534 = vld [vmem:[%s2 + $0x188] sm:$0xf]
      %v2535 = vld [vmem:[%s2 + $0x18c] sm:$0xf]
      %v2536 = vld [vmem:[%s2 + $0x190] sm:$0xf]
      %v2537 = vld [vmem:[%s2 + $0x194] sm:$0xf]
      %v2538 = vld [vmem:[%s2 + $0x198] sm:$0xf]
      %v2539 = vld [vmem:[%s2 + $0x19c] sm:$0xf]
      %v2540 = vld [vmem:[%s2 + $0x1a0] sm:$0xf]
      %v2541 = vld [vmem:[%s2 + $0x1a4] sm:$0xf]
      %v2542 = vld [vmem:[%s2 + $0x1a8] sm:$0xf]
      %v2543 = vld [vmem:[%s2 + $0x1ac] sm:$0xf]
      %v2544 = vld [vmem:[%s2 + $0x1b0] sm:$0xf]
      %v2545 = vld [vmem:[%s2 + $0x1b4] sm:$0xf]
      %v2546 = vld [vmem:[%s2 + $0x1b8] sm:$0xf]
      %v2547 = vld [vmem:[%s2 + $0x1bc] sm:$0xf]
      %v2548 = vld [vmem:[%s2 + $0x1c0] sm:$0xf]
      %v2549 = vld [vmem:[%s2 + $0x1c4] sm:$0xf]
      %v2550 = vld [vmem:[%s2 + $0x1c8] sm:$0xf]
      %v2551 = vld [vmem:[%s2 + $0x1cc] sm:$0xf]
      %v2552 = vld [vmem:[%s2 + $0x1d0] sm:$0xf]
      %v2553 = vld [vmem:[%s2 + $0x1d4] sm:$0xf]
      %v2554 = vld [vmem:[%s2 + $0x1d8] sm:$0xf]
      %v2555 = vld [vmem:[%s2 + $0x1dc] sm:$0xf]
      %v2556 = vld [vmem:[%s2 + $0x1e0] sm:$0xf]
      %v2557 = vld [vmem:[%s2 + $0x1e4] sm:$0xf]
      %v2558 = vld [vmem:[%s2 + $0x1e8] sm:$0xf]
      %v2559 = vld [vmem:[%s2 + $0x1ec] sm:$0xf]
      %v2560 = vld [vmem:[%s2 + $0x1f0] sm:$0xf]
      %v2561 = vld [vmem:[%s2 + $0x1f4] sm:$0xf]
      %v2562 = vld [vmem:[%s2 + $0x1f8] sm:$0xf]
      %v2563 = vld [vmem:[%s2 + $0x1fc] sm:$0xf]
      %v2564 = vld [vmem:[%s2 + $0x200] sm:$0xf]
      %v2565 = vld [vmem:[%s2 + $0x204] sm:$0xf]
      %v2566 = vld [vmem:[%s2 + $0x208] sm:$0xf]
      %v2567 = vld [vmem:[%s2 + $0x20c] sm:$0xf]
      %v2568 = vld [vmem:[%s2 + $0x210] sm:$0xf]
      %v2569 = vld [vmem:[%s2 + $0x214] sm:$0xf]
      %v2570 = vld [vmem:[%s2 + $0x218] sm:$0xf]
      %v2571 = vld [vmem:[%s2 + $0x21c] sm:$0xf]
      %v2572 = vld [vmem:[%s2 + $0x220] sm:$0xf]
      %v2573 = vld [vmem:[%s2 + $0x224] sm:$0xf]
      %v2574 = vld [vmem:[%s2 + $0x228] sm:$0xf]
      %v2575 = vld [vmem:[%s2 + $0x22c] sm:$0xf]
      %v2576 = vld [vmem:[%s2 + $0x230] sm:$0xf]
      %v2577 = vld [vmem:[%s2 + $0x234] sm:$0xf]
      %v2578 = vld [vmem:[%s2 + $0x238] sm:$0xf]
      %v2579 = vld [vmem:[%s2 + $0x23c] sm:$0xf]
      %v2580 = vld [vmem:[%s5] sm:$0x1]
      %v2582 = vperm.slane %v2580, 0
      %v2728 = vunpack.c.l.b16 %v2436
      %v2729 = vunpack.c.l.b16 %v2437
      %v2730 = vunpack.c.l.b16 %v2438
      %v2731 = vunpack.c.l.b16 %v2439
      %v2732 = vunpack.c.l.b16 %v2440
      %v2733 = vunpack.c.l.b16 %v2441
      %v2734 = vunpack.c.l.b16 %v2442
      %v2735 = vunpack.c.l.b16 %v2443
      %v2736 = vunpack.c.l.b16 %v2444
      %v2737 = vunpack.c.l.b16 %v2445
      %v2738 = vunpack.c.l.b16 %v2446
      %v2739 = vunpack.c.l.b16 %v2447
      %v2740 = vunpack.c.l.b16 %v2448
      %v2741 = vunpack.c.l.b16 %v2449
      %v2742 = vunpack.c.l.b16 %v2450
      %v2743 = vunpack.c.l.b16 %v2451
      %v2744 = vunpack.c.l.b16 %v2452
      %v2745 = vunpack.c.l.b16 %v2453
      %v2746 = vunpack.c.l.b16 %v2454
      %v2747 = vunpack.c.l.b16 %v2455
      %v2748 = vunpack.c.l.b16 %v2456
      %v2749 = vunpack.c.l.b16 %v2457
      %v2750 = vunpack.c.l.b16 %v2458
      %v2751 = vunpack.c.l.b16 %v2459
      %v2752 = vunpack.c.l.b16 %v2460
      %v2753 = vunpack.c.l.b16 %v2461
      %v2754 = vunpack.c.l.b16 %v2462
      %v2755 = vunpack.c.l.b16 %v2463
      %v2756 = vunpack.c.l.b16 %v2464
      %v2757 = vunpack.c.l.b16 %v2465
      %v2758 = vunpack.c.l.b16 %v2466
      %v2759 = vunpack.c.l.b16 %v2467
      %v2760 = vunpack.c.l.b16 %v2468
      %v2761 = vunpack.c.l.b16 %v2469
      %v2762 = vunpack.c.l.b16 %v2470
      %v2763 = vunpack.c.l.b16 %v2471
      %v2764 = vunpack.c.l.b16 %v2472
      %v2765 = vunpack.c.l.b16 %v2473
      %v2766 = vunpack.c.l.b16 %v2474
      %v2767 = vunpack.c.l.b16 %v2475
      %v2768 = vunpack.c.l.b16 %v2476
      %v2769 = vunpack.c.l.b16 %v2477
      %v2770 = vunpack.c.l.b16 %v2478
      %v2771 = vunpack.c.l.b16 %v2479
      %v2772 = vunpack.c.l.b16 %v2480
      %v2773 = vunpack.c.l.b16 %v2481
      %v2774 = vunpack.c.l.b16 %v2482
      %v2775 = vunpack.c.l.b16 %v2483
      %v2776 = vunpack.c.l.b16 %v2484
      %v2777 = vunpack.c.l.b16 %v2485
      %v2778 = vunpack.c.l.b16 %v2486
      %v2779 = vunpack.c.l.b16 %v2487
      %v2780 = vunpack.c.l.b16 %v2488
      %v2781 = vunpack.c.l.b16 %v2489
      %v2782 = vunpack.c.l.b16 %v2490
      %v2783 = vunpack.c.l.b16 %v2491
      %v2784 = vunpack.c.l.b16 %v2492
      %v2785 = vunpack.c.l.b16 %v2493
      %v2786 = vunpack.c.l.b16 %v2494
      %v2787 = vunpack.c.l.b16 %v2495
      %v2788 = vunpack.c.l.b16 %v2496
      %v2789 = vunpack.c.l.b16 %v2497
      %v2790 = vunpack.c.l.b16 %v2498
      %v2791 = vunpack.c.l.b16 %v2499
      %v2792 = vunpack.c.l.b16 %v2500
      %v2793 = vunpack.c.l.b16 %v2501
      %v2794 = vunpack.c.l.b16 %v2502
      %v2795 = vunpack.c.l.b16 %v2503
      %v2796 = vunpack.c.l.b16 %v2504
      %v2797 = vunpack.c.l.b16 %v2505
      %v2798 = vunpack.c.l.b16 %v2506
      %v2799 = vunpack.c.l.b16 %v2507
      %v2800 = vunpack.c.l.b16 %v2508
      %v2801 = vunpack.c.l.b16 %v2509
      %v2802 = vunpack.c.l.b16 %v2510
      %v2803 = vunpack.c.l.b16 %v2511
      %v2804 = vunpack.c.l.b16 %v2512
      %v2805 = vunpack.c.l.b16 %v2513
      %v2806 = vunpack.c.l.b16 %v2514
      %v2807 = vunpack.c.l.b16 %v2515
      %v2808 = vunpack.c.l.b16 %v2516
      %v2809 = vunpack.c.l.b16 %v2517
      %v2810 = vunpack.c.l.b16 %v2518
      %v2811 = vunpack.c.l.b16 %v2519
      %v2812 = vunpack.c.l.b16 %v2520
      %v2813 = vunpack.c.l.b16 %v2521
      %v2814 = vunpack.c.l.b16 %v2522
      %v2815 = vunpack.c.l.b16 %v2523
      %v2816 = vunpack.c.l.b16 %v2524
      %v2817 = vunpack.c.l.b16 %v2525
      %v2818 = vunpack.c.l.b16 %v2526
      %v2819 = vunpack.c.l.b16 %v2527
      %v2820 = vunpack.c.l.b16 %v2528
      %v2821 = vunpack.c.l.b16 %v2529
      %v2822 = vunpack.c.l.b16 %v2530
      %v2823 = vunpack.c.l.b16 %v2531
      %v2824 = vunpack.c.l.b16 %v2532
      %v2825 = vunpack.c.l.b16 %v2533
      %v2826 = vunpack.c.l.b16 %v2534
      %v2827 = vunpack.c.l.b16 %v2535
      %v2828 = vunpack.c.l.b16 %v2536
      %v2829 = vunpack.c.l.b16 %v2537
      %v2830 = vunpack.c.l.b16 %v2538
      %v2831 = vunpack.c.l.b16 %v2539
      %v2832 = vunpack.c.l.b16 %v2540
      %v2833 = vunpack.c.l.b16 %v2541
      %v2834 = vunpack.c.l.b16 %v2542
      %v2835 = vunpack.c.l.b16 %v2543
      %v2836 = vunpack.c.l.b16 %v2544
      %v2837 = vunpack.c.l.b16 %v2545
      %v2838 = vunpack.c.l.b16 %v2546
      %v2839 = vunpack.c.l.b16 %v2547
      %v2840 = vunpack.c.l.b16 %v2548
      %v2841 = vunpack.c.l.b16 %v2549
      %v2842 = vunpack.c.l.b16 %v2550
      %v2843 = vunpack.c.l.b16 %v2551
      %v2844 = vunpack.c.l.b16 %v2552
      %v2845 = vunpack.c.l.b16 %v2553
      %v2846 = vunpack.c.l.b16 %v2554
      %v2847 = vunpack.c.l.b16 %v2555
      %v2848 = vunpack.c.l.b16 %v2556
      %v2849 = vunpack.c.l.b16 %v2557
      %v2850 = vunpack.c.l.b16 %v2558
      %v2851 = vunpack.c.l.b16 %v2559
      %v2852 = vunpack.c.l.b16 %v2560
      %v2853 = vunpack.c.l.b16 %v2561
      %v2854 = vunpack.c.l.b16 %v2562
      %v2855 = vunpack.c.l.b16 %v2563
      %v2856 = vunpack.c.l.b16 %v2564
      %v2857 = vunpack.c.l.b16 %v2565
      %v2858 = vunpack.c.l.b16 %v2566
      %v2859 = vunpack.c.l.b16 %v2567
      %v2860 = vunpack.c.l.b16 %v2568
      %v2861 = vunpack.c.l.b16 %v2569
      %v2862 = vunpack.c.l.b16 %v2570
      %v2863 = vunpack.c.l.b16 %v2571
      %v2864 = vunpack.c.l.b16 %v2572
      %v2865 = vunpack.c.l.b16 %v2573
      %v2866 = vunpack.c.l.b16 %v2574
      %v2867 = vunpack.c.l.b16 %v2575
      %v2868 = vunpack.c.l.b16 %v2576
      %v2869 = vunpack.c.l.b16 %v2577
      %v2870 = vunpack.c.l.b16 %v2578
      %v2871 = vunpack.c.l.b16 %v2579
      %v2872 = vpack.c.b16 %v2729, %v2728
      %v2873 = vpack.c.b16 %v2731, %v2730
      %v2874 = vpack.c.b16 %v2733, %v2732
      %v2875 = vpack.c.b16 %v2735, %v2734
      %v2876 = vpack.c.b16 %v2737, %v2736
      %v2877 = vpack.c.b16 %v2739, %v2738
      %v2878 = vpack.c.b16 %v2741, %v2740
      %v2879 = vpack.c.b16 %v2743, %v2742
      %v2880 = vpack.c.b16 %v2745, %v2744
      %v2881 = vpack.c.b16 %v2747, %v2746
      %v2882 = vpack.c.b16 %v2749, %v2748
      %v2883 = vpack.c.b16 %v2751, %v2750
      %v2884 = vpack.c.b16 %v2753, %v2752
      %v2885 = vpack.c.b16 %v2755, %v2754
      %v2886 = vpack.c.b16 %v2757, %v2756
      %v2887 = vpack.c.b16 %v2759, %v2758
      %v2888 = vpack.c.b16 %v2761, %v2760
      %v2889 = vpack.c.b16 %v2763, %v2762
      %v2890 = vpack.c.b16 %v2765, %v2764
      %v2891 = vpack.c.b16 %v2767, %v2766
      %v2892 = vpack.c.b16 %v2769, %v2768
      %v2893 = vpack.c.b16 %v2771, %v2770
      %v2894 = vpack.c.b16 %v2773, %v2772
      %v2895 = vpack.c.b16 %v2775, %v2774
      %v2896 = vpack.c.b16 %v2777, %v2776
      %v2897 = vpack.c.b16 %v2779, %v2778
      %v2898 = vpack.c.b16 %v2781, %v2780
      %v2899 = vpack.c.b16 %v2783, %v2782
      %v2900 = vpack.c.b16 %v2785, %v2784
      %v2901 = vpack.c.b16 %v2787, %v2786
      %v2902 = vpack.c.b16 %v2789, %v2788
      %v2903 = vpack.c.b16 %v2791, %v2790
      %v2904 = vpack.c.b16 %v2793, %v2792
      %v2905 = vpack.c.b16 %v2795, %v2794
      %v2906 = vpack.c.b16 %v2797, %v2796
      %v2907 = vpack.c.b16 %v2799, %v2798
      %v2908 = vpack.c.b16 %v2801, %v2800
      %v2909 = vpack.c.b16 %v2803, %v2802
      %v2910 = vpack.c.b16 %v2805, %v2804
      %v2911 = vpack.c.b16 %v2807, %v2806
      %v2912 = vpack.c.b16 %v2809, %v2808
      %v2913 = vpack.c.b16 %v2811, %v2810
      %v2914 = vpack.c.b16 %v2813, %v2812
      %v2915 = vpack.c.b16 %v2815, %v2814
      %v2916 = vpack.c.b16 %v2817, %v2816
      %v2917 = vpack.c.b16 %v2819, %v2818
      %v2918 = vpack.c.b16 %v2821, %v2820
      %v2919 = vpack.c.b16 %v2823, %v2822
      %v2920 = vpack.c.b16 %v2825, %v2824
      %v2921 = vpack.c.b16 %v2827, %v2826
      %v2922 = vpack.c.b16 %v2829, %v2828
      %v2923 = vpack.c.b16 %v2831, %v2830
      %v2924 = vpack.c.b16 %v2833, %v2832
      %v2925 = vpack.c.b16 %v2835, %v2834
      %v2926 = vpack.c.b16 %v2837, %v2836
      %v2927 = vpack.c.b16 %v2839, %v2838
      %v2928 = vpack.c.b16 %v2841, %v2840
      %v2929 = vpack.c.b16 %v2843, %v2842
      %v2930 = vpack.c.b16 %v2845, %v2844
      %v2931 = vpack.c.b16 %v2847, %v2846
      %v2932 = vpack.c.b16 %v2849, %v2848
      %v2933 = vpack.c.b16 %v2851, %v2850
      %v2934 = vpack.c.b16 %v2853, %v2852
      %v2935 = vpack.c.b16 %v2855, %v2854
      %v2936 = vpack.c.b16 %v2857, %v2856
      %v2937 = vpack.c.b16 %v2859, %v2858
      %v2938 = vpack.c.b16 %v2861, %v2860
      %v2939 = vpack.c.b16 %v2863, %v2862
      %v2940 = vpack.c.b16 %v2865, %v2864
      %v2941 = vpack.c.b16 %v2867, %v2866
      %v2942 = vpack.c.b16 %v2869, %v2868
      %v2943 = vpack.c.b16 %v2871, %v2870
      %3016 = vmatpush.bf16.msra.mxu0 %v2879
      %3017 = vmatpush.bf16.msra.mxu0 %v2878
      %3018 = vmatpush.bf16.msra.mxu0 %v2877
      %3019 = vmatpush.bf16.msra.mxu0 %v2876
      %3020 = vmatpush.bf16.msra.mxu0 %v2875
      %3021 = vmatpush.bf16.msra.mxu0 %v2874
      %3022 = vmatpush.bf16.msra.mxu0 %v2873
      %3023 = vmatpush.bf16.msra.mxu0 %v2872
      %3024 = vmatmul.bf16.gmra.mxu0 %v1720
      %v3025 = vpop.f32.mrf.mxu0
      %v3026 = vadd.f32 %v2582, %v3025
      %v3027 = vpop.f32.mrf.mxu0
      %v3028 = vadd.f32 %v2582, %v3027
      %3029 = vmatmul.bf16.gmra.mxu0 %v1721
      %v3030 = vpop.f32.mrf.mxu0
      %v3031 = vadd.f32 %v2582, %v3030
      %v3032 = vpop.f32.mrf.mxu0
      %v3033 = vadd.f32 %v2582, %v3032
      %3034 = vmatmul.bf16.gmra.mxu0 %v1722
      %v3035 = vpop.f32.mrf.mxu0
      %v3036 = vadd.f32 %v2582, %v3035
      %v3037 = vpop.f32.mrf.mxu0
      %v3038 = vadd.f32 %v2582, %v3037
      %3039 = vmatmul.bf16.gmra.mxu0 %v1723
      %v3040 = vpop.f32.mrf.mxu0
      %v3041 = vadd.f32 %v2582, %v3040
      %v3042 = vpop.f32.mrf.mxu0
      %v3043 = vadd.f32 %v2582, %v3042
      %3044 = vmatmul.bf16.gmra.mxu0 %v1724
      %v3045 = vpop.f32.mrf.mxu0
      %v3046 = vadd.f32 %v2582, %v3045
      %v3047 = vpop.f32.mrf.mxu0
      %v3048 = vadd.f32 %v2582, %v3047
      %3049 = vmatmul.bf16.gmra.mxu0 %v1725
      %v3050 = vpop.f32.mrf.mxu0
      %v3051 = vadd.f32 %v2582, %v3050
      %v3052 = vpop.f32.mrf.mxu0
      %v3053 = vadd.f32 %v2582, %v3052
      %3054 = vmatmul.bf16.gmra.mxu0 %v1726
      %v3055 = vpop.f32.mrf.mxu0
      %v3056 = vadd.f32 %v2582, %v3055
      %v3057 = vpop.f32.mrf.mxu0
      %v3058 = vadd.f32 %v2582, %v3057
      %3059 = vmatmul.bf16.gmra.mxu0 %v1727
      %v3060 = vpop.f32.mrf.mxu0
      %v3061 = vadd.f32 %v2582, %v3060
      %v3062 = vpop.f32.mrf.mxu0
      %v3063 = vadd.f32 %v2582, %v3062
      %3064 = vmatmul.bf16.gmra.mxu0 %v1728
      %v3065 = vpop.f32.mrf.mxu0
      %v3066 = vadd.f32 %v2582, %v3065
      %v3067 = vpop.f32.mrf.mxu0
      %v3068 = vadd.f32 %v2582, %v3067
      %3069 = vmatmul.bf16.gmra.mxu0 %v1729
      %v3070 = vpop.f32.mrf.mxu0
      %v3071 = vadd.f32 %v2582, %v3070
      %v3072 = vpop.f32.mrf.mxu0
      %v3073 = vadd.f32 %v2582, %v3072
      %3074 = vmatmul.bf16.gmra.mxu0 %v1730
      %v3075 = vpop.f32.mrf.mxu0
      %v3076 = vadd.f32 %v2582, %v3075
      %v3077 = vpop.f32.mrf.mxu0
      %v3078 = vadd.f32 %v2582, %v3077
      %3079 = vmatmul.bf16.gmra.mxu0 %v1731
      %v3080 = vpop.f32.mrf.mxu0
      %v3081 = vadd.f32 %v2582, %v3080
      %v3082 = vpop.f32.mrf.mxu0
      %v3083 = vadd.f32 %v2582, %v3082
      %3084 = vmatmul.bf16.gmra.mxu0 %v1732
      %v3085 = vpop.f32.mrf.mxu0
      %v3086 = vadd.f32 %v2582, %v3085
      %v3087 = vpop.f32.mrf.mxu0
      %v3088 = vadd.f32 %v2582, %v3087
      %3089 = vmatmul.bf16.gmra.mxu0 %v1733
      %v3090 = vpop.f32.mrf.mxu0
      %v3091 = vadd.f32 %v2582, %v3090
      %v3092 = vpop.f32.mrf.mxu0
      %v3093 = vadd.f32 %v2582, %v3092
      %3094 = vmatmul.bf16.gmra.mxu0 %v1734
      %v3095 = vpop.f32.mrf.mxu0
      %v3096 = vadd.f32 %v2582, %v3095
      %v3097 = vpop.f32.mrf.mxu0
      %v3098 = vadd.f32 %v2582, %v3097
      %3099 = vmatmul.bf16.gmra.mxu0 %v1735
      %v3100 = vpop.f32.mrf.mxu0
      %v3101 = vadd.f32 %v2582, %v3100
      %v3102 = vpop.f32.mrf.mxu0
      %v3103 = vadd.f32 %v2582, %v3102
      %3104 = vdwg.mxu0
      %3105 = vmatpush.bf16.msra.mxu0 %v2887
      %3106 = vmatpush.bf16.msra.mxu0 %v2886
      %3107 = vmatpush.bf16.msra.mxu0 %v2885
      %3108 = vmatpush.bf16.msra.mxu0 %v2884
      %3109 = vmatpush.bf16.msra.mxu0 %v2883
      %3110 = vmatpush.bf16.msra.mxu0 %v2882
      %3111 = vmatpush.bf16.msra.mxu0 %v2881
      %3112 = vmatpush.bf16.msra.mxu0 %v2880
      %3113 = vmatmul.bf16.gmra.mxu0 %v1816
      %v3114 = vpop.f32.mrf.mxu0
      %v3115 = vadd.f32 %v3026, %v3114
      %v3116 = vpop.f32.mrf.mxu0
      %v3117 = vadd.f32 %v3028, %v3116
      %3118 = vmatmul.bf16.gmra.mxu0 %v1817
      %v3119 = vpop.f32.mrf.mxu0
      %v3120 = vadd.f32 %v3031, %v3119
      %v3121 = vpop.f32.mrf.mxu0
      %v3122 = vadd.f32 %v3033, %v3121
      %3123 = vmatmul.bf16.gmra.mxu0 %v1818
      %v3124 = vpop.f32.mrf.mxu0
      %v3125 = vadd.f32 %v3036, %v3124
      %v3126 = vpop.f32.mrf.mxu0
      %v3127 = vadd.f32 %v3038, %v3126
      %3128 = vmatmul.bf16.gmra.mxu0 %v1819
      %v3129 = vpop.f32.mrf.mxu0
      %v3130 = vadd.f32 %v3041, %v3129
      %v3131 = vpop.f32.mrf.mxu0
      %v3132 = vadd.f32 %v3043, %v3131
      %3133 = vmatmul.bf16.gmra.mxu0 %v1820
      %v3134 = vpop.f32.mrf.mxu0
      %v3135 = vadd.f32 %v3046, %v3134
      %v3136 = vpop.f32.mrf.mxu0
      %v3137 = vadd.f32 %v3048, %v3136
      %3138 = vmatmul.bf16.gmra.mxu0 %v1821
      %v3139 = vpop.f32.mrf.mxu0
      %v3140 = vadd.f32 %v3051, %v3139
      %v3141 = vpop.f32.mrf.mxu0
      %v3142 = vadd.f32 %v3053, %v3141
      %3143 = vmatmul.bf16.gmra.mxu0 %v1822
      %v3144 = vpop.f32.mrf.mxu0
      %v3145 = vadd.f32 %v3056, %v3144
      %v3146 = vpop.f32.mrf.mxu0
      %v3147 = vadd.f32 %v3058, %v3146
      %3148 = vmatmul.bf16.gmra.mxu0 %v1823
      %v3149 = vpop.f32.mrf.mxu0
      %v3150 = vadd.f32 %v3061, %v3149
      %v3151 = vpop.f32.mrf.mxu0
      %v3152 = vadd.f32 %v3063, %v3151
      %3153 = vmatmul.bf16.gmra.mxu0 %v1824
      %v3154 = vpop.f32.mrf.mxu0
      %v3155 = vadd.f32 %v3066, %v3154
      %v3156 = vpop.f32.mrf.mxu0
      %v3157 = vadd.f32 %v3068, %v3156
      %3158 = vmatmul.bf16.gmra.mxu0 %v1825
      %v3159 = vpop.f32.mrf.mxu0
      %v3160 = vadd.f32 %v3071, %v3159
      %v3161 = vpop.f32.mrf.mxu0
      %v3162 = vadd.f32 %v3073, %v3161
      %3163 = vmatmul.bf16.gmra.mxu0 %v1826
      %v3164 = vpop.f32.mrf.mxu0
      %v3165 = vadd.f32 %v3076, %v3164
      %v3166 = vpop.f32.mrf.mxu0
      %v3167 = vadd.f32 %v3078, %v3166
      %3168 = vmatmul.bf16.gmra.mxu0 %v1827
      %v3169 = vpop.f32.mrf.mxu0
      %v3170 = vadd.f32 %v3081, %v3169
      %v3171 = vpop.f32.mrf.mxu0
      %v3172 = vadd.f32 %v3083, %v3171
      %3173 = vmatmul.bf16.gmra.mxu0 %v1828
      %v3174 = vpop.f32.mrf.mxu0
      %v3175 = vadd.f32 %v3086, %v3174
      %v3176 = vpop.f32.mrf.mxu0
      %v3177 = vadd.f32 %v3088, %v3176
      %3178 = vmatmul.bf16.gmra.mxu0 %v1829
      %v3179 = vpop.f32.mrf.mxu0
      %v3180 = vadd.f32 %v3091, %v3179
      %v3181 = vpop.f32.mrf.mxu0
      %v3182 = vadd.f32 %v3093, %v3181
      %3183 = vmatmul.bf16.gmra.mxu0 %v1830
      %v3184 = vpop.f32.mrf.mxu0
      %v3185 = vadd.f32 %v3096, %v3184
      %v3186 = vpop.f32.mrf.mxu0
      %v3187 = vadd.f32 %v3098, %v3186
      %3188 = vmatmul.bf16.gmra.mxu0 %v1831
      %v3189 = vpop.f32.mrf.mxu0
      %v3190 = vadd.f32 %v3101, %v3189
      %v3191 = vpop.f32.mrf.mxu0
      %v3192 = vadd.f32 %v3103, %v3191
      %3193 = vdwg.mxu0
      %3194 = vmatpush.bf16.msra.mxu0 %v2895
      %3195 = vmatpush.bf16.msra.mxu0 %v2894
      %3196 = vmatpush.bf16.msra.mxu0 %v2893
      %3197 = vmatpush.bf16.msra.mxu0 %v2892
      %3198 = vmatpush.bf16.msra.mxu0 %v2891
      %3199 = vmatpush.bf16.msra.mxu0 %v2890
      %3200 = vmatpush.bf16.msra.mxu0 %v2889
      %3201 = vmatpush.bf16.msra.mxu0 %v2888
      %3202 = vmatmul.bf16.gmra.mxu0 %v1912
      %v3203 = vpop.f32.mrf.mxu0
      %v3204 = vadd.f32 %v3115, %v3203
      %v3205 = vpop.f32.mrf.mxu0
      %v3206 = vadd.f32 %v3117, %v3205
      %3207 = vmatmul.bf16.gmra.mxu0 %v1913
      %v3208 = vpop.f32.mrf.mxu0
      %v3209 = vadd.f32 %v3120, %v3208
      %v3210 = vpop.f32.mrf.mxu0
      %v3211 = vadd.f32 %v3122, %v3210
      %3212 = vmatmul.bf16.gmra.mxu0 %v1914
      %v3213 = vpop.f32.mrf.mxu0
      %v3214 = vadd.f32 %v3125, %v3213
      %v3215 = vpop.f32.mrf.mxu0
      %v3216 = vadd.f32 %v3127, %v3215
      %3217 = vmatmul.bf16.gmra.mxu0 %v1915
      %v3218 = vpop.f32.mrf.mxu0
      %v3219 = vadd.f32 %v3130, %v3218
      %v3220 = vpop.f32.mrf.mxu0
      %v3221 = vadd.f32 %v3132, %v3220
      %3222 = vmatmul.bf16.gmra.mxu0 %v1916
      %v3223 = vpop.f32.mrf.mxu0
      %v3224 = vadd.f32 %v3135, %v3223
      %v3225 = vpop.f32.mrf.mxu0
      %v3226 = vadd.f32 %v3137, %v3225
      %3227 = vmatmul.bf16.gmra.mxu0 %v1917
      %v3228 = vpop.f32.mrf.mxu0
      %v3229 = vadd.f32 %v3140, %v3228
      %v3230 = vpop.f32.mrf.mxu0
      %v3231 = vadd.f32 %v3142, %v3230
      %3232 = vmatmul.bf16.gmra.mxu0 %v1918
      %v3233 = vpop.f32.mrf.mxu0
      %v3234 = vadd.f32 %v3145, %v3233
      %v3235 = vpop.f32.mrf.mxu0
      %v3236 = vadd.f32 %v3147, %v3235
      %3237 = vmatmul.bf16.gmra.mxu0 %v1919
      %v3238 = vpop.f32.mrf.mxu0
      %v3239 = vadd.f32 %v3150, %v3238
      %v3240 = vpop.f32.mrf.mxu0
      %v3241 = vadd.f32 %v3152, %v3240
      %3242 = vmatmul.bf16.gmra.mxu0 %v1920
      %v3243 = vpop.f32.mrf.mxu0
      %v3244 = vadd.f32 %v3155, %v3243
      %v3245 = vpop.f32.mrf.mxu0
      %v3246 = vadd.f32 %v3157, %v3245
      %3247 = vmatmul.bf16.gmra.mxu0 %v1921
      %v3248 = vpop.f32.mrf.mxu0
      %v3249 = vadd.f32 %v3160, %v3248
      %v3250 = vpop.f32.mrf.mxu0
      %v3251 = vadd.f32 %v3162, %v3250
      %3252 = vmatmul.bf16.gmra.mxu0 %v1922
      %v3253 = vpop.f32.mrf.mxu0
      %v3254 = vadd.f32 %v3165, %v3253
      %v3255 = vpop.f32.mrf.mxu0
      %v3256 = vadd.f32 %v3167, %v3255
      %3257 = vmatmul.bf16.gmra.mxu0 %v1923
      %v3258 = vpop.f32.mrf.mxu0
      %v3259 = vadd.f32 %v3170, %v3258
      %v3260 = vpop.f32.mrf.mxu0
      %v3261 = vadd.f32 %v3172, %v3260
      %3262 = vmatmul.bf16.gmra.mxu0 %v1924
      %v3263 = vpop.f32.mrf.mxu0
      %v3264 = vadd.f32 %v3175, %v3263
      %v3265 = vpop.f32.mrf.mxu0
      %v3266 = vadd.f32 %v3177, %v3265
      %3267 = vmatmul.bf16.gmra.mxu0 %v1925
      %v3268 = vpop.f32.mrf.mxu0
      %v3269 = vadd.f32 %v3180, %v3268
      %v3270 = vpop.f32.mrf.mxu0
      %v3271 = vadd.f32 %v3182, %v3270
      %3272 = vmatmul.bf16.gmra.mxu0 %v1926
      %v3273 = vpop.f32.mrf.mxu0
      %v3274 = vadd.f32 %v3185, %v3273
      %v3275 = vpop.f32.mrf.mxu0
      %v3276 = vadd.f32 %v3187, %v3275
      %3277 = vmatmul.bf16.gmra.mxu0 %v1927
      %v3278 = vpop.f32.mrf.mxu0
      %v3279 = vadd.f32 %v3190, %v3278
      %v3280 = vpop.f32.mrf.mxu0
      %v3281 = vadd.f32 %v3192, %v3280
      %3282 = vdwg.mxu0
      %3283 = vmatpush.bf16.msra.mxu0 %v2903
      %3284 = vmatpush.bf16.msra.mxu0 %v2902
      %3285 = vmatpush.bf16.msra.mxu0 %v2901
      %3286 = vmatpush.bf16.msra.mxu0 %v2900
      %3287 = vmatpush.bf16.msra.mxu0 %v2899
      %3288 = vmatpush.bf16.msra.mxu0 %v2898
      %3289 = vmatpush.bf16.msra.mxu0 %v2897
      %3290 = vmatpush.bf16.msra.mxu0 %v2896
      %3291 = vmatmul.bf16.gmra.mxu0 %v2008
      %v3292 = vpop.f32.mrf.mxu0
      %v3293 = vadd.f32 %v3204, %v3292
      %v3294 = vpop.f32.mrf.mxu0
      %v3295 = vadd.f32 %v3206, %v3294
      %3296 = vmatmul.bf16.gmra.mxu0 %v2009
      %v3297 = vpop.f32.mrf.mxu0
      %v3298 = vadd.f32 %v3209, %v3297
      %v3299 = vpop.f32.mrf.mxu0
      %v3300 = vadd.f32 %v3211, %v3299
      %3301 = vmatmul.bf16.gmra.mxu0 %v2010
      %v3302 = vpop.f32.mrf.mxu0
      %v3303 = vadd.f32 %v3214, %v3302
      %v3304 = vpop.f32.mrf.mxu0
      %v3305 = vadd.f32 %v3216, %v3304
      %3306 = vmatmul.bf16.gmra.mxu0 %v2011
      %v3307 = vpop.f32.mrf.mxu0
      %v3308 = vadd.f32 %v3219, %v3307
      %v3309 = vpop.f32.mrf.mxu0
      %v3310 = vadd.f32 %v3221, %v3309
      %3311 = vmatmul.bf16.gmra.mxu0 %v2012
      %v3312 = vpop.f32.mrf.mxu0
      %v3313 = vadd.f32 %v3224, %v3312
      %v3314 = vpop.f32.mrf.mxu0
      %v3315 = vadd.f32 %v3226, %v3314
      %3316 = vmatmul.bf16.gmra.mxu0 %v2013
      %v3317 = vpop.f32.mrf.mxu0
      %v3318 = vadd.f32 %v3229, %v3317
      %v3319 = vpop.f32.mrf.mxu0
      %v3320 = vadd.f32 %v3231, %v3319
      %3321 = vmatmul.bf16.gmra.mxu0 %v2014
      %v3322 = vpop.f32.mrf.mxu0
      %v3323 = vadd.f32 %v3234, %v3322
      %v3324 = vpop.f32.mrf.mxu0
      %v3325 = vadd.f32 %v3236, %v3324
      %3326 = vmatmul.bf16.gmra.mxu0 %v2015
      %v3327 = vpop.f32.mrf.mxu0
      %v3328 = vadd.f32 %v3239, %v3327
      %v3329 = vpop.f32.mrf.mxu0
      %v3330 = vadd.f32 %v3241, %v3329
      %3331 = vmatmul.bf16.gmra.mxu0 %v2016
      %v3332 = vpop.f32.mrf.mxu0
      %v3333 = vadd.f32 %v3244, %v3332
      %v3334 = vpop.f32.mrf.mxu0
      %v3335 = vadd.f32 %v3246, %v3334
      %3336 = vmatmul.bf16.gmra.mxu0 %v2017
      %v3337 = vpop.f32.mrf.mxu0
      %v3338 = vadd.f32 %v3249, %v3337
      %v3339 = vpop.f32.mrf.mxu0
      %v3340 = vadd.f32 %v3251, %v3339
      %3341 = vmatmul.bf16.gmra.mxu0 %v2018
      %v3342 = vpop.f32.mrf.mxu0
      %v3343 = vadd.f32 %v3254, %v3342
      %v3344 = vpop.f32.mrf.mxu0
      %v3345 = vadd.f32 %v3256, %v3344
      %3346 = vmatmul.bf16.gmra.mxu0 %v2019
      %v3347 = vpop.f32.mrf.mxu0
      %v3348 = vadd.f32 %v3259, %v3347
      %v3349 = vpop.f32.mrf.mxu0
      %v3350 = vadd.f32 %v3261, %v3349
      %3351 = vmatmul.bf16.gmra.mxu0 %v2020
      %v3352 = vpop.f32.mrf.mxu0
      %v3353 = vadd.f32 %v3264, %v3352
      %v3354 = vpop.f32.mrf.mxu0
      %v3355 = vadd.f32 %v3266, %v3354
      %3356 = vmatmul.bf16.gmra.mxu0 %v2021
      %v3357 = vpop.f32.mrf.mxu0
      %v3358 = vadd.f32 %v3269, %v3357
      %v3359 = vpop.f32.mrf.mxu0
      %v3360 = vadd.f32 %v3271, %v3359
      %3361 = vmatmul.bf16.gmra.mxu0 %v2022
      %v3362 = vpop.f32.mrf.mxu0
      %v3363 = vadd.f32 %v3274, %v3362
      %v3364 = vpop.f32.mrf.mxu0
      %v3365 = vadd.f32 %v3276, %v3364
      %3366 = vmatmul.bf16.gmra.mxu0 %v2023
      %v3367 = vpop.f32.mrf.mxu0
      %v3368 = vadd.f32 %v3279, %v3367
      %v3369 = vpop.f32.mrf.mxu0
      %v3370 = vadd.f32 %v3281, %v3369
      %3371 = vdwg.mxu0
      %3372 = vmatpush.bf16.msra.mxu0 %v2911
      %3373 = vmatpush.bf16.msra.mxu0 %v2910
      %3374 = vmatpush.bf16.msra.mxu0 %v2909
      %3375 = vmatpush.bf16.msra.mxu0 %v2908
      %3376 = vmatpush.bf16.msra.mxu0 %v2907
      %3377 = vmatpush.bf16.msra.mxu0 %v2906
      %3378 = vmatpush.bf16.msra.mxu0 %v2905
      %3379 = vmatpush.bf16.msra.mxu0 %v2904
      %3380 = vmatmul.bf16.gmra.mxu0 %v2104
      %v3381 = vpop.f32.mrf.mxu0
      %v3382 = vadd.f32 %v3293, %v3381
      %v3383 = vpop.f32.mrf.mxu0
      %v3384 = vadd.f32 %v3295, %v3383
      %3385 = vmatmul.bf16.gmra.mxu0 %v2105
      %v3386 = vpop.f32.mrf.mxu0
      %v3387 = vadd.f32 %v3298, %v3386
      %v3388 = vpop.f32.mrf.mxu0
      %v3389 = vadd.f32 %v3300, %v3388
      %3390 = vmatmul.bf16.gmra.mxu0 %v2106
      %v3391 = vpop.f32.mrf.mxu0
      %v3392 = vadd.f32 %v3303, %v3391
      %v3393 = vpop.f32.mrf.mxu0
      %v3394 = vadd.f32 %v3305, %v3393
      %3395 = vmatmul.bf16.gmra.mxu0 %v2107
      %v3396 = vpop.f32.mrf.mxu0
      %v3397 = vadd.f32 %v3308, %v3396
      %v3398 = vpop.f32.mrf.mxu0
      %v3399 = vadd.f32 %v3310, %v3398
      %3400 = vmatmul.bf16.gmra.mxu0 %v2108
      %v3401 = vpop.f32.mrf.mxu0
      %v3402 = vadd.f32 %v3313, %v3401
      %v3403 = vpop.f32.mrf.mxu0
      %v3404 = vadd.f32 %v3315, %v3403
      %3405 = vmatmul.bf16.gmra.mxu0 %v2109
      %v3406 = vpop.f32.mrf.mxu0
      %v3407 = vadd.f32 %v3318, %v3406
      %v3408 = vpop.f32.mrf.mxu0
      %v3409 = vadd.f32 %v3320, %v3408
      %3410 = vmatmul.bf16.gmra.mxu0 %v2110
      %v3411 = vpop.f32.mrf.mxu0
      %v3412 = vadd.f32 %v3323, %v3411
      %v3413 = vpop.f32.mrf.mxu0
      %v3414 = vadd.f32 %v3325, %v3413
      %3415 = vmatmul.bf16.gmra.mxu0 %v2111
      %v3416 = vpop.f32.mrf.mxu0
      %v3417 = vadd.f32 %v3328, %v3416
      %v3418 = vpop.f32.mrf.mxu0
      %v3419 = vadd.f32 %v3330, %v3418
      %3420 = vmatmul.bf16.gmra.mxu0 %v2112
      %v3421 = vpop.f32.mrf.mxu0
      %v3422 = vadd.f32 %v3333, %v3421
      %v3423 = vpop.f32.mrf.mxu0
      %v3424 = vadd.f32 %v3335, %v3423
      %3425 = vmatmul.bf16.gmra.mxu0 %v2113
      %v3426 = vpop.f32.mrf.mxu0
      %v3427 = vadd.f32 %v3338, %v3426
      %v3428 = vpop.f32.mrf.mxu0
      %v3429 = vadd.f32 %v3340, %v3428
      %3430 = vmatmul.bf16.gmra.mxu0 %v2114
      %v3431 = vpop.f32.mrf.mxu0
      %v3432 = vadd.f32 %v3343, %v3431
      %v3433 = vpop.f32.mrf.mxu0
      %v3434 = vadd.f32 %v3345, %v3433
      %3435 = vmatmul.bf16.gmra.mxu0 %v2115
      %v3436 = vpop.f32.mrf.mxu0
      %v3437 = vadd.f32 %v3348, %v3436
      %v3438 = vpop.f32.mrf.mxu0
      %v3439 = vadd.f32 %v3350, %v3438
      %3440 = vmatmul.bf16.gmra.mxu0 %v2116
      %v3441 = vpop.f32.mrf.mxu0
      %v3442 = vadd.f32 %v3353, %v3441
      %v3443 = vpop.f32.mrf.mxu0
      %v3444 = vadd.f32 %v3355, %v3443
      %3445 = vmatmul.bf16.gmra.mxu0 %v2117
      %v3446 = vpop.f32.mrf.mxu0
      %v3447 = vadd.f32 %v3358, %v3446
      %v3448 = vpop.f32.mrf.mxu0
      %v3449 = vadd.f32 %v3360, %v3448
      %3450 = vmatmul.bf16.gmra.mxu0 %v2118
      %v3451 = vpop.f32.mrf.mxu0
      %v3452 = vadd.f32 %v3363, %v3451
      %v3453 = vpop.f32.mrf.mxu0
      %v3454 = vadd.f32 %v3365, %v3453
      %3455 = vmatmul.bf16.gmra.mxu0 %v2119
      %v3456 = vpop.f32.mrf.mxu0
      %v3457 = vadd.f32 %v3368, %v3456
      %v3458 = vpop.f32.mrf.mxu0
      %v3459 = vadd.f32 %v3370, %v3458
      %3460 = vdwg.mxu0
      %3461 = vmatpush.bf16.msra.mxu0 %v2919
      %3462 = vmatpush.bf16.msra.mxu0 %v2918
      %3463 = vmatpush.bf16.msra.mxu0 %v2917
      %3464 = vmatpush.bf16.msra.mxu0 %v2916
      %3465 = vmatpush.bf16.msra.mxu0 %v2915
      %3466 = vmatpush.bf16.msra.mxu0 %v2914
      %3467 = vmatpush.bf16.msra.mxu0 %v2913
      %3468 = vmatpush.bf16.msra.mxu0 %v2912
      %3469 = vmatmul.bf16.gmra.mxu0 %v2200
      %v3470 = vpop.f32.mrf.mxu0
      %v3471 = vadd.f32 %v3382, %v3470
      %v3472 = vpop.f32.mrf.mxu0
      %v3473 = vadd.f32 %v3384, %v3472
      %3474 = vmatmul.bf16.gmra.mxu0 %v2201
      %v3475 = vpop.f32.mrf.mxu0
      %v3476 = vadd.f32 %v3387, %v3475
      %v3477 = vpop.f32.mrf.mxu0
      %v3478 = vadd.f32 %v3389, %v3477
      %3479 = vmatmul.bf16.gmra.mxu0 %v2202
      %v3480 = vpop.f32.mrf.mxu0
      %v3481 = vadd.f32 %v3392, %v3480
      %v3482 = vpop.f32.mrf.mxu0
      %v3483 = vadd.f32 %v3394, %v3482
      %3484 = vmatmul.bf16.gmra.mxu0 %v2203
      %v3485 = vpop.f32.mrf.mxu0
      %v3486 = vadd.f32 %v3397, %v3485
      %v3487 = vpop.f32.mrf.mxu0
      %v3488 = vadd.f32 %v3399, %v3487
      %3489 = vmatmul.bf16.gmra.mxu0 %v2204
      %v3490 = vpop.f32.mrf.mxu0
      %v3491 = vadd.f32 %v3402, %v3490
      %v3492 = vpop.f32.mrf.mxu0
      %v3493 = vadd.f32 %v3404, %v3492
      %3494 = vmatmul.bf16.gmra.mxu0 %v2205
      %v3495 = vpop.f32.mrf.mxu0
      %v3496 = vadd.f32 %v3407, %v3495
      %v3497 = vpop.f32.mrf.mxu0
      %v3498 = vadd.f32 %v3409, %v3497
      %3499 = vmatmul.bf16.gmra.mxu0 %v2206
      %v3500 = vpop.f32.mrf.mxu0
      %v3501 = vadd.f32 %v3412, %v3500
      %v3502 = vpop.f32.mrf.mxu0
      %v3503 = vadd.f32 %v3414, %v3502
      %3504 = vmatmul.bf16.gmra.mxu0 %v2207
      %v3505 = vpop.f32.mrf.mxu0
      %v3506 = vadd.f32 %v3417, %v3505
      %v3507 = vpop.f32.mrf.mxu0
      %v3508 = vadd.f32 %v3419, %v3507
      %3509 = vmatmul.bf16.gmra.mxu0 %v2208
      %v3510 = vpop.f32.mrf.mxu0
      %v3511 = vadd.f32 %v3422, %v3510
      %v3512 = vpop.f32.mrf.mxu0
      %v3513 = vadd.f32 %v3424, %v3512
      %3514 = vmatmul.bf16.gmra.mxu0 %v2209
      %v3515 = vpop.f32.mrf.mxu0
      %v3516 = vadd.f32 %v3427, %v3515
      %v3517 = vpop.f32.mrf.mxu0
      %v3518 = vadd.f32 %v3429, %v3517
      %3519 = vmatmul.bf16.gmra.mxu0 %v2210
      %v3520 = vpop.f32.mrf.mxu0
      %v3521 = vadd.f32 %v3432, %v3520
      %v3522 = vpop.f32.mrf.mxu0
      %v3523 = vadd.f32 %v3434, %v3522
      %3524 = vmatmul.bf16.gmra.mxu0 %v2211
      %v3525 = vpop.f32.mrf.mxu0
      %v3526 = vadd.f32 %v3437, %v3525
      %v3527 = vpop.f32.mrf.mxu0
      %v3528 = vadd.f32 %v3439, %v3527
      %3529 = vmatmul.bf16.gmra.mxu0 %v2212
      %v3530 = vpop.f32.mrf.mxu0
      %v3531 = vadd.f32 %v3442, %v3530
      %v3532 = vpop.f32.mrf.mxu0
      %v3533 = vadd.f32 %v3444, %v3532
      %3534 = vmatmul.bf16.gmra.mxu0 %v2213
      %v3535 = vpop.f32.mrf.mxu0
      %v3536 = vadd.f32 %v3447, %v3535
      %v3537 = vpop.f32.mrf.mxu0
      %v3538 = vadd.f32 %v3449, %v3537
      %3539 = vmatmul.bf16.gmra.mxu0 %v2214
      %v3540 = vpop.f32.mrf.mxu0
      %v3541 = vadd.f32 %v3452, %v3540
      %v3542 = vpop.f32.mrf.mxu0
      %v3543 = vadd.f32 %v3454, %v3542
      %3544 = vmatmul.bf16.gmra.mxu0 %v2215
      %v3545 = vpop.f32.mrf.mxu0
      %v3546 = vadd.f32 %v3457, %v3545
      %v3547 = vpop.f32.mrf.mxu0
      %v3548 = vadd.f32 %v3459, %v3547
      %3549 = vdwg.mxu0
      %3550 = vmatpush.bf16.msra.mxu0 %v2927
      %3551 = vmatpush.bf16.msra.mxu0 %v2926
      %3552 = vmatpush.bf16.msra.mxu0 %v2925
      %3553 = vmatpush.bf16.msra.mxu0 %v2924
      %3554 = vmatpush.bf16.msra.mxu0 %v2923
      %3555 = vmatpush.bf16.msra.mxu0 %v2922
      %3556 = vmatpush.bf16.msra.mxu0 %v2921
      %3557 = vmatpush.bf16.msra.mxu0 %v2920
      %3558 = vmatmul.bf16.gmra.mxu0 %v2296
      %v3559 = vpop.f32.mrf.mxu0
      %v3560 = vadd.f32 %v3471, %v3559
      %v3561 = vpop.f32.mrf.mxu0
      %v3562 = vadd.f32 %v3473, %v3561
      %3563 = vmatmul.bf16.gmra.mxu0 %v2297
      %v3564 = vpop.f32.mrf.mxu0
      %v3565 = vadd.f32 %v3476, %v3564
      %v3566 = vpop.f32.mrf.mxu0
      %v3567 = vadd.f32 %v3478, %v3566
      %3568 = vmatmul.bf16.gmra.mxu0 %v2298
      %v3569 = vpop.f32.mrf.mxu0
      %v3570 = vadd.f32 %v3481, %v3569
      %v3571 = vpop.f32.mrf.mxu0
      %v3572 = vadd.f32 %v3483, %v3571
      %3573 = vmatmul.bf16.gmra.mxu0 %v2299
      %v3574 = vpop.f32.mrf.mxu0
      %v3575 = vadd.f32 %v3486, %v3574
      %v3576 = vpop.f32.mrf.mxu0
      %v3577 = vadd.f32 %v3488, %v3576
      %3578 = vmatmul.bf16.gmra.mxu0 %v2300
      %v3579 = vpop.f32.mrf.mxu0
      %v3580 = vadd.f32 %v3491, %v3579
      %v3581 = vpop.f32.mrf.mxu0
      %v3582 = vadd.f32 %v3493, %v3581
      %3583 = vmatmul.bf16.gmra.mxu0 %v2301
      %v3584 = vpop.f32.mrf.mxu0
      %v3585 = vadd.f32 %v3496, %v3584
      %v3586 = vpop.f32.mrf.mxu0
      %v3587 = vadd.f32 %v3498, %v3586
      %3588 = vmatmul.bf16.gmra.mxu0 %v2302
      %v3589 = vpop.f32.mrf.mxu0
      %v3590 = vadd.f32 %v3501, %v3589
      %v3591 = vpop.f32.mrf.mxu0
      %v3592 = vadd.f32 %v3503, %v3591
      %3593 = vmatmul.bf16.gmra.mxu0 %v2303
      %v3594 = vpop.f32.mrf.mxu0
      %v3595 = vadd.f32 %v3506, %v3594
      %v3596 = vpop.f32.mrf.mxu0
      %v3597 = vadd.f32 %v3508, %v3596
      %3598 = vmatmul.bf16.gmra.mxu0 %v2304
      %v3599 = vpop.f32.mrf.mxu0
      %v3600 = vadd.f32 %v3511, %v3599
      %v3601 = vpop.f32.mrf.mxu0
      %v3602 = vadd.f32 %v3513, %v3601
      %3603 = vmatmul.bf16.gmra.mxu0 %v2305
      %v3604 = vpop.f32.mrf.mxu0
      %v3605 = vadd.f32 %v3516, %v3604
      %v3606 = vpop.f32.mrf.mxu0
      %v3607 = vadd.f32 %v3518, %v3606
      %3608 = vmatmul.bf16.gmra.mxu0 %v2306
      %v3609 = vpop.f32.mrf.mxu0
      %v3610 = vadd.f32 %v3521, %v3609
      %v3611 = vpop.f32.mrf.mxu0
      %v3612 = vadd.f32 %v3523, %v3611
      %3613 = vmatmul.bf16.gmra.mxu0 %v2307
      %v3614 = vpop.f32.mrf.mxu0
      %v3615 = vadd.f32 %v3526, %v3614
      %v3616 = vpop.f32.mrf.mxu0
      %v3617 = vadd.f32 %v3528, %v3616
      %3618 = vmatmul.bf16.gmra.mxu0 %v2308
      %v3619 = vpop.f32.mrf.mxu0
      %v3620 = vadd.f32 %v3531, %v3619
      %v3621 = vpop.f32.mrf.mxu0
      %v3622 = vadd.f32 %v3533, %v3621
      %3623 = vmatmul.bf16.gmra.mxu0 %v2309
      %v3624 = vpop.f32.mrf.mxu0
      %v3625 = vadd.f32 %v3536, %v3624
      %v3626 = vpop.f32.mrf.mxu0
      %v3627 = vadd.f32 %v3538, %v3626
      %3628 = vmatmul.bf16.gmra.mxu0 %v2310
      %v3629 = vpop.f32.mrf.mxu0
      %v3630 = vadd.f32 %v3541, %v3629
      %v3631 = vpop.f32.mrf.mxu0
      %v3632 = vadd.f32 %v3543, %v3631
      %3633 = vmatmul.bf16.gmra.mxu0 %v2311
      %v3634 = vpop.f32.mrf.mxu0
      %v3635 = vadd.f32 %v3546, %v3634
      %v3636 = vpop.f32.mrf.mxu0
      %v3637 = vadd.f32 %v3548, %v3636
      %3638 = vdwg.mxu0
      %3639 = vmatpush.bf16.msra.mxu0 %v2935
      %3640 = vmatpush.bf16.msra.mxu0 %v2934
      %3641 = vmatpush.bf16.msra.mxu0 %v2933
      %3642 = vmatpush.bf16.msra.mxu0 %v2932
      %3643 = vmatpush.bf16.msra.mxu0 %v2931
      %3644 = vmatpush.bf16.msra.mxu0 %v2930
      %3645 = vmatpush.bf16.msra.mxu0 %v2929
      %3646 = vmatpush.bf16.msra.mxu0 %v2928
      %3647 = vmatmul.bf16.gmra.mxu0 %v1818
      %v3648 = vpop.f32.mrf.mxu0
      %v3649 = vadd.f32 %v3560, %v3648
      %v3650 = vpop.f32.mrf.mxu0
      %v3651 = vadd.f32 %v3562, %v3650
      %3652 = vmatmul.bf16.gmra.mxu0 %v1819
      %v3653 = vpop.f32.mrf.mxu0
      %v3654 = vadd.f32 %v3565, %v3653
      %v3655 = vpop.f32.mrf.mxu0
      %v3656 = vadd.f32 %v3567, %v3655
      %3657 = vmatmul.bf16.gmra.mxu0 %v1820
      %v3658 = vpop.f32.mrf.mxu0
      %v3659 = vadd.f32 %v3570, %v3658
      %v3660 = vpop.f32.mrf.mxu0
      %v3661 = vadd.f32 %v3572, %v3660
      %3662 = vmatmul.bf16.gmra.mxu0 %v1821
      %v3663 = vpop.f32.mrf.mxu0
      %v3664 = vadd.f32 %v3575, %v3663
      %v3665 = vpop.f32.mrf.mxu0
      %v3666 = vadd.f32 %v3577, %v3665
      %3667 = vmatmul.bf16.gmra.mxu0 %v1822
      %v3668 = vpop.f32.mrf.mxu0
      %v3669 = vadd.f32 %v3580, %v3668
      %v3670 = vpop.f32.mrf.mxu0
      %v3671 = vadd.f32 %v3582, %v3670
      %3672 = vmatmul.bf16.gmra.mxu0 %v1823
      %v3673 = vpop.f32.mrf.mxu0
      %v3674 = vadd.f32 %v3585, %v3673
      %v3675 = vpop.f32.mrf.mxu0
      %v3676 = vadd.f32 %v3587, %v3675
      %3677 = vmatmul.bf16.gmra.mxu0 %v1824
      %v3678 = vpop.f32.mrf.mxu0
      %v3679 = vadd.f32 %v3590, %v3678
      %v3680 = vpop.f32.mrf.mxu0
      %v3681 = vadd.f32 %v3592, %v3680
      %3682 = vmatmul.bf16.gmra.mxu0 %v1825
      %v3683 = vpop.f32.mrf.mxu0
      %v3684 = vadd.f32 %v3595, %v3683
      %v3685 = vpop.f32.mrf.mxu0
      %v3686 = vadd.f32 %v3597, %v3685
      %3687 = vmatmul.bf16.gmra.mxu0 %v1826
      %v3688 = vpop.f32.mrf.mxu0
      %v3689 = vadd.f32 %v3600, %v3688
      %v3690 = vpop.f32.mrf.mxu0
      %v3691 = vadd.f32 %v3602, %v3690
      %3692 = vmatmul.bf16.gmra.mxu0 %v1827
      %v3693 = vpop.f32.mrf.mxu0
      %v3694 = vadd.f32 %v3605, %v3693
      %v3695 = vpop.f32.mrf.mxu0
      %v3696 = vadd.f32 %v3607, %v3695
      %3697 = vmatmul.bf16.gmra.mxu0 %v1828
      %v3698 = vpop.f32.mrf.mxu0
      %v3699 = vadd.f32 %v3610, %v3698
      %v3700 = vpop.f32.mrf.mxu0
      %v3701 = vadd.f32 %v3612, %v3700
      %3702 = vmatmul.bf16.gmra.mxu0 %v1829
      %v3703 = vpop.f32.mrf.mxu0
      %v3704 = vadd.f32 %v3615, %v3703
      %v3705 = vpop.f32.mrf.mxu0
      %v3706 = vadd.f32 %v3617, %v3705
      %3707 = vmatmul.bf16.gmra.mxu0 %v1830
      %v3708 = vpop.f32.mrf.mxu0
      %v3709 = vadd.f32 %v3620, %v3708
      %v3710 = vpop.f32.mrf.mxu0
      %v3711 = vadd.f32 %v3622, %v3710
      %3712 = vmatmul.bf16.gmra.mxu0 %v1831
      %v3713 = vpop.f32.mrf.mxu0
      %v3714 = vadd.f32 %v3625, %v3713
      %v3715 = vpop.f32.mrf.mxu0
      %v3716 = vadd.f32 %v3627, %v3715
      %3717 = vmatmul.bf16.gmra.mxu0 %v2336
      %v3718 = vpop.f32.mrf.mxu0
      %v3719 = vadd.f32 %v3630, %v3718
      %v3720 = vpop.f32.mrf.mxu0
      %v3721 = vadd.f32 %v3632, %v3720
      %3722 = vmatmul.bf16.gmra.mxu0 %v2337
      %v3723 = vpop.f32.mrf.mxu0
      %v3724 = vadd.f32 %v3635, %v3723
      %v3725 = vpop.f32.mrf.mxu0
      %v3726 = vadd.f32 %v3637, %v3725
      %3727 = vdwg.mxu0
      %3728 = vmatpush.bf16.msra.mxu0 %v2943
      %3729 = vmatpush.bf16.msra.mxu0 %v2942
      %3730 = vmatpush.bf16.msra.mxu0 %v2941
      %3731 = vmatpush.bf16.msra.mxu0 %v2940
      %3732 = vmatpush.bf16.msra.mxu0 %v2939
      %3733 = vmatpush.bf16.msra.mxu0 %v2938
      %3734 = vmatpush.bf16.msra.mxu0 %v2937
      %3735 = vmatpush.bf16.msra.mxu0 %v2936
      %3736 = vmatmul.bf16.gmra.mxu0 %v2404
      %v3737 = vpop.f32.mrf.mxu0
      %v3738 = vadd.f32 %v3649, %v3737
      %v3739 = vpop.f32.mrf.mxu0
      %v3740 = vadd.f32 %v3651, %v3739
      %3741 = vmatmul.bf16.gmra.mxu0 %v2405
      %v3742 = vpop.f32.mrf.mxu0
      %v3743 = vadd.f32 %v3654, %v3742
      %v3744 = vpop.f32.mrf.mxu0
      %v3745 = vadd.f32 %v3656, %v3744
      %3746 = vmatmul.bf16.gmra.mxu0 %v2406
      %v3747 = vpop.f32.mrf.mxu0
      %v3748 = vadd.f32 %v3659, %v3747
      %v3749 = vpop.f32.mrf.mxu0
      %v3750 = vadd.f32 %v3661, %v3749
      %3751 = vmatmul.bf16.gmra.mxu0 %v2407
      %v3752 = vpop.f32.mrf.mxu0
      %v3753 = vadd.f32 %v3664, %v3752
      %v3754 = vpop.f32.mrf.mxu0
      %v3755 = vadd.f32 %v3666, %v3754
      %3756 = vmatmul.bf16.gmra.mxu0 %v2408
      %v3757 = vpop.f32.mrf.mxu0
      %v3758 = vadd.f32 %v3669, %v3757
      %v3759 = vpop.f32.mrf.mxu0
      %v3760 = vadd.f32 %v3671, %v3759
      %3761 = vmatmul.bf16.gmra.mxu0 %v2409
      %v3762 = vpop.f32.mrf.mxu0
      %v3763 = vadd.f32 %v3674, %v3762
      %v3764 = vpop.f32.mrf.mxu0
      %v3765 = vadd.f32 %v3676, %v3764
      %3766 = vmatmul.bf16.gmra.mxu0 %v2410
      %v3767 = vpop.f32.mrf.mxu0
      %v3768 = vadd.f32 %v3679, %v3767
      %v3769 = vpop.f32.mrf.mxu0
      %v3770 = vadd.f32 %v3681, %v3769
      %3771 = vmatmul.bf16.gmra.mxu0 %v2411
      %v3772 = vpop.f32.mrf.mxu0
      %v3773 = vadd.f32 %v3684, %v3772
      %v3774 = vpop.f32.mrf.mxu0
      %v3775 = vadd.f32 %v3686, %v3774
      %3776 = vmatmul.bf16.gmra.mxu0 %v2412
      %v3777 = vpop.f32.mrf.mxu0
      %v3778 = vadd.f32 %v3689, %v3777
      %v3779 = vpop.f32.mrf.mxu0
      %v3780 = vadd.f32 %v3691, %v3779
      %3781 = vmatmul.bf16.gmra.mxu0 %v2413
      %v3782 = vpop.f32.mrf.mxu0
      %v3783 = vadd.f32 %v3694, %v3782
      %v3784 = vpop.f32.mrf.mxu0
      %v3785 = vadd.f32 %v3696, %v3784
      %3786 = vmatmul.bf16.gmra.mxu0 %v2414
      %v3787 = vpop.f32.mrf.mxu0
      %v3788 = vadd.f32 %v3699, %v3787
      %v3789 = vpop.f32.mrf.mxu0
      %v3790 = vadd.f32 %v3701, %v3789
      %3791 = vmatmul.bf16.gmra.mxu0 %v2415
      %v3792 = vpop.f32.mrf.mxu0
      %v3793 = vadd.f32 %v3704, %v3792
      %v3794 = vpop.f32.mrf.mxu0
      %v3795 = vadd.f32 %v3706, %v3794
      %3796 = vmatmul.bf16.gmra.mxu0 %v2416
      %v3797 = vpop.f32.mrf.mxu0
      %v3798 = vadd.f32 %v3709, %v3797
      %v3799 = vpop.f32.mrf.mxu0
      %v3800 = vadd.f32 %v3711, %v3799
      %3801 = vmatmul.bf16.gmra.mxu0 %v2417
      %v3802 = vpop.f32.mrf.mxu0
      %v3803 = vadd.f32 %v3714, %v3802
      %v3804 = vpop.f32.mrf.mxu0
      %v3805 = vadd.f32 %v3716, %v3804
      %3806 = vmatmul.bf16.gmra.mxu0 %v2418
      %v3807 = vpop.f32.mrf.mxu0
      %v3808 = vadd.f32 %v3719, %v3807
      %v3809 = vpop.f32.mrf.mxu0
      %v3810 = vadd.f32 %v3721, %v3809
      %3811 = vmatmul.bf16.gmra.mxu0 %v2419
      %v3812 = vpop.f32.mrf.mxu0
      %v3813 = vadd.f32 %v3724, %v3812
      %v3814 = vpop.f32.mrf.mxu0
      %v3815 = vadd.f32 %v3726, %v3814
      %3816 = vdwg.mxu0
      %v3817 = vmax.f32 %v3738, 0.0
      %v3818 = vmax.f32 %v3740, 0.0
      %v3819 = vmax.f32 %v3743, 0.0
      %v3820 = vmax.f32 %v3745, 0.0
      %v3821 = vmax.f32 %v3748, 0.0
      %v3822 = vmax.f32 %v3750, 0.0
      %v3823 = vmax.f32 %v3753, 0.0
      %v3824 = vmax.f32 %v3755, 0.0
      %v3825 = vmax.f32 %v3758, 0.0
      %v3826 = vmax.f32 %v3760, 0.0
      %v3827 = vmax.f32 %v3763, 0.0
      %v3828 = vmax.f32 %v3765, 0.0
      %v3829 = vmax.f32 %v3768, 0.0
      %v3830 = vmax.f32 %v3770, 0.0
      %v3831 = vmax.f32 %v3773, 0.0
      %v3832 = vmax.f32 %v3775, 0.0
      %v3833 = vmax.f32 %v3778, 0.0
      %v3834 = vmax.f32 %v3780, 0.0
      %v3835 = vmax.f32 %v3783, 0.0
      %v3836 = vmax.f32 %v3785, 0.0
      %v3837 = vmax.f32 %v3788, 0.0
      %v3838 = vmax.f32 %v3790, 0.0
      %v3839 = vmax.f32 %v3793, 0.0
      %v3840 = vmax.f32 %v3795, 0.0
      %v3841 = vmax.f32 %v3798, 0.0
      %v3842 = vmax.f32 %v3800, 0.0
      %v3843 = vmax.f32 %v3803, 0.0
      %v3844 = vmax.f32 %v3805, 0.0
      %v3845 = vmax.f32 %v3808, 0.0
      %v3846 = vmax.f32 %v3810, 0.0
      %v3847 = vmax.f32 %v3813, 0.0
      %v3848 = vmax.f32 %v3815, 0.0
      %v3849 = vpack.c.bf16 %v3818, %v3817
      %v3850 = vpack.c.bf16 %v3820, %v3819
      %v3851 = vpack.c.bf16 %v3822, %v3821
      %v3852 = vpack.c.bf16 %v3824, %v3823
      %v3853 = vpack.c.bf16 %v3826, %v3825
      %v3854 = vpack.c.bf16 %v3828, %v3827
      %v3855 = vpack.c.bf16 %v3830, %v3829
      %v3856 = vpack.c.bf16 %v3832, %v3831
      %v3857 = vpack.c.bf16 %v3834, %v3833
      %v3858 = vpack.c.bf16 %v3836, %v3835
      %v3859 = vpack.c.bf16 %v3838, %v3837
      %v3860 = vpack.c.bf16 %v3840, %v3839
      %v3861 = vpack.c.bf16 %v3842, %v3841
      %v3862 = vpack.c.bf16 %v3844, %v3843
      %v3863 = vpack.c.bf16 %v3846, %v3845
      %v3864 = vpack.c.bf16 %v3848, %v3847
      %v3865 = vld [vmem:[%s3] sm:$0xf]
      %v3866 = vld [vmem:[%s3 + $0x4] sm:$0xf]
      %v3867 = vld [vmem:[%s3 + $0x8] sm:$0xf]
      %v3868 = vld [vmem:[%s3 + $0xc] sm:$0xf]
      %v3869 = vld [vmem:[%s3 + $0x10] sm:$0xf]
      %v3870 = vld [vmem:[%s3 + $0x14] sm:$0xf]
      %v3871 = vld [vmem:[%s3 + $0x18] sm:$0xf]
      %v3872 = vld [vmem:[%s3 + $0x1c] sm:$0xf]
      %v3873 = vld [vmem:[%s3 + $0x20] sm:$0xf]
      %v3874 = vld [vmem:[%s3 + $0x24] sm:$0xf]
      %v3875 = vld [vmem:[%s3 + $0x28] sm:$0xf]
      %v3876 = vld [vmem:[%s3 + $0x2c] sm:$0xf]
      %v3877 = vld [vmem:[%s3 + $0x30] sm:$0xf]
      %v3878 = vld [vmem:[%s3 + $0x34] sm:$0xf]
      %v3879 = vld [vmem:[%s3 + $0x38] sm:$0xf]
      %v3880 = vld [vmem:[%s3 + $0x3c] sm:$0xf]
      %v3881 = vld [vmem:[%s6] sm:$0x1]
      %v3883 = vperm.slane %v3881, 0
      %v3901 = vunpack.c.l.b16 %v3865
      %v3902 = vunpack.c.l.b16 %v3866
      %v3903 = vunpack.c.l.b16 %v3867
      %v3904 = vunpack.c.l.b16 %v3868
      %v3905 = vunpack.c.l.b16 %v3869
      %v3906 = vunpack.c.l.b16 %v3870
      %v3907 = vunpack.c.l.b16 %v3871
      %v3908 = vunpack.c.l.b16 %v3872
      %v3909 = vunpack.c.l.b16 %v3873
      %v3910 = vunpack.c.l.b16 %v3874
      %v3911 = vunpack.c.l.b16 %v3875
      %v3912 = vunpack.c.l.b16 %v3876
      %v3913 = vunpack.c.l.b16 %v3877
      %v3914 = vunpack.c.l.b16 %v3878
      %v3915 = vunpack.c.l.b16 %v3879
      %v3916 = vunpack.c.l.b16 %v3880
      %v3917 = vpack.c.b16 %v3902, %v3901
      %v3918 = vpack.c.b16 %v3904, %v3903
      %v3919 = vpack.c.b16 %v3906, %v3905
      %v3920 = vpack.c.b16 %v3908, %v3907
      %v3921 = vpack.c.b16 %v3910, %v3909
      %v3922 = vpack.c.b16 %v3912, %v3911
      %v3923 = vpack.c.b16 %v3914, %v3913
      %v3924 = vpack.c.b16 %v3916, %v3915
      %3933 = vmatpush.bf16.msra.mxu0 %v3924
      %3934 = vmatpush.bf16.msra.mxu0 %v3923
      %3935 = vmatpush.bf16.msra.mxu0 %v3922
      %3936 = vmatpush.bf16.msra.mxu0 %v3921
      %3937 = vmatpush.bf16.msra.mxu0 %v3920
      %3938 = vmatpush.bf16.msra.mxu0 %v3919
      %3939 = vmatpush.bf16.msra.mxu0 %v3918
      %3940 = vmatpush.bf16.msra.mxu0 %v3917
      %3941 = vmatmul.bf16.gmra.mxu0 %v3849
      %v3942 = vpop.f32.mrf.mxu0
      %v3943 = vadd.f32 %v3883, %v3942
      %v3944 = vpop.f32.mrf.mxu0
      %v3945 = vadd.f32 %v3883, %v3944
      %3946 = vmatmul.bf16.gmra.mxu0 %v3850
      %v3947 = vpop.f32.mrf.mxu0
      %v3948 = vadd.f32 %v3883, %v3947
      %v3949 = vpop.f32.mrf.mxu0
      %v3950 = vadd.f32 %v3883, %v3949
      %3951 = vmatmul.bf16.gmra.mxu0 %v3851
      %v3952 = vpop.f32.mrf.mxu0
      %v3953 = vadd.f32 %v3883, %v3952
      %v3954 = vpop.f32.mrf.mxu0
      %v3955 = vadd.f32 %v3883, %v3954
      %3956 = vmatmul.bf16.gmra.mxu0 %v3852
      %v3957 = vpop.f32.mrf.mxu0
      %v3958 = vadd.f32 %v3883, %v3957
      %v3959 = vpop.f32.mrf.mxu0
      %v3960 = vadd.f32 %v3883, %v3959
      %3961 = vmatmul.bf16.gmra.mxu0 %v3853
      %v3962 = vpop.f32.mrf.mxu0
      %v3963 = vadd.f32 %v3883, %v3962
      %v3964 = vpop.f32.mrf.mxu0
      %v3965 = vadd.f32 %v3883, %v3964
      %3966 = vmatmul.bf16.gmra.mxu0 %v3854
      %v3967 = vpop.f32.mrf.mxu0
      %v3968 = vadd.f32 %v3883, %v3967
      %v3969 = vpop.f32.mrf.mxu0
      %v3970 = vadd.f32 %v3883, %v3969
      %3971 = vmatmul.bf16.gmra.mxu0 %v3855
      %v3972 = vpop.f32.mrf.mxu0
      %v3973 = vadd.f32 %v3883, %v3972
      %v3974 = vpop.f32.mrf.mxu0
      %v3975 = vadd.f32 %v3883, %v3974
      %3976 = vmatmul.bf16.gmra.mxu0 %v3856
      %v3977 = vpop.f32.mrf.mxu0
      %v3978 = vadd.f32 %v3883, %v3977
      %v3979 = vpop.f32.mrf.mxu0
      %v3980 = vadd.f32 %v3883, %v3979
      %3981 = vmatmul.bf16.gmra.mxu0 %v3857
      %v3982 = vpop.f32.mrf.mxu0
      %v3983 = vadd.f32 %v3883, %v3982
      %v3984 = vpop.f32.mrf.mxu0
      %v3985 = vadd.f32 %v3883, %v3984
      %3986 = vmatmul.bf16.gmra.mxu0 %v3858
      %v3987 = vpop.f32.mrf.mxu0
      %v3988 = vadd.f32 %v3883, %v3987
      %v3989 = vpop.f32.mrf.mxu0
      %v3990 = vadd.f32 %v3883, %v3989
      %3991 = vmatmul.bf16.gmra.mxu0 %v3859
      %v3992 = vpop.f32.mrf.mxu0
      %v3993 = vadd.f32 %v3883, %v3992
      %v3994 = vpop.f32.mrf.mxu0
      %v3995 = vadd.f32 %v3883, %v3994
      %3996 = vmatmul.bf16.gmra.mxu0 %v3860
      %v3997 = vpop.f32.mrf.mxu0
      %v3998 = vadd.f32 %v3883, %v3997
      %v3999 = vpop.f32.mrf.mxu0
      %v4000 = vadd.f32 %v3883, %v3999
      %4001 = vmatmul.bf16.gmra.mxu0 %v3861
      %v4002 = vpop.f32.mrf.mxu0
      %v4003 = vadd.f32 %v3883, %v4002
      %v4004 = vpop.f32.mrf.mxu0
      %v4005 = vadd.f32 %v3883, %v4004
      %4006 = vmatmul.bf16.gmra.mxu0 %v3862
      %v4007 = vpop.f32.mrf.mxu0
      %v4008 = vadd.f32 %v3883, %v4007
      %v4009 = vpop.f32.mrf.mxu0
      %v4010 = vadd.f32 %v3883, %v4009
      %4011 = vmatmul.bf16.gmra.mxu0 %v3863
      %v4012 = vpop.f32.mrf.mxu0
      %v4013 = vadd.f32 %v3883, %v4012
      %v4014 = vpop.f32.mrf.mxu0
      %v4015 = vadd.f32 %v3883, %v4014
      %4016 = vmatmul.bf16.gmra.mxu0 %v3864
      %v4017 = vpop.f32.mrf.mxu0
      %v4018 = vadd.f32 %v3883, %v4017
      %v4019 = vpop.f32.mrf.mxu0
      %v4020 = vadd.f32 %v3883, %v4019
      %4021 = vdwg.mxu0
      %v4022 = vunpack.c.l.bf16 %v283
      %v4023 = vunpack.c.l.bf16 %v284
      %v4024 = vunpack.c.l.bf16 %v285
      %v4025 = vunpack.c.l.bf16 %v286
      %v4026 = vunpack.c.l.bf16 %v287
      %v4027 = vunpack.c.l.bf16 %v288
      %v4028 = vunpack.c.l.bf16 %v289
      %v4029 = vunpack.c.l.bf16 %v290
      %v4030 = vunpack.c.l.bf16 %v291
      %v4031 = vunpack.c.l.bf16 %v292
      %v4032 = vunpack.c.l.bf16 %v293
      %v4033 = vunpack.c.l.bf16 %v294
      %v4034 = vunpack.c.l.bf16 %v295
      %v4035 = vunpack.c.l.bf16 %v296
      %v4036 = vunpack.c.l.bf16 %v297
      %v4037 = vunpack.c.l.bf16 %v298
      %v4038 = vunpack.c.l.bf16 %v299
      %v4039 = vunpack.c.l.bf16 %v300
      %v4040 = vunpack.c.l.bf16 %v301
      %v4041 = vunpack.c.l.bf16 %v302
      %v4042 = vunpack.c.l.bf16 %v303
      %v4043 = vunpack.c.l.bf16 %v304
      %v4044 = vunpack.c.l.bf16 %v305
      %v4045 = vunpack.c.l.bf16 %v306
      %v4046 = vunpack.c.l.bf16 %v307
      %v4047 = vunpack.c.l.bf16 %v308
      %v4048 = vunpack.c.l.bf16 %v309
      %v4049 = vunpack.c.l.bf16 %v310
      %v4050 = vunpack.c.l.bf16 %v311
      %v4051 = vunpack.c.l.bf16 %v312
      %v4052 = vunpack.c.l.bf16 %v313
      %v4053 = vunpack.c.l.bf16 %v314
      %v4054 = vadd.f32 %v3943, %v4022
      %v4055 = vadd.f32 %v3945, %v4023
      %v4056 = vadd.f32 %v3948, %v4024
      %v4057 = vadd.f32 %v3950, %v4025
      %v4058 = vadd.f32 %v3953, %v4026
      %v4059 = vadd.f32 %v3955, %v4027
      %v4060 = vadd.f32 %v3958, %v4028
      %v4061 = vadd.f32 %v3960, %v4029
      %v4062 = vadd.f32 %v3963, %v4030
      %v4063 = vadd.f32 %v3965, %v4031
      %v4064 = vadd.f32 %v3968, %v4032
      %v4065 = vadd.f32 %v3970, %v4033
      %v4066 = vadd.f32 %v3973, %v4034
      %v4067 = vadd.f32 %v3975, %v4035
      %v4068 = vadd.f32 %v3978, %v4036
      %v4069 = vadd.f32 %v3980, %v4037
      %v4070 = vadd.f32 %v3983, %v4038
      %v4071 = vadd.f32 %v3985, %v4039
      %v4072 = vadd.f32 %v3988, %v4040
      %v4073 = vadd.f32 %v3990, %v4041
      %v4074 = vadd.f32 %v3993, %v4042
      %v4075 = vadd.f32 %v3995, %v4043
      %v4076 = vadd.f32 %v3998, %v4044
      %v4077 = vadd.f32 %v4000, %v4045
      %v4078 = vadd.f32 %v4003, %v4046
      %v4079 = vadd.f32 %v4005, %v4047
      %v4080 = vadd.f32 %v4008, %v4048
      %v4081 = vadd.f32 %v4010, %v4049
      %v4082 = vadd.f32 %v4013, %v4050
      %v4083 = vadd.f32 %v4015, %v4051
      %v4084 = vadd.f32 %v4018, %v4052
      %v4085 = vadd.f32 %v4020, %v4053
      %v4086 = vmax.f32 %v4054, 0.0
      %v4087 = vmax.f32 %v4055, 0.0
      %v4088 = vmax.f32 %v4056, 0.0
      %v4089 = vmax.f32 %v4057, 0.0
      %v4090 = vmax.f32 %v4058, 0.0
      %v4091 = vmax.f32 %v4059, 0.0
      %v4092 = vmax.f32 %v4060, 0.0
      %v4093 = vmax.f32 %v4061, 0.0
      %v4094 = vmax.f32 %v4062, 0.0
      %v4095 = vmax.f32 %v4063, 0.0
      %v4096 = vmax.f32 %v4064, 0.0
      %v4097 = vmax.f32 %v4065, 0.0
      %v4098 = vmax.f32 %v4066, 0.0
      %v4099 = vmax.f32 %v4067, 0.0
      %v4100 = vmax.f32 %v4068, 0.0
      %v4101 = vmax.f32 %v4069, 0.0
      %v4102 = vmax.f32 %v4070, 0.0
      %v4103 = vmax.f32 %v4071, 0.0
      %v4104 = vmax.f32 %v4072, 0.0
      %v4105 = vmax.f32 %v4073, 0.0
      %v4106 = vmax.f32 %v4074, 0.0
      %v4107 = vmax.f32 %v4075, 0.0
      %v4108 = vmax.f32 %v4076, 0.0
      %v4109 = vmax.f32 %v4077, 0.0
      %v4110 = vmax.f32 %v4078, 0.0
      %v4111 = vmax.f32 %v4079, 0.0
      %v4112 = vmax.f32 %v4080, 0.0
      %v4113 = vmax.f32 %v4081, 0.0
      %v4114 = vmax.f32 %v4082, 0.0
      %v4115 = vmax.f32 %v4083, 0.0
      %v4116 = vmax.f32 %v4084, 0.0
      %v4117 = vmax.f32 %v4085, 0.0
      %4118 = vst.msk [vmem:[%s280] sm:$0xff] %vm407, %v4086
      %4119 = vst.msk [vmem:[%s280 + $0x8] sm:$0xff] %vm407, %v4087
      %4120 = vst.msk [vmem:[%s280 + $0x10] sm:$0xff] %vm407, %v4088
      %4121 = vst.msk [vmem:[%s280 + $0x18] sm:$0xff] %vm407, %v4089
      %4122 = vst.msk [vmem:[%s280 + $0x20] sm:$0xff] %vm407, %v4090
      %4123 = vst.msk [vmem:[%s280 + $0x28] sm:$0xff] %vm407, %v4091
      %4124 = vst.msk [vmem:[%s280 + $0x30] sm:$0xff] %vm407, %v4092
      %4125 = vst.msk [vmem:[%s280 + $0x38] sm:$0xff] %vm407, %v4093
      %4126 = vst.msk [vmem:[%s280 + $0x40] sm:$0xff] %vm407, %v4094
      %4127 = vst.msk [vmem:[%s280 + $0x48] sm:$0xff] %vm407, %v4095
      %4128 = vst.msk [vmem:[%s280 + $0x50] sm:$0xff] %vm407, %v4096
      %4129 = vst.msk [vmem:[%s280 + $0x58] sm:$0xff] %vm407, %v4097
      %4130 = vst.msk [vmem:[%s280 + $0x60] sm:$0xff] %vm407, %v4098
      %4131 = vst.msk [vmem:[%s280 + $0x68] sm:$0xff] %vm407, %v4099
      %4132 = vst.msk [vmem:[%s280 + $0x70] sm:$0xff] %vm407, %v4100
      %4133 = vst.msk [vmem:[%s280 + $0x78] sm:$0xff] %vm407, %v4101
      %4134 = vst.msk [vmem:[%s280 + $0x80] sm:$0xff] %vm407, %v4102
      %4135 = vst.msk [vmem:[%s280 + $0x88] sm:$0xff] %vm407, %v4103
      %4136 = vst.msk [vmem:[%s280 + $0x90] sm:$0xff] %vm407, %v4104
      %4137 = vst.msk [vmem:[%s280 + $0x98] sm:$0xff] %vm407, %v4105
      %4138 = vst.msk [vmem:[%s280 + $0xa0] sm:$0xff] %vm407, %v4106
      %4139 = vst.msk [vmem:[%s280 + $0xa8] sm:$0xff] %vm407, %v4107
      %4140 = vst.msk [vmem:[%s280 + $0xb0] sm:$0xff] %vm407, %v4108
      %4141 = vst.msk [vmem:[%s280 + $0xb8] sm:$0xff] %vm407, %v4109
      %4142 = vst.msk [vmem:[%s280 + $0xc0] sm:$0xff] %vm407, %v4110
      %4143 = vst.msk [vmem:[%s280 + $0xc8] sm:$0xff] %vm407, %v4111
      %4144 = vst.msk [vmem:[%s280 + $0xd0] sm:$0xff] %vm407, %v4112
      %4145 = vst.msk [vmem:[%s280 + $0xd8] sm:$0xff] %vm407, %v4113
      %4146 = vst.msk [vmem:[%s280 + $0xe0] sm:$0xff] %vm407, %v4114
      %4147 = vst.msk [vmem:[%s280 + $0xe8] sm:$0xff] %vm407, %v4115
      %4148 = vst.msk [vmem:[%s280 + $0xf0] sm:$0xff] %vm407, %v4116
      %4149 = vst.msk [vmem:[%s280 + $0xf8] sm:$0xff] %vm407, %v4117
      %s4150 = smul.u32 32, %s18
      %p4151 = scmp.lt.s32.totalorder %s4150, 63
      %s4152 = scalar_select %p4151, %s4150, 63
      %s4153 = smul.addr %s4152, 8
      %s4154 = scalar_lea.vmem %s7, %s4153
      // Predicated region
      $region49: #{bottleneck_forward.1} parent=47 // pred_check
        %p4155 = pneg %p188
      $region50: #{bottleneck_forward.1} parent=47 // pred_check_branch
        %4157 = sbr.rel (%p4155) target = $region52
      $region51: #{bottleneck_forward.1} parent=47 // pred_region
        %s4158 = smul.u32 32, %s18
      $region52: #{bottleneck_forward.1} parent=47 // pred_fallthru
        _
    $region48: #{bottleneck_forward.1} parent=5 // pred_fallthru
      _
    %p4159 = scmp.le.s32.totalorder 2, %s13
    // Predicated region
    $region53: #{bottleneck_forward.1} parent=5 // pred_check
      %p4160 = pneg %p4159
    $region54: #{bottleneck_forward.1} parent=5 // pred_check_branch
      %4162 = sbr.rel (%p4160) target = $region56
    $region55: #{bottleneck_forward.1} parent=5 // pred_region
      %s4163 = ssub.s32 %s13, 2
      // Predicated region
      $region57: #{bottleneck_forward.1} parent=55 // pred_check
        %p4164 = pneg %p194
      $region58: #{bottleneck_forward.1} parent=55 // pred_check_branch
        %4166 = sbr.rel (%p4164) target = $region60
      $region59: #{bottleneck_forward.1} parent=55 // pred_region
        %s4167 = smul.u32 32, %s19
        %p4168 = scmp.lt.s32.totalorder %s4167, 63
        %s4169 = scalar_select %p4168, %s4167, 63
        %s4170 = smul.addr %s4169, 8
        %s4171 = scalar_lea.vmem %s7, %s4170
      $region60: #{bottleneck_forward.1} parent=55 // pred_fallthru
        _
    $region56: #{bottleneck_forward.1} parent=5 // pred_fallthru
      _
  $region6: #{bottleneck_forward.1} parent=0 // loop_footer
    %s17 = sadd.s32 1, %s13
  $region7: #{bottleneck_forward.1} parent=0 // loop_footer_branch
    %12 = sbr.rel target = $region3
  $region8: #{bottleneck_forward.1} parent=0 // loop_exit
    _

</llo_original>
